<compile_context>
chip_gen: v5e
topology: v5e:2x2
jax: 0.10.0
libtpu: 0.0.40
codegen_flags: <defaults>
</compile_context>

<pallas_src>
import functools

import jax
import jax.numpy as jnp
from jax import lax
from jax.experimental import pallas as pl
from jax.experimental.pallas import tpu as pltpu

EPS = 1e-5


def _round_up(a, m):
    return (a + m - 1) // m * m


def _vmem_capacity_bytes():
    try:
        return pltpu.get_tpu_info().vmem_capacity_bytes
    except Exception:  # pragma: no cover - conservative fallback (v7x-sized)
        return 64 << 20


# --------------------------------------------------------------------------
# Stage A: batch prefix  ->  x of shape (B, D)
# --------------------------------------------------------------------------
def _prefix_kernel(C, K, Dp,
                   e1_ref, rel_ref, fcw_ref,
                   convw_ref, bn0g_ref, bn0b_ref, bn1g_ref, bn1b_ref,
                   bn2g_ref, bn2b_ref,
                   x_out_ref, slab_ref):
    e1 = jnp.tanh(e1_ref[...])           # (B, D)  channel 0
    rel = rel_ref[...]                   # (B, D)  channel 1
    B, D = e1.shape
    n_taps = 2 * K
    half = K // 2

    # BN over all (B, D) elements of a channel, two-pass variance.
    def bn_2pass(v, g, b):
        m = jnp.mean(v)
        c = v - m
        var = jnp.mean(c * c)
        return c * (lax.rsqrt(var + EPS) * g) + b

    x0 = bn_2pass(e1, bn0g_ref[0], bn0b_ref[0])
    x1 = bn_2pass(rel, bn0g_ref[1], bn0b_ref[1])

    # Zero-padded shifted taps, built ONCE and reused by every conv channel.
    lane = lax.broadcasted_iota(jnp.int32, (B, D), 1)

    def tap_shift(x, s):
        if s == 0:
            return x
        if s > 0:      # value at d - s (left edge zero-padded)
            return jnp.where(lane < s, 0.0, pltpu.roll(x, shift=s, axis=1))
        # s < 0: value at d + |s| (right edge zero-padded)
        return jnp.where(lane >= D + s, 0.0, pltpu.roll(x, shift=D + s, axis=1))

    taps = []
    for x_ch in (x0, x1):
        for k in range(K):
            taps.append(tap_shift(x_ch, half - k))   # tap index t = i*K + k

    # BN1 linearity trick: mean(conv_c) = sum_t w_ct * mean(tap_t) and
    # E[conv_c^2] = sum_{t,t'} w_ct w_ct' E[tap_t tap_t'], so per-channel
    # batch stats reduce to scalar math over a few precomputed moments
    # (2K means + K(2K+1) cross-moments cross-lane reductions, independent of C).
    tap_mean = [jnp.mean(t) for t in taps]
    tap_mom = {}
    for a in range(n_taps):
        for b in range(a, n_taps):
            tap_mom[(a, b)] = jnp.mean(taps[a] * taps[b])

    # Conv1d (bias dropped: cancelled by train-mode BN1 mean) with the BN1
    # scale folded into the tap weights, then ReLU.  Channel c is written at
    # the lane-aligned offset c*Dp of the flat slab so the fc collapses into
    # one K=C*Dp MXU matmul below.
    if Dp > D:
        slab_ref[...] = jnp.zeros_like(slab_ref)     # zero the pad lanes once
    for c in range(C):
        w = [convw_ref[c * n_taps + t] for t in range(n_taps)]
        mean_c = w[0] * tap_mean[0]
        for t in range(1, n_taps):
            mean_c = mean_c + w[t] * tap_mean[t]
        ex2_c = w[0] * w[0] * tap_mom[(0, 0)]
        for a in range(n_taps):
            for b in range(a, n_taps):
                if a == 0 and b == 0:
                    continue
                coeff = w[a] * w[b]
                if a != b:
                    coeff = coeff * 2.0
                ex2_c = ex2_c + coeff * tap_mom[(a, b)]
        var_c = ex2_c - mean_c * mean_c
        scale_c = lax.rsqrt(var_c + EPS) * bn1g_ref[c]
        shift_c = bn1b_ref[c] - mean_c * scale_c
        h = taps[0] * (w[0] * scale_c)
        for t in range(1, n_taps):
            h = h + taps[t] * (w[t] * scale_c)
        h = jnp.maximum(h + shift_c, 0.0)
        slab_ref[:, c * Dp:c * Dp + D] = h

    # fc: ONE (B, C*Dp) @ (C*Dp, D) matmul (bias dropped: cancelled by BN2 mean).
    x = jnp.dot(slab_ref[...], fcw_ref[...], preferred_element_type=jnp.float32)

    # BN2 (batch_size > 1): per-feature batch stats, two-pass variance.
    m2 = jnp.mean(x, axis=0, keepdims=True)
    xc = x - m2
    v2 = jnp.mean(xc * xc, axis=0, keepdims=True)
    x = xc * lax.rsqrt(v2 + EPS) * bn2g_ref[...] + bn2b_ref[...]
    x_out_ref[...] = jnp.maximum(x, 0.0)


# --------------------------------------------------------------------------
# Stage B: scores = x @ tanh(embedding)^T, gridded / pipelined over entities
# --------------------------------------------------------------------------
def _score_kernel(x_ref, emb_ref, out_ref):
    # x_ref: (B, D) f32, resident across the grid; emb_ref: (tE, D) bf16 tile
    # of tanh(embedding) in natural layout (no HBM-level transpose).  Contract
    # D on both sides: bf16 MXU matmul with f32 accumulation; the per-tile
    # RHS transpose uses the otherwise-idle XLU.
    out_ref[...] = lax.dot_general(
        x_ref[...].astype(jnp.bfloat16), emb_ref[...],
        dimension_numbers=(((1,), (1,)), ((), ())),
        preferred_element_type=jnp.float32)


def _pick_entity_tiling(E, D, B, vmem_cap):
    """Entity tile size / padding for Stage B, sized from the chip's VMEM."""
    E_128 = _round_up(max(E, 1), 128)
    # Per entity row: bf16 (tE, D) embedding tile (double buffered) + f32
    # (B, tE) output block (double buffered).  x, compiler scratch and
    # headroom live outside this budget.
    budget = min(int(vmem_cap * 0.45), 48 << 20)
    per_row = 2 * 2 * D + 4 * 2 * B
    tE = max(128, min((budget // per_row) // 128 * 128, 32768, E_128))
    n_tiles = -(-E_128 // tE)
    if E_128 >= 4 * 128 and n_tiles < 4:
        # Keep >= 4 tiles so both v7x TensorCores get balanced work under
        # dimension_semantics=("parallel",).
        tE = _round_up(-(-E_128 // 4), 128)
        n_tiles = -(-E_128 // tE)
    E_pad = n_tiles * tE
    return tE, E_pad, n_tiles, budget


def make_score_table(embedding, e_pad):
    """bf16 tanh(embedding), zero-padded to e_pad entity rows (natural layout).

    Single fused XLA pass (read f32 once, write bf16 once).  Callers scoring
    many batches against the same embedding should precompute/cache this and
    pass it via convtranse_forward(score_table=...) to remove it from the hot
    path entirely.
    """
    E = embedding.shape[0]
    t = jnp.tanh(embedding).astype(jnp.bfloat16)
    if e_pad > E:
        t = jnp.pad(t, ((0, e_pad - E), (0, 0)))
    return t


def convtranse_forward(embedding, emb_rel, triplets, params, channels,
                       kernel_size, score_table=None):
    B = triplets.shape[0]
    E, D = embedding.shape
    C, K = channels, kernel_size
    assert B > 1, "train-mode BN2 path requires batch_size > 1"
    assert K % 2 == 1, "Conv1d padding=k//2 only preserves length for odd k"

    vmem_cap = _vmem_capacity_bytes()
    Dp = _round_up(D, 128)               # lane-aligned per-channel slab stride

    # gather (glue) — tanh(embedding)[idx] == tanh(embedding[idx]); tanh in-kernel
    e1 = embedding[triplets[:, 0]]       # (B, D)
    rel = emb_rel[triplets[:, 1]]        # (B, D)

    # fc weight (D, C*D) -> (C*Dp, D): rows zero-padded per channel so the
    # flattened index (c*Dp + d) matches the lane-aligned slab layout.
    fcw_T = params["fc_w"].T.reshape(C, D, D)
    fcw_T = jnp.pad(fcw_T, ((0, 0), (0, Dp - D), (0, 0))).reshape(C * Dp, D)
    bn2g = params["bn2_g"].reshape(1, D)
    bn2b = params["bn2_b"].reshape(1, D)
    convw_flat = params["conv_w"].reshape(C * 2 * K)   # [c, i, k] row-major

    vmem = pl.BlockSpec(memory_space=pltpu.MemorySpace.VMEM)
    smem = pl.BlockSpec(memory_space=pltpu.MemorySpace.SMEM)

    # ---- Stage A: compute x (B, D) once ----
    stage_a_bytes = 4 * (3 * B * D + C * Dp * D + B * C * Dp + 2 * D) + (1 << 20)
    vmem_a = max(24 << 20, min(int(vmem_cap * 0.8), 2 * stage_a_bytes))
    x = pl.pallas_call(
        functools.partial(_prefix_kernel, C, K, Dp),
        out_shape=jax.ShapeDtypeStruct((B, D), jnp.float32),
        in_specs=[vmem, vmem, vmem,                    # e1, rel, fc weight
                  smem, smem, smem, smem, smem,        # conv / BN0 / BN1 scalars
                  vmem, vmem],                         # BN2 gamma/beta rows
        out_specs=vmem,
        scratch_shapes=[pltpu.VMEM((B, C * Dp), jnp.float32)],
        compiler_params=pltpu.CompilerParams(vmem_limit_bytes=vmem_a),
    )(e1, rel, fcw_T, convw_flat,
      params["bn0_g"], params["bn0_b"], params["bn1_g"], params["bn1_b"],
      bn2g, bn2b)

    # ---- Stage B: stream the bf16 tanh(embedding) table (natural layout) ----
    tE, E_pad, n_tiles, budget = _pick_entity_tiling(E, D, B, vmem_cap)
    if score_table is None or score_table.shape[0] != E_pad:
        score_table = make_score_table(embedding, E_pad)

    vmem_b = min(int(vmem_cap * 0.8), budget + 4 * B * D + (16 << 20))
    scores = pl.pallas_call(
        _score_kernel,
        out_shape=jax.ShapeDtypeStruct((B, E_pad), jnp.float32),
        grid=(n_tiles,),
        in_specs=[pl.BlockSpec((B, D), lambda i: (0, 0)),     # x stays resident
                  pl.BlockSpec((tE, D), lambda i: (i, 0))],   # streamed bf16 tile
        out_specs=pl.BlockSpec((B, tE), lambda i: (0, i)),
        compiler_params=pltpu.CompilerParams(
            dimension_semantics=("parallel",),   # 2-TC megacore split on v7x
            vmem_limit_bytes=vmem_b),
    )(x, score_table)

    # Padded score columns are exactly 0; downstream code can consume the
    # padded (B, E_pad) buffer directly to skip this slice/copy.
    return scores if E_pad == E else scores[:, :E]


# --------------------------------------------------------------------------
# Plain-JAX reference mirroring the PyTorch forward (train-mode BN, f32)
# --------------------------------------------------------------------------
def ref_forward(embedding, emb_rel, triplets, params, channels, kernel_size):
    B = triplets.shape[0]
    e_all = jnp.tanh(embedding)
    e1 = e_all[triplets[:, 0]][:, None, :]
    rel = emb_rel[triplets[:, 1]][:, None, :]
    x = jnp.concatenate([e1, rel], axis=1)                    # (B, 2, D)

    def bn(x, g, b, axes):
        m = x.mean(axis=axes, keepdims=True)
        v = ((x - m) ** 2).mean(axis=axes, keepdims=True)
        return (x - m) / jnp.sqrt(v + EPS) * g + b

    x = bn(x, params["bn0_g"][None, :, None], params["bn0_b"][None, :, None], (0, 2))
    x = lax.conv_general_dilated(
        x, params["conv_w"], window_strides=(1,),
        padding=[(kernel_size // 2, kernel_size // 2)],
        dimension_numbers=("NCH", "OIH", "NCH"),
        precision=lax.Precision.HIGHEST) + params["conv_b"][None, :, None]
    x = bn(x, params["bn1_g"][None, :, None], params["bn1_b"][None, :, None], (0, 2))
    x = jnp.maximum(x, 0.0)
    x = x.reshape(B, -1)
    x = jnp.dot(x, params["fc_w"].T, precision=lax.Precision.HIGHEST) + params["fc_b"]
    x = bn(x, params["bn2_g"], params["bn2_b"], (0,))
    x = jnp.maximum(x, 0.0)
    return jnp.dot(x, e_all.T, precision=lax.Precision.HIGHEST)


if __name__ == "__main__":
    E, R, D, B, C, K = 32, 16, 32, 8, 8, 3   # entities, relations, emb_dim, batch, channels, ksize

    key = jax.random.PRNGKey(0)
    ks = jax.random.split(key, 16)

    embedding = (jax.random.normal(ks[0], (E, D)) * 0.5).astype(jnp.float32)
    emb_rel = (jax.random.normal(ks[1], (R, D)) * 0.5).astype(jnp.float32)
    heads = jax.random.randint(ks[2], (B,), 0, E)
    rels = jax.random.randint(ks[3], (B,), 0, R)
    tails = jax.random.randint(ks[4], (B,), 0, E)
    triplets = jnp.stack([heads, rels, tails], axis=1).astype(jnp.int32)

    params = {
        "conv_w": (jax.random.normal(ks[5], (C, 2, K)) * 0.3).astype(jnp.float32),
        "conv_b": (jax.random.normal(ks[6], (C,)) * 0.1).astype(jnp.float32),
        "fc_w": (jax.random.normal(ks[7], (D, C * D)) / jnp.sqrt(C * D)).astype(jnp.float32),
        "fc_b": (jax.random.normal(ks[8], (D,)) * 0.1).astype(jnp.float32),
        "bn0_g": (1.0 + 0.1 * jax.random.normal(ks[9], (2,))).astype(jnp.float32),
        "bn0_b": (0.1 * jax.random.normal(ks[10], (2,))).astype(jnp.float32),
        "bn1_g": (1.0 + 0.1 * jax.random.normal(ks[11], (C,))).astype(jnp.float32),
        "bn1_b": (0.1 * jax.random.normal(ks[12], (C,))).astype(jnp.float32),
        "bn2_g": (1.0 + 0.1 * jax.random.normal(ks[13], (D,))).astype(jnp.float32),
        "bn2_b": (0.1 * jax.random.normal(ks[14], (D,))).astype(jnp.float32),
    }

    out = convtranse_forward(embedding, emb_rel, triplets, params, C, K)
    out = jax.block_until_ready(out)

    ref = ref_forward(embedding, emb_rel, triplets, params, C, K)
    ref = jax.block_until_ready(ref)

    assert out.shape == (B, E)
    max_err = float(jnp.max(jnp.abs(out - ref)))
    ref_max = float(jnp.max(jnp.abs(ref)))
    # Tolerance relaxed vs the all-f32 reference because the entity embedding
    # is streamed in bf16 (per perf review); accumulation stays f32.
    tol = 2e-2 * max(1.0, ref_max) + 2e-2
    assert max_err <= tol, f"mismatch vs reference: max_err={max_err} (tol={tol})"

    print("KERNEL_OK")
</pallas_src>

<mosaic_0001>
module attributes {stable_mosaic.version = 11 : i64} {
  func.func @_prefix_kernel(%arg0: memref<8x32xf32, #tpu.memory_space<vmem>>, %arg1: memref<8x32xf32, #tpu.memory_space<vmem>>, %arg2: memref<1024x32xf32, #tpu.memory_space<vmem>>, %arg3: memref<48xf32, #tpu.memory_space<smem>>, %arg4: memref<2xf32, #tpu.memory_space<smem>>, %arg5: memref<2xf32, #tpu.memory_space<smem>>, %arg6: memref<8xf32, #tpu.memory_space<smem>>, %arg7: memref<8xf32, #tpu.memory_space<smem>>, %arg8: memref<1x32xf32, #tpu.memory_space<vmem>>, %arg9: memref<1x32xf32, #tpu.memory_space<vmem>>, %arg10: memref<8x32xf32, #tpu.memory_space<vmem>>, %arg11: memref<8x1024xf32, #tpu.memory_space<vmem>>) attributes {dimension_semantics = [], scalar_prefetch = 0 : i64, scratch_operands = 1 : i64, tpu.core_type = #tpu.core_type<tc>} {
    %c0 = arith.constant 0 : index
    %c0_0 = arith.constant 0 : index
    %0 = vector.load %arg0[%c0, %c0_0] : memref<8x32xf32, #tpu.memory_space<vmem>>, vector<8x32xf32>
    %1 = math.tanh %0 : vector<8x32xf32>
    %c0_1 = arith.constant 0 : index
    %c0_2 = arith.constant 0 : index
    %2 = vector.load %arg1[%c0_1, %c0_2] : memref<8x32xf32, #tpu.memory_space<vmem>>, vector<8x32xf32>
    %c0_3 = arith.constant 0 : index
    %3 = memref.load %arg4[%c0_3] : memref<2xf32, #tpu.memory_space<smem>>
    %c0_4 = arith.constant 0 : index
    %4 = memref.load %arg5[%c0_4] : memref<2xf32, #tpu.memory_space<smem>>
    %5 = vector.shape_cast %1 : vector<8x32xf32> to vector<1x8x32xf32>
    %cst = arith.constant dense<0.000000e+00> : vector<1xf32>
    %6 = vector.multi_reduction <add>, %5, %cst [1, 2] : vector<1x8x32xf32> to vector<1xf32>
    %7 = vector.shape_cast %6 : vector<1xf32> to vector<1x1x1xf32>
    %8 = vector.extract %7[0, 0, 0] : f32 from vector<1x1x1xf32>
    %cst_5 = arith.constant 2.560000e+02 : f32
    %9 = arith.divf %8, %cst_5 : f32
    %10 = vector.broadcast %9 : f32 to vector<8x32xf32>
    %11 = arith.subf %1, %10 : vector<8x32xf32>
    %12 = arith.mulf %11, %11 : vector<8x32xf32>
    %13 = vector.shape_cast %12 : vector<8x32xf32> to vector<1x8x32xf32>
    %cst_6 = arith.constant dense<0.000000e+00> : vector<1xf32>
    %14 = vector.multi_reduction <add>, %13, %cst_6 [1, 2] : vector<1x8x32xf32> to vector<1xf32>
    %15 = vector.shape_cast %14 : vector<1xf32> to vector<1x1x1xf32>
    %16 = vector.extract %15[0, 0, 0] : f32 from vector<1x1x1xf32>
    %cst_7 = arith.constant 2.560000e+02 : f32
    %17 = arith.divf %16, %cst_7 : f32
    %cst_8 = arith.constant 9.99999974E-6 : f32
    %18 = arith.addf %17, %cst_8 : f32
    %19 = math.rsqrt %18 : f32
    %20 = arith.mulf %19, %3 : f32
    %21 = vector.broadcast %20 : f32 to vector<8x32xf32>
    %22 = arith.mulf %11, %21 : vector<8x32xf32>
    %23 = vector.broadcast %4 : f32 to vector<8x32xf32>
    %24 = arith.addf %22, %23 : vector<8x32xf32>
    %c1 = arith.constant 1 : index
    %25 = memref.load %arg4[%c1] : memref<2xf32, #tpu.memory_space<smem>>
    %c1_9 = arith.constant 1 : index
    %26 = memref.load %arg5[%c1_9] : memref<2xf32, #tpu.memory_space<smem>>
    %27 = vector.shape_cast %2 : vector<8x32xf32> to vector<1x8x32xf32>
    %cst_10 = arith.constant dense<0.000000e+00> : vector<1xf32>
    %28 = vector.multi_reduction <add>, %27, %cst_10 [1, 2] : vector<1x8x32xf32> to vector<1xf32>
    %29 = vector.shape_cast %28 : vector<1xf32> to vector<1x1x1xf32>
    %30 = vector.extract %29[0, 0, 0] : f32 from vector<1x1x1xf32>
    %cst_11 = arith.constant 2.560000e+02 : f32
    %31 = arith.divf %30, %cst_11 : f32
    %32 = vector.broadcast %31 : f32 to vector<8x32xf32>
    %33 = arith.subf %2, %32 : vector<8x32xf32>
    %34 = arith.mulf %33, %33 : vector<8x32xf32>
    %35 = vector.shape_cast %34 : vector<8x32xf32> to vector<1x8x32xf32>
    %cst_12 = arith.constant dense<0.000000e+00> : vector<1xf32>
    %36 = vector.multi_reduction <add>, %35, %cst_12 [1, 2] : vector<1x8x32xf32> to vector<1xf32>
    %37 = vector.shape_cast %36 : vector<1xf32> to vector<1x1x1xf32>
    %38 = vector.extract %37[0, 0, 0] : f32 from vector<1x1x1xf32>
    %cst_13 = arith.constant 2.560000e+02 : f32
    %39 = arith.divf %38, %cst_13 : f32
    %cst_14 = arith.constant 9.99999974E-6 : f32
    %40 = arith.addf %39, %cst_14 : f32
    %41 = math.rsqrt %40 : f32
    %42 = arith.mulf %41, %25 : f32
    %43 = vector.broadcast %42 : f32 to vector<8x32xf32>
    %44 = arith.mulf %33, %43 : vector<8x32xf32>
    %45 = vector.broadcast %26 : f32 to vector<8x32xf32>
    %46 = arith.addf %44, %45 : vector<8x32xf32>
    %47 = tpu.iota {dimensions = array<i32: 1>} : vector<8x32xi32>
    %c1_i32 = arith.constant 1 : i32
    %48 = vector.broadcast %c1_i32 : i32 to vector<8x32xi32>
    %49 = arith.cmpi slt, %47, %48 : vector<8x32xi32>
    %c1_i32_15 = arith.constant 1 : i32
    %50 = tpu.dynamic_rotate %24 by %c1_i32_15 dim 1 : vector<8x32xf32>, i32 -> vector<8x32xf32>
    %cst_16 = arith.constant 0.000000e+00 : f32
    %51 = vector.broadcast %cst_16 : f32 to vector<8x32xf32>
    %52 = arith.select %49, %51, %50 : vector<8x32xi1>, vector<8x32xf32>
    %c31_i32 = arith.constant 31 : i32
    %53 = vector.broadcast %c31_i32 : i32 to vector<8x32xi32>
    %54 = arith.cmpi sge, %47, %53 : vector<8x32xi32>
    %c31_i32_17 = arith.constant 31 : i32
    %55 = tpu.dynamic_rotate %24 by %c31_i32_17 dim 1 : vector<8x32xf32>, i32 -> vector<8x32xf32>
    %cst_18 = arith.constant 0.000000e+00 : f32
    %56 = vector.broadcast %cst_18 : f32 to vector<8x32xf32>
    %57 = arith.select %54, %56, %55 : vector<8x32xi1>, vector<8x32xf32>
    %c1_i32_19 = arith.constant 1 : i32
    %58 = vector.broadcast %c1_i32_19 : i32 to vector<8x32xi32>
    %59 = arith.cmpi slt, %47, %58 : vector<8x32xi32>
    %c1_i32_20 = arith.constant 1 : i32
    %60 = tpu.dynamic_rotate %46 by %c1_i32_20 dim 1 : vector<8x32xf32>, i32 -> vector<8x32xf32>
    %cst_21 = arith.constant 0.000000e+00 : f32
    %61 = vector.broadcast %cst_21 : f32 to vector<8x32xf32>
    %62 = arith.select %59, %61, %60 : vector<8x32xi1>, vector<8x32xf32>
    %c31_i32_22 = arith.constant 31 : i32
    %63 = vector.broadcast %c31_i32_22 : i32 to vector<8x32xi32>
    %64 = arith.cmpi sge, %47, %63 : vector<8x32xi32>
    %c31_i32_23 = arith.constant 31 : i32
    %65 = tpu.dynamic_rotate %46 by %c31_i32_23 dim 1 : vector<8x32xf32>, i32 -> vector<8x32xf32>
    %cst_24 = arith.constant 0.000000e+00 : f32
    %66 = vector.broadcast %cst_24 : f32 to vector<8x32xf32>
    %67 = arith.select %64, %66, %65 : vector<8x32xi1>, vector<8x32xf32>
    %68 = vector.shape_cast %52 : vector<8x32xf32> to vector<1x8x32xf32>
    %cst_25 = arith.constant dense<0.000000e+00> : vector<1xf32>
    %69 = vector.multi_reduction <add>, %68, %cst_25 [1, 2] : vector<1x8x32xf32> to vector<1xf32>
    %70 = vector.shape_cast %69 : vector<1xf32> to vector<1x1x1xf32>
    %71 = vector.extract %70[0, 0, 0] : f32 from vector<1x1x1xf32>
    %cst_26 = arith.constant 2.560000e+02 : f32
    %72 = arith.divf %71, %cst_26 : f32
    %73 = vector.shape_cast %24 : vector<8x32xf32> to vector<1x8x32xf32>
    %cst_27 = arith.constant dense<0.000000e+00> : vector<1xf32>
    %74 = vector.multi_reduction <add>, %73, %cst_27 [1, 2] : vector<1x8x32xf32> to vector<1xf32>
    %75 = vector.shape_cast %74 : vector<1xf32> to vector<1x1x1xf32>
    %76 = vector.extract %75[0, 0, 0] : f32 from vector<1x1x1xf32>
    %cst_28 = arith.constant 2.560000e+02 : f32
    %77 = arith.divf %76, %cst_28 : f32
    %78 = vector.shape_cast %57 : vector<8x32xf32> to vector<1x8x32xf32>
    %cst_29 = arith.constant dense<0.000000e+00> : vector<1xf32>
    %79 = vector.multi_reduction <add>, %78, %cst_29 [1, 2] : vector<1x8x32xf32> to vector<1xf32>
    %80 = vector.shape_cast %79 : vector<1xf32> to vector<1x1x1xf32>
    %81 = vector.extract %80[0, 0, 0] : f32 from vector<1x1x1xf32>
    %cst_30 = arith.constant 2.560000e+02 : f32
    %82 = arith.divf %81, %cst_30 : f32
    %83 = vector.shape_cast %62 : vector<8x32xf32> to vector<1x8x32xf32>
    %cst_31 = arith.constant dense<0.000000e+00> : vector<1xf32>
    %84 = vector.multi_reduction <add>, %83, %cst_31 [1, 2] : vector<1x8x32xf32> to vector<1xf32>
    %85 = vector.shape_cast %84 : vector<1xf32> to vector<1x1x1xf32>
    %86 = vector.extract %85[0, 0, 0] : f32 from vector<1x1x1xf32>
    %cst_32 = arith.constant 2.560000e+02 : f32
    %87 = arith.divf %86, %cst_32 : f32
    %88 = vector.shape_cast %46 : vector<8x32xf32> to vector<1x8x32xf32>
    %cst_33 = arith.constant dense<0.000000e+00> : vector<1xf32>
    %89 = vector.multi_reduction <add>, %88, %cst_33 [1, 2] : vector<1x8x32xf32> to vector<1xf32>
    %90 = vector.shape_cast %89 : vector<1xf32> to vector<1x1x1xf32>
    %91 = vector.extract %90[0, 0, 0] : f32 from vector<1x1x1xf32>
    %cst_34 = arith.constant 2.560000e+02 : f32
    %92 = arith.divf %91, %cst_34 : f32
    %93 = vector.shape_cast %67 : vector<8x32xf32> to vector<1x8x32xf32>
    %cst_35 = arith.constant dense<0.000000e+00> : vector<1xf32>
    %94 = vector.multi_reduction <add>, %93, %cst_35 [1, 2] : vector<1x8x32xf32> to vector<1xf32>
    %95 = vector.shape_cast %94 : vector<1xf32> to vector<1x1x1xf32>
    %96 = vector.extract %95[0, 0, 0] : f32 from vector<1x1x1xf32>
    %cst_36 = arith.constant 2.560000e+02 : f32
    %97 = arith.divf %96, %cst_36 : f32
    %98 = arith.mulf %52, %52 : vector<8x32xf32>
    %99 = vector.shape_cast %98 : vector<8x32xf32> to vector<1x8x32xf32>
    %cst_37 = arith.constant dense<0.000000e+00> : vector<1xf32>
    %100 = vector.multi_reduction <add>, %99, %cst_37 [1, 2] : vector<1x8x32xf32> to vector<1xf32>
    %101 = vector.shape_cast %100 : vector<1xf32> to vector<1x1x1xf32>
    %102 = vector.extract %101[0, 0, 0] : f32 from vector<1x1x1xf32>
    %cst_38 = arith.constant 2.560000e+02 : f32
    %103 = arith.divf %102, %cst_38 : f32
    %104 = arith.mulf %52, %24 : vector<8x32xf32>
    %105 = vector.shape_cast %104 : vector<8x32xf32> to vector<1x8x32xf32>
    %cst_39 = arith.constant dense<0.000000e+00> : vector<1xf32>
    %106 = vector.multi_reduction <add>, %105, %cst_39 [1, 2] : vector<1x8x32xf32> to vector<1xf32>
    %107 = vector.shape_cast %106 : vector<1xf32> to vector<1x1x1xf32>
    %108 = vector.extract %107[0, 0, 0] : f32 from vector<1x1x1xf32>
    %cst_40 = arith.constant 2.560000e+02 : f32
    %109 = arith.divf %108, %cst_40 : f32
    %110 = arith.mulf %52, %57 : vector<8x32xf32>
    %111 = vector.shape_cast %110 : vector<8x32xf32> to vector<1x8x32xf32>
    %cst_41 = arith.constant dense<0.000000e+00> : vector<1xf32>
    %112 = vector.multi_reduction <add>, %111, %cst_41 [1, 2] : vector<1x8x32xf32> to vector<1xf32>
    %113 = vector.shape_cast %112 : vector<1xf32> to vector<1x1x1xf32>
    %114 = vector.extract %113[0, 0, 0] : f32 from vector<1x1x1xf32>
    %cst_42 = arith.constant 2.560000e+02 : f32
    %115 = arith.divf %114, %cst_42 : f32
    %116 = arith.mulf %52, %62 : vector<8x32xf32>
    %117 = vector.shape_cast %116 : vector<8x32xf32> to vector<1x8x32xf32>
    %cst_43 = arith.constant dense<0.000000e+00> : vector<1xf32>
    %118 = vector.multi_reduction <add>, %117, %cst_43 [1, 2] : vector<1x8x32xf32> to vector<1xf32>
    %119 = vector.shape_cast %118 : vector<1xf32> to vector<1x1x1xf32>
    %120 = vector.extract %119[0, 0, 0] : f32 from vector<1x1x1xf32>
    %cst_44 = arith.constant 2.560000e+02 : f32
    %121 = arith.divf %120, %cst_44 : f32
    %122 = arith.mulf %52, %46 : vector<8x32xf32>
    %123 = vector.shape_cast %122 : vector<8x32xf32> to vector<1x8x32xf32>
    %cst_45 = arith.constant dense<0.000000e+00> : vector<1xf32>
    %124 = vector.multi_reduction <add>, %123, %cst_45 [1, 2] : vector<1x8x32xf32> to vector<1xf32>
    %125 = vector.shape_cast %124 : vector<1xf32> to vector<1x1x1xf32>
    %126 = vector.extract %125[0, 0, 0] : f32 from vector<1x1x1xf32>
    %cst_46 = arith.constant 2.560000e+02 : f32
    %127 = arith.divf %126, %cst_46 : f32
    %128 = arith.mulf %52, %67 : vector<8x32xf32>
    %129 = vector.shape_cast %128 : vector<8x32xf32> to vector<1x8x32xf32>
    %cst_47 = arith.constant dense<0.000000e+00> : vector<1xf32>
    %130 = vector.multi_reduction <add>, %129, %cst_47 [1, 2] : vector<1x8x32xf32> to vector<1xf32>
    %131 = vector.shape_cast %130 : vector<1xf32> to vector<1x1x1xf32>
    %132 = vector.extract %131[0, 0, 0] : f32 from vector<1x1x1xf32>
    %cst_48 = arith.constant 2.560000e+02 : f32
    %133 = arith.divf %132, %cst_48 : f32
    %134 = arith.mulf %24, %24 : vector<8x32xf32>
    %135 = vector.shape_cast %134 : vector<8x32xf32> to vector<1x8x32xf32>
    %cst_49 = arith.constant dense<0.000000e+00> : vector<1xf32>
    %136 = vector.multi_reduction <add>, %135, %cst_49 [1, 2] : vector<1x8x32xf32> to vector<1xf32>
    %137 = vector.shape_cast %136 : vector<1xf32> to vector<1x1x1xf32>
    %138 = vector.extract %137[0, 0, 0] : f32 from vector<1x1x1xf32>
    %cst_50 = arith.constant 2.560000e+02 : f32
    %139 = arith.divf %138, %cst_50 : f32
    %140 = arith.mulf %24, %57 : vector<8x32xf32>
    %141 = vector.shape_cast %140 : vector<8x32xf32> to vector<1x8x32xf32>
    %cst_51 = arith.constant dense<0.000000e+00> : vector<1xf32>
    %142 = vector.multi_reduction <add>, %141, %cst_51 [1, 2] : vector<1x8x32xf32> to vector<1xf32>
    %143 = vector.shape_cast %142 : vector<1xf32> to vector<1x1x1xf32>
    %144 = vector.extract %143[0, 0, 0] : f32 from vector<1x1x1xf32>
    %cst_52 = arith.constant 2.560000e+02 : f32
    %145 = arith.divf %144, %cst_52 : f32
    %146 = arith.mulf %24, %62 : vector<8x32xf32>
    %147 = vector.shape_cast %146 : vector<8x32xf32> to vector<1x8x32xf32>
    %cst_53 = arith.constant dense<0.000000e+00> : vector<1xf32>
    %148 = vector.multi_reduction <add>, %147, %cst_53 [1, 2] : vector<1x8x32xf32> to vector<1xf32>
    %149 = vector.shape_cast %148 : vector<1xf32> to vector<1x1x1xf32>
    %150 = vector.extract %149[0, 0, 0] : f32 from vector<1x1x1xf32>
    %cst_54 = arith.constant 2.560000e+02 : f32
    %151 = arith.divf %150, %cst_54 : f32
    %152 = arith.mulf %24, %46 : vector<8x32xf32>
    %153 = vector.shape_cast %152 : vector<8x32xf32> to vector<1x8x32xf32>
    %cst_55 = arith.constant dense<0.000000e+00> : vector<1xf32>
    %154 = vector.multi_reduction <add>, %153, %cst_55 [1, 2] : vector<1x8x32xf32> to vector<1xf32>
    %155 = vector.shape_cast %154 : vector<1xf32> to vector<1x1x1xf32>
    %156 = vector.extract %155[0, 0, 0] : f32 from vector<1x1x1xf32>
    %cst_56 = arith.constant 2.560000e+02 : f32
    %157 = arith.divf %156, %cst_56 : f32
    %158 = arith.mulf %24, %67 : vector<8x32xf32>
    %159 = vector.shape_cast %158 : vector<8x32xf32> to vector<1x8x32xf32>
    %cst_57 = arith.constant dense<0.000000e+00> : vector<1xf32>
    %160 = vector.multi_reduction <add>, %159, %cst_57 [1, 2] : vector<1x8x32xf32> to vector<1xf32>
    %161 = vector.shape_cast %160 : vector<1xf32> to vector<1x1x1xf32>
    %162 = vector.extract %161[0, 0, 0] : f32 from vector<1x1x1xf32>
    %cst_58 = arith.constant 2.560000e+02 : f32
    %163 = arith.divf %162, %cst_58 : f32
    %164 = arith.mulf %57, %57 : vector<8x32xf32>
    %165 = vector.shape_cast %164 : vector<8x32xf32> to vector<1x8x32xf32>
    %cst_59 = arith.constant dense<0.000000e+00> : vector<1xf32>
    %166 = vector.multi_reduction <add>, %165, %cst_59 [1, 2] : vector<1x8x32xf32> to vector<1xf32>
    %167 = vector.shape_cast %166 : vector<1xf32> to vector<1x1x1xf32>
    %168 = vector.extract %167[0, 0, 0] : f32 from vector<1x1x1xf32>
    %cst_60 = arith.constant 2.560000e+02 : f32
    %169 = arith.divf %168, %cst_60 : f32
    %170 = arith.mulf %57, %62 : vector<8x32xf32>
    %171 = vector.shape_cast %170 : vector<8x32xf32> to vector<1x8x32xf32>
    %cst_61 = arith.constant dense<0.000000e+00> : vector<1xf32>
    %172 = vector.multi_reduction <add>, %171, %cst_61 [1, 2] : vector<1x8x32xf32> to vector<1xf32>
    %173 = vector.shape_cast %172 : vector<1xf32> to vector<1x1x1xf32>
    %174 = vector.extract %173[0, 0, 0] : f32 from vector<1x1x1xf32>
    %cst_62 = arith.constant 2.560000e+02 : f32
    %175 = arith.divf %174, %cst_62 : f32
    %176 = arith.mulf %57, %46 : vector<8x32xf32>
    %177 = vector.shape_cast %176 : vector<8x32xf32> to vector<1x8x32xf32>
    %cst_63 = arith.constant dense<0.000000e+00> : vector<1xf32>
    %178 = vector.multi_reduction <add>, %177, %cst_63 [1, 2] : vector<1x8x32xf32> to vector<1xf32>
    %179 = vector.shape_cast %178 : vector<1xf32> to vector<1x1x1xf32>
    %180 = vector.extract %179[0, 0, 0] : f32 from vector<1x1x1xf32>
    %cst_64 = arith.constant 2.560000e+02 : f32
    %181 = arith.divf %180, %cst_64 : f32
    %182 = arith.mulf %57, %67 : vector<8x32xf32>
    %183 = vector.shape_cast %182 : vector<8x32xf32> to vector<1x8x32xf32>
    %cst_65 = arith.constant dense<0.000000e+00> : vector<1xf32>
    %184 = vector.multi_reduction <add>, %183, %cst_65 [1, 2] : vector<1x8x32xf32> to vector<1xf32>
    %185 = vector.shape_cast %184 : vector<1xf32> to vector<1x1x1xf32>
    %186 = vector.extract %185[0, 0, 0] : f32 from vector<1x1x1xf32>
    %cst_66 = arith.constant 2.560000e+02 : f32
    %187 = arith.divf %186, %cst_66 : f32
    %188 = arith.mulf %62, %62 : vector<8x32xf32>
    %189 = vector.shape_cast %188 : vector<8x32xf32> to vector<1x8x32xf32>
    %cst_67 = arith.constant dense<0.000000e+00> : vector<1xf32>
    %190 = vector.multi_reduction <add>, %189, %cst_67 [1, 2] : vector<1x8x32xf32> to vector<1xf32>
    %191 = vector.shape_cast %190 : vector<1xf32> to vector<1x1x1xf32>
    %192 = vector.extract %191[0, 0, 0] : f32 from vector<1x1x1xf32>
    %cst_68 = arith.constant 2.560000e+02 : f32
    %193 = arith.divf %192, %cst_68 : f32
    %194 = arith.mulf %62, %46 : vector<8x32xf32>
    %195 = vector.shape_cast %194 : vector<8x32xf32> to vector<1x8x32xf32>
    %cst_69 = arith.constant dense<0.000000e+00> : vector<1xf32>
    %196 = vector.multi_reduction <add>, %195, %cst_69 [1, 2] : vector<1x8x32xf32> to vector<1xf32>
    %197 = vector.shape_cast %196 : vector<1xf32> to vector<1x1x1xf32>
    %198 = vector.extract %197[0, 0, 0] : f32 from vector<1x1x1xf32>
    %cst_70 = arith.constant 2.560000e+02 : f32
    %199 = arith.divf %198, %cst_70 : f32
    %200 = arith.mulf %62, %67 : vector<8x32xf32>
    %201 = vector.shape_cast %200 : vector<8x32xf32> to vector<1x8x32xf32>
    %cst_71 = arith.constant dense<0.000000e+00> : vector<1xf32>
    %202 = vector.multi_reduction <add>, %201, %cst_71 [1, 2] : vector<1x8x32xf32> to vector<1xf32>
    %203 = vector.shape_cast %202 : vector<1xf32> to vector<1x1x1xf32>
    %204 = vector.extract %203[0, 0, 0] : f32 from vector<1x1x1xf32>
    %cst_72 = arith.constant 2.560000e+02 : f32
    %205 = arith.divf %204, %cst_72 : f32
    %206 = arith.mulf %46, %46 : vector<8x32xf32>
    %207 = vector.shape_cast %206 : vector<8x32xf32> to vector<1x8x32xf32>
    %cst_73 = arith.constant dense<0.000000e+00> : vector<1xf32>
    %208 = vector.multi_reduction <add>, %207, %cst_73 [1, 2] : vector<1x8x32xf32> to vector<1xf32>
    %209 = vector.shape_cast %208 : vector<1xf32> to vector<1x1x1xf32>
    %210 = vector.extract %209[0, 0, 0] : f32 from vector<1x1x1xf32>
    %cst_74 = arith.constant 2.560000e+02 : f32
    %211 = arith.divf %210, %cst_74 : f32
    %212 = arith.mulf %46, %67 : vector<8x32xf32>
    %213 = vector.shape_cast %212 : vector<8x32xf32> to vector<1x8x32xf32>
    %cst_75 = arith.constant dense<0.000000e+00> : vector<1xf32>
    %214 = vector.multi_reduction <add>, %213, %cst_75 [1, 2] : vector<1x8x32xf32> to vector<1xf32>
    %215 = vector.shape_cast %214 : vector<1xf32> to vector<1x1x1xf32>
    %216 = vector.extract %215[0, 0, 0] : f32 from vector<1x1x1xf32>
    %cst_76 = arith.constant 2.560000e+02 : f32
    %217 = arith.divf %216, %cst_76 : f32
    %218 = arith.mulf %67, %67 : vector<8x32xf32>
    %219 = vector.shape_cast %218 : vector<8x32xf32> to vector<1x8x32xf32>
    %cst_77 = arith.constant dense<0.000000e+00> : vector<1xf32>
    %220 = vector.multi_reduction <add>, %219, %cst_77 [1, 2] : vector<1x8x32xf32> to vector<1xf32>
    %221 = vector.shape_cast %220 : vector<1xf32> to vector<1x1x1xf32>
    %222 = vector.extract %221[0, 0, 0] : f32 from vector<1x1x1xf32>
    %cst_78 = arith.constant 2.560000e+02 : f32
    %223 = arith.divf %222, %cst_78 : f32
    %cst_79 = arith.constant 0.000000e+00 : f32
    %224 = vector.broadcast %cst_79 : f32 to vector<8x1024xf32>
    %c0_80 = arith.constant 0 : index
    %c0_81 = arith.constant 0 : index
    %225 = vector.load %arg11[%c0_80, %c0_81] : memref<8x1024xf32, #tpu.memory_space<vmem>>, vector<8x1024xf32>
    tpu.vector_store %arg11[%c0_80, %c0_81], %224 {strides = array<i32>} : memref<8x1024xf32, #tpu.memory_space<vmem>>, vector<8x1024xf32>,
    %c0_82 = arith.constant 0 : index
    %226 = memref.load %arg3[%c0_82] : memref<48xf32, #tpu.memory_space<smem>>
    %c1_83 = arith.constant 1 : index
    %227 = memref.load %arg3[%c1_83] : memref<48xf32, #tpu.memory_space<smem>>
    %c2 = arith.constant 2 : index
    %228 = memref.load %arg3[%c2] : memref<48xf32, #tpu.memory_space<smem>>
    %c3 = arith.constant 3 : index
    %229 = memref.load %arg3[%c3] : memref<48xf32, #tpu.memory_space<smem>>
    %c4 = arith.constant 4 : index
    %230 = memref.load %arg3[%c4] : memref<48xf32, #tpu.memory_space<smem>>
    %c5 = arith.constant 5 : index
    %231 = memref.load %arg3[%c5] : memref<48xf32, #tpu.memory_space<smem>>
    %232 = arith.mulf %226, %72 : f32
    %233 = arith.mulf %227, %77 : f32
    %234 = arith.addf %232, %233 : f32
    %235 = arith.mulf %228, %82 : f32
    %236 = arith.addf %234, %235 : f32
    %237 = arith.mulf %229, %87 : f32
    %238 = arith.addf %236, %237 : f32
    %239 = arith.mulf %230, %92 : f32
    %240 = arith.addf %238, %239 : f32
    %241 = arith.mulf %231, %97 : f32
    %242 = arith.addf %240, %241 : f32
    %243 = arith.mulf %226, %226 : f32
    %244 = arith.mulf %243, %103 : f32
    %245 = arith.mulf %226, %227 : f32
    %cst_84 = arith.constant 2.000000e+00 : f32
    %246 = arith.mulf %245, %cst_84 : f32
    %247 = arith.mulf %246, %109 : f32
    %248 = arith.addf %244, %247 : f32
    %249 = arith.mulf %226, %228 : f32
    %cst_85 = arith.constant 2.000000e+00 : f32
    %250 = arith.mulf %249, %cst_85 : f32
    %251 = arith.mulf %250, %115 : f32
    %252 = arith.addf %248, %251 : f32
    %253 = arith.mulf %226, %229 : f32
    %cst_86 = arith.constant 2.000000e+00 : f32
    %254 = arith.mulf %253, %cst_86 : f32
    %255 = arith.mulf %254, %121 : f32
    %256 = arith.addf %252, %255 : f32
    %257 = arith.mulf %226, %230 : f32
    %cst_87 = arith.constant 2.000000e+00 : f32
    %258 = arith.mulf %257, %cst_87 : f32
    %259 = arith.mulf %258, %127 : f32
    %260 = arith.addf %256, %259 : f32
    %261 = arith.mulf %226, %231 : f32
    %cst_88 = arith.constant 2.000000e+00 : f32
    %262 = arith.mulf %261, %cst_88 : f32
    %263 = arith.mulf %262, %133 : f32
    %264 = arith.addf %260, %263 : f32
    %265 = arith.mulf %227, %227 : f32
    %266 = arith.mulf %265, %139 : f32
    %267 = arith.addf %264, %266 : f32
    %268 = arith.mulf %227, %228 : f32
    %cst_89 = arith.constant 2.000000e+00 : f32
    %269 = arith.mulf %268, %cst_89 : f32
    %270 = arith.mulf %269, %145 : f32
    %271 = arith.addf %267, %270 : f32
    %272 = arith.mulf %227, %229 : f32
    %cst_90 = arith.constant 2.000000e+00 : f32
    %273 = arith.mulf %272, %cst_90 : f32
    %274 = arith.mulf %273, %151 : f32
    %275 = arith.addf %271, %274 : f32
    %276 = arith.mulf %227, %230 : f32
    %cst_91 = arith.constant 2.000000e+00 : f32
    %277 = arith.mulf %276, %cst_91 : f32
    %278 = arith.mulf %277, %157 : f32
    %279 = arith.addf %275, %278 : f32
    %280 = arith.mulf %227, %231 : f32
    %cst_92 = arith.constant 2.000000e+00 : f32
    %281 = arith.mulf %280, %cst_92 : f32
    %282 = arith.mulf %281, %163 : f32
    %283 = arith.addf %279, %282 : f32
    %284 = arith.mulf %228, %228 : f32
    %285 = arith.mulf %284, %169 : f32
    %286 = arith.addf %283, %285 : f32
    %287 = arith.mulf %228, %229 : f32
    %cst_93 = arith.constant 2.000000e+00 : f32
    %288 = arith.mulf %287, %cst_93 : f32
    %289 = arith.mulf %288, %175 : f32
    %290 = arith.addf %286, %289 : f32
    %291 = arith.mulf %228, %230 : f32
    %cst_94 = arith.constant 2.000000e+00 : f32
    %292 = arith.mulf %291, %cst_94 : f32
    %293 = arith.mulf %292, %181 : f32
    %294 = arith.addf %290, %293 : f32
    %295 = arith.mulf %228, %231 : f32
    %cst_95 = arith.constant 2.000000e+00 : f32
    %296 = arith.mulf %295, %cst_95 : f32
    %297 = arith.mulf %296, %187 : f32
    %298 = arith.addf %294, %297 : f32
    %299 = arith.mulf %229, %229 : f32
    %300 = arith.mulf %299, %193 : f32
    %301 = arith.addf %298, %300 : f32
    %302 = arith.mulf %229, %230 : f32
    %cst_96 = arith.constant 2.000000e+00 : f32
    %303 = arith.mulf %302, %cst_96 : f32
    %304 = arith.mulf %303, %199 : f32
    %305 = arith.addf %301, %304 : f32
    %306 = arith.mulf %229, %231 : f32
    %cst_97 = arith.constant 2.000000e+00 : f32
    %307 = arith.mulf %306, %cst_97 : f32
    %308 = arith.mulf %307, %205 : f32
    %309 = arith.addf %305, %308 : f32
    %310 = arith.mulf %230, %230 : f32
    %311 = arith.mulf %310, %211 : f32
    %312 = arith.addf %309, %311 : f32
    %313 = arith.mulf %230, %231 : f32
    %cst_98 = arith.constant 2.000000e+00 : f32
    %314 = arith.mulf %313, %cst_98 : f32
    %315 = arith.mulf %314, %217 : f32
    %316 = arith.addf %312, %315 : f32
    %317 = arith.mulf %231, %231 : f32
    %318 = arith.mulf %317, %223 : f32
    %319 = arith.addf %316, %318 : f32
    %320 = arith.mulf %242, %242 : f32
    %321 = arith.subf %319, %320 : f32
    %cst_99 = arith.constant 9.99999974E-6 : f32
    %322 = arith.addf %321, %cst_99 : f32
    %323 = math.rsqrt %322 : f32
    %c0_100 = arith.constant 0 : index
    %324 = memref.load %arg6[%c0_100] : memref<8xf32, #tpu.memory_space<smem>>
    %325 = arith.mulf %323, %324 : f32
    %c0_101 = arith.constant 0 : index
    %326 = memref.load %arg7[%c0_101] : memref<8xf32, #tpu.memory_space<smem>>
    %327 = arith.mulf %242, %325 : f32
    %328 = arith.subf %326, %327 : f32
    %329 = arith.mulf %226, %325 : f32
    %330 = vector.broadcast %329 : f32 to vector<8x32xf32>
    %331 = arith.mulf %52, %330 : vector<8x32xf32>
    %332 = arith.mulf %227, %325 : f32
    %333 = vector.broadcast %332 : f32 to vector<8x32xf32>
    %334 = arith.mulf %24, %333 : vector<8x32xf32>
    %335 = arith.addf %331, %334 : vector<8x32xf32>
    %336 = arith.mulf %228, %325 : f32
    %337 = vector.broadcast %336 : f32 to vector<8x32xf32>
    %338 = arith.mulf %57, %337 : vector<8x32xf32>
    %339 = arith.addf %335, %338 : vector<8x32xf32>
    %340 = arith.mulf %229, %325 : f32
    %341 = vector.broadcast %340 : f32 to vector<8x32xf32>
    %342 = arith.mulf %62, %341 : vector<8x32xf32>
    %343 = arith.addf %339, %342 : vector<8x32xf32>
    %344 = arith.mulf %230, %325 : f32
    %345 = vector.broadcast %344 : f32 to vector<8x32xf32>
    %346 = arith.mulf %46, %345 : vector<8x32xf32>
    %347 = arith.addf %343, %346 : vector<8x32xf32>
    %348 = arith.mulf %231, %325 : f32
    %349 = vector.broadcast %348 : f32 to vector<8x32xf32>
    %350 = arith.mulf %67, %349 : vector<8x32xf32>
    %351 = arith.addf %347, %350 : vector<8x32xf32>
    %352 = vector.broadcast %328 : f32 to vector<8x32xf32>
    %353 = arith.addf %351, %352 : vector<8x32xf32>
    %cst_102 = arith.constant 0.000000e+00 : f32
    %354 = vector.broadcast %cst_102 : f32 to vector<8x32xf32>
    %355 = arith.maximumf %353, %354 : vector<8x32xf32>
    %c0_103 = arith.constant 0 : index
    %c0_104 = arith.constant 0 : index
    %356 = vector.load %arg11[%c0_103, %c0_104] : memref<8x1024xf32, #tpu.memory_space<vmem>>, vector<8x32xf32>
    tpu.vector_store %arg11[%c0_103, %c0_104], %355 {strides = array<i32>} : memref<8x1024xf32, #tpu.memory_space<vmem>>, vector<8x32xf32>,
    %c6 = arith.constant 6 : index
    %357 = memref.load %arg3[%c6] : memref<48xf32, #tpu.memory_space<smem>>
    %c7 = arith.constant 7 : index
    %358 = memref.load %arg3[%c7] : memref<48xf32, #tpu.memory_space<smem>>
    %c8 = arith.constant 8 : index
    %359 = memref.load %arg3[%c8] : memref<48xf32, #tpu.memory_space<smem>>
    %c9 = arith.constant 9 : index
    %360 = memref.load %arg3[%c9] : memref<48xf32, #tpu.memory_space<smem>>
    %c10 = arith.constant 10 : index
    %361 = memref.load %arg3[%c10] : memref<48xf32, #tpu.memory_space<smem>>
    %c11 = arith.constant 11 : index
    %362 = memref.load %arg3[%c11] : memref<48xf32, #tpu.memory_space<smem>>
    %363 = arith.mulf %357, %72 : f32
    %364 = arith.mulf %358, %77 : f32
    %365 = arith.addf %363, %364 : f32
    %366 = arith.mulf %359, %82 : f32
    %367 = arith.addf %365, %366 : f32
    %368 = arith.mulf %360, %87 : f32
    %369 = arith.addf %367, %368 : f32
    %370 = arith.mulf %361, %92 : f32
    %371 = arith.addf %369, %370 : f32
    %372 = arith.mulf %362, %97 : f32
    %373 = arith.addf %371, %372 : f32
    %374 = arith.mulf %357, %357 : f32
    %375 = arith.mulf %374, %103 : f32
    %376 = arith.mulf %357, %358 : f32
    %cst_105 = arith.constant 2.000000e+00 : f32
    %377 = arith.mulf %376, %cst_105 : f32
    %378 = arith.mulf %377, %109 : f32
    %379 = arith.addf %375, %378 : f32
    %380 = arith.mulf %357, %359 : f32
    %cst_106 = arith.constant 2.000000e+00 : f32
    %381 = arith.mulf %380, %cst_106 : f32
    %382 = arith.mulf %381, %115 : f32
    %383 = arith.addf %379, %382 : f32
    %384 = arith.mulf %357, %360 : f32
    %cst_107 = arith.constant 2.000000e+00 : f32
    %385 = arith.mulf %384, %cst_107 : f32
    %386 = arith.mulf %385, %121 : f32
    %387 = arith.addf %383, %386 : f32
    %388 = arith.mulf %357, %361 : f32
    %cst_108 = arith.constant 2.000000e+00 : f32
    %389 = arith.mulf %388, %cst_108 : f32
    %390 = arith.mulf %389, %127 : f32
    %391 = arith.addf %387, %390 : f32
    %392 = arith.mulf %357, %362 : f32
    %cst_109 = arith.constant 2.000000e+00 : f32
    %393 = arith.mulf %392, %cst_109 : f32
    %394 = arith.mulf %393, %133 : f32
    %395 = arith.addf %391, %394 : f32
    %396 = arith.mulf %358, %358 : f32
    %397 = arith.mulf %396, %139 : f32
    %398 = arith.addf %395, %397 : f32
    %399 = arith.mulf %358, %359 : f32
    %cst_110 = arith.constant 2.000000e+00 : f32
    %400 = arith.mulf %399, %cst_110 : f32
    %401 = arith.mulf %400, %145 : f32
    %402 = arith.addf %398, %401 : f32
    %403 = arith.mulf %358, %360 : f32
    %cst_111 = arith.constant 2.000000e+00 : f32
    %404 = arith.mulf %403, %cst_111 : f32
    %405 = arith.mulf %404, %151 : f32
    %406 = arith.addf %402, %405 : f32
    %407 = arith.mulf %358, %361 : f32
    %cst_112 = arith.constant 2.000000e+00 : f32
    %408 = arith.mulf %407, %cst_112 : f32
    %409 = arith.mulf %408, %157 : f32
    %410 = arith.addf %406, %409 : f32
    %411 = arith.mulf %358, %362 : f32
    %cst_113 = arith.constant 2.000000e+00 : f32
    %412 = arith.mulf %411, %cst_113 : f32
    %413 = arith.mulf %412, %163 : f32
    %414 = arith.addf %410, %413 : f32
    %415 = arith.mulf %359, %359 : f32
    %416 = arith.mulf %415, %169 : f32
    %417 = arith.addf %414, %416 : f32
    %418 = arith.mulf %359, %360 : f32
    %cst_114 = arith.constant 2.000000e+00 : f32
    %419 = arith.mulf %418, %cst_114 : f32
    %420 = arith.mulf %419, %175 : f32
    %421 = arith.addf %417, %420 : f32
    %422 = arith.mulf %359, %361 : f32
    %cst_115 = arith.constant 2.000000e+00 : f32
    %423 = arith.mulf %422, %cst_115 : f32
    %424 = arith.mulf %423, %181 : f32
    %425 = arith.addf %421, %424 : f32
    %426 = arith.mulf %359, %362 : f32
    %cst_116 = arith.constant 2.000000e+00 : f32
    %427 = arith.mulf %426, %cst_116 : f32
    %428 = arith.mulf %427, %187 : f32
    %429 = arith.addf %425, %428 : f32
    %430 = arith.mulf %360, %360 : f32
    %431 = arith.mulf %430, %193 : f32
    %432 = arith.addf %429, %431 : f32
    %433 = arith.mulf %360, %361 : f32
    %cst_117 = arith.constant 2.000000e+00 : f32
    %434 = arith.mulf %433, %cst_117 : f32
    %435 = arith.mulf %434, %199 : f32
    %436 = arith.addf %432, %435 : f32
    %437 = arith.mulf %360, %362 : f32
    %cst_118 = arith.constant 2.000000e+00 : f32
    %438 = arith.mulf %437, %cst_118 : f32
    %439 = arith.mulf %438, %205 : f32
    %440 = arith.addf %436, %439 : f32
    %441 = arith.mulf %361, %361 : f32
    %442 = arith.mulf %441, %211 : f32
    %443 = arith.addf %440, %442 : f32
    %444 = arith.mulf %361, %362 : f32
    %cst_119 = arith.constant 2.000000e+00 : f32
    %445 = arith.mulf %444, %cst_119 : f32
    %446 = arith.mulf %445, %217 : f32
    %447 = arith.addf %443, %446 : f32
    %448 = arith.mulf %362, %362 : f32
    %449 = arith.mulf %448, %223 : f32
    %450 = arith.addf %447, %449 : f32
    %451 = arith.mulf %373, %373 : f32
    %452 = arith.subf %450, %451 : f32
    %cst_120 = arith.constant 9.99999974E-6 : f32
    %453 = arith.addf %452, %cst_120 : f32
    %454 = math.rsqrt %453 : f32
    %c1_121 = arith.constant 1 : index
    %455 = memref.load %arg6[%c1_121] : memref<8xf32, #tpu.memory_space<smem>>
    %456 = arith.mulf %454, %455 : f32
    %c1_122 = arith.constant 1 : index
    %457 = memref.load %arg7[%c1_122] : memref<8xf32, #tpu.memory_space<smem>>
    %458 = arith.mulf %373, %456 : f32
    %459 = arith.subf %457, %458 : f32
    %460 = arith.mulf %357, %456 : f32
    %461 = vector.broadcast %460 : f32 to vector<8x32xf32>
    %462 = arith.mulf %52, %461 : vector<8x32xf32>
    %463 = arith.mulf %358, %456 : f32
    %464 = vector.broadcast %463 : f32 to vector<8x32xf32>
    %465 = arith.mulf %24, %464 : vector<8x32xf32>
    %466 = arith.addf %462, %465 : vector<8x32xf32>
    %467 = arith.mulf %359, %456 : f32
    %468 = vector.broadcast %467 : f32 to vector<8x32xf32>
    %469 = arith.mulf %57, %468 : vector<8x32xf32>
    %470 = arith.addf %466, %469 : vector<8x32xf32>
    %471 = arith.mulf %360, %456 : f32
    %472 = vector.broadcast %471 : f32 to vector<8x32xf32>
    %473 = arith.mulf %62, %472 : vector<8x32xf32>
    %474 = arith.addf %470, %473 : vector<8x32xf32>
    %475 = arith.mulf %361, %456 : f32
    %476 = vector.broadcast %475 : f32 to vector<8x32xf32>
    %477 = arith.mulf %46, %476 : vector<8x32xf32>
    %478 = arith.addf %474, %477 : vector<8x32xf32>
    %479 = arith.mulf %362, %456 : f32
    %480 = vector.broadcast %479 : f32 to vector<8x32xf32>
    %481 = arith.mulf %67, %480 : vector<8x32xf32>
    %482 = arith.addf %478, %481 : vector<8x32xf32>
    %483 = vector.broadcast %459 : f32 to vector<8x32xf32>
    %484 = arith.addf %482, %483 : vector<8x32xf32>
    %cst_123 = arith.constant 0.000000e+00 : f32
    %485 = vector.broadcast %cst_123 : f32 to vector<8x32xf32>
    %486 = arith.maximumf %484, %485 : vector<8x32xf32>
    %c0_124 = arith.constant 0 : index
    %c128 = arith.constant 128 : index
    %487 = vector.load %arg11[%c0_124, %c128] : memref<8x1024xf32, #tpu.memory_space<vmem>>, vector<8x32xf32>
    tpu.vector_store %arg11[%c0_124, %c128], %486 {strides = array<i32>} : memref<8x1024xf32, #tpu.memory_space<vmem>>, vector<8x32xf32>,
    %c12 = arith.constant 12 : index
    %488 = memref.load %arg3[%c12] : memref<48xf32, #tpu.memory_space<smem>>
    %c13 = arith.constant 13 : index
    %489 = memref.load %arg3[%c13] : memref<48xf32, #tpu.memory_space<smem>>
    %c14 = arith.constant 14 : index
    %490 = memref.load %arg3[%c14] : memref<48xf32, #tpu.memory_space<smem>>
    %c15 = arith.constant 15 : index
    %491 = memref.load %arg3[%c15] : memref<48xf32, #tpu.memory_space<smem>>
    %c16 = arith.constant 16 : index
    %492 = memref.load %arg3[%c16] : memref<48xf32, #tpu.memory_space<smem>>
    %c17 = arith.constant 17 : index
    %493 = memref.load %arg3[%c17] : memref<48xf32, #tpu.memory_space<smem>>
    %494 = arith.mulf %488, %72 : f32
    %495 = arith.mulf %489, %77 : f32
    %496 = arith.addf %494, %495 : f32
    %497 = arith.mulf %490, %82 : f32
    %498 = arith.addf %496, %497 : f32
    %499 = arith.mulf %491, %87 : f32
    %500 = arith.addf %498, %499 : f32
    %501 = arith.mulf %492, %92 : f32
    %502 = arith.addf %500, %501 : f32
    %503 = arith.mulf %493, %97 : f32
    %504 = arith.addf %502, %503 : f32
    %505 = arith.mulf %488, %488 : f32
    %506 = arith.mulf %505, %103 : f32
    %507 = arith.mulf %488, %489 : f32
    %cst_125 = arith.constant 2.000000e+00 : f32
    %508 = arith.mulf %507, %cst_125 : f32
    %509 = arith.mulf %508, %109 : f32
    %510 = arith.addf %506, %509 : f32
    %511 = arith.mulf %488, %490 : f32
    %cst_126 = arith.constant 2.000000e+00 : f32
    %512 = arith.mulf %511, %cst_126 : f32
    %513 = arith.mulf %512, %115 : f32
    %514 = arith.addf %510, %513 : f32
    %515 = arith.mulf %488, %491 : f32
    %cst_127 = arith.constant 2.000000e+00 : f32
    %516 = arith.mulf %515, %cst_127 : f32
    %517 = arith.mulf %516, %121 : f32
    %518 = arith.addf %514, %517 : f32
    %519 = arith.mulf %488, %492 : f32
    %cst_128 = arith.constant 2.000000e+00 : f32
    %520 = arith.mulf %519, %cst_128 : f32
    %521 = arith.mulf %520, %127 : f32
    %522 = arith.addf %518, %521 : f32
    %523 = arith.mulf %488, %493 : f32
    %cst_129 = arith.constant 2.000000e+00 : f32
    %524 = arith.mulf %523, %cst_129 : f32
    %525 = arith.mulf %524, %133 : f32
    %526 = arith.addf %522, %525 : f32
    %527 = arith.mulf %489, %489 : f32
    %528 = arith.mulf %527, %139 : f32
    %529 = arith.addf %526, %528 : f32
    %530 = arith.mulf %489, %490 : f32
    %cst_130 = arith.constant 2.000000e+00 : f32
    %531 = arith.mulf %530, %cst_130 : f32
    %532 = arith.mulf %531, %145 : f32
    %533 = arith.addf %529, %532 : f32
    %534 = arith.mulf %489, %491 : f32
    %cst_131 = arith.constant 2.000000e+00 : f32
    %535 = arith.mulf %534, %cst_131 : f32
    %536 = arith.mulf %535, %151 : f32
    %537 = arith.addf %533, %536 : f32
    %538 = arith.mulf %489, %492 : f32
    %cst_132 = arith.constant 2.000000e+00 : f32
    %539 = arith.mulf %538, %cst_132 : f32
    %540 = arith.mulf %539, %157 : f32
    %541 = arith.addf %537, %540 : f32
    %542 = arith.mulf %489, %493 : f32
    %cst_133 = arith.constant 2.000000e+00 : f32
    %543 = arith.mulf %542, %cst_133 : f32
    %544 = arith.mulf %543, %163 : f32
    %545 = arith.addf %541, %544 : f32
    %546 = arith.mulf %490, %490 : f32
    %547 = arith.mulf %546, %169 : f32
    %548 = arith.addf %545, %547 : f32
    %549 = arith.mulf %490, %491 : f32
    %cst_134 = arith.constant 2.000000e+00 : f32
    %550 = arith.mulf %549, %cst_134 : f32
    %551 = arith.mulf %550, %175 : f32
    %552 = arith.addf %548, %551 : f32
    %553 = arith.mulf %490, %492 : f32
    %cst_135 = arith.constant 2.000000e+00 : f32
    %554 = arith.mulf %553, %cst_135 : f32
    %555 = arith.mulf %554, %181 : f32
    %556 = arith.addf %552, %555 : f32
    %557 = arith.mulf %490, %493 : f32
    %cst_136 = arith.constant 2.000000e+00 : f32
    %558 = arith.mulf %557, %cst_136 : f32
    %559 = arith.mulf %558, %187 : f32
    %560 = arith.addf %556, %559 : f32
    %561 = arith.mulf %491, %491 : f32
    %562 = arith.mulf %561, %193 : f32
    %563 = arith.addf %560, %562 : f32
    %564 = arith.mulf %491, %492 : f32
    %cst_137 = arith.constant 2.000000e+00 : f32
    %565 = arith.mulf %564, %cst_137 : f32
    %566 = arith.mulf %565, %199 : f32
    %567 = arith.addf %563, %566 : f32
    %568 = arith.mulf %491, %493 : f32
    %cst_138 = arith.constant 2.000000e+00 : f32
    %569 = arith.mulf %568, %cst_138 : f32
    %570 = arith.mulf %569, %205 : f32
    %571 = arith.addf %567, %570 : f32
    %572 = arith.mulf %492, %492 : f32
    %573 = arith.mulf %572, %211 : f32
    %574 = arith.addf %571, %573 : f32
    %575 = arith.mulf %492, %493 : f32
    %cst_139 = arith.constant 2.000000e+00 : f32
    %576 = arith.mulf %575, %cst_139 : f32
    %577 = arith.mulf %576, %217 : f32
    %578 = arith.addf %574, %577 : f32
    %579 = arith.mulf %493, %493 : f32
    %580 = arith.mulf %579, %223 : f32
    %581 = arith.addf %578, %580 : f32
    %582 = arith.mulf %504, %504 : f32
    %583 = arith.subf %581, %582 : f32
    %cst_140 = arith.constant 9.99999974E-6 : f32
    %584 = arith.addf %583, %cst_140 : f32
    %585 = math.rsqrt %584 : f32
    %c2_141 = arith.constant 2 : index
    %586 = memref.load %arg6[%c2_141] : memref<8xf32, #tpu.memory_space<smem>>
    %587 = arith.mulf %585, %586 : f32
    %c2_142 = arith.constant 2 : index
    %588 = memref.load %arg7[%c2_142] : memref<8xf32, #tpu.memory_space<smem>>
    %589 = arith.mulf %504, %587 : f32
    %590 = arith.subf %588, %589 : f32
    %591 = arith.mulf %488, %587 : f32
    %592 = vector.broadcast %591 : f32 to vector<8x32xf32>
    %593 = arith.mulf %52, %592 : vector<8x32xf32>
    %594 = arith.mulf %489, %587 : f32
    %595 = vector.broadcast %594 : f32 to vector<8x32xf32>
    %596 = arith.mulf %24, %595 : vector<8x32xf32>
    %597 = arith.addf %593, %596 : vector<8x32xf32>
    %598 = arith.mulf %490, %587 : f32
    %599 = vector.broadcast %598 : f32 to vector<8x32xf32>
    %600 = arith.mulf %57, %599 : vector<8x32xf32>
    %601 = arith.addf %597, %600 : vector<8x32xf32>
    %602 = arith.mulf %491, %587 : f32
    %603 = vector.broadcast %602 : f32 to vector<8x32xf32>
    %604 = arith.mulf %62, %603 : vector<8x32xf32>
    %605 = arith.addf %601, %604 : vector<8x32xf32>
    %606 = arith.mulf %492, %587 : f32
    %607 = vector.broadcast %606 : f32 to vector<8x32xf32>
    %608 = arith.mulf %46, %607 : vector<8x32xf32>
    %609 = arith.addf %605, %608 : vector<8x32xf32>
    %610 = arith.mulf %493, %587 : f32
    %611 = vector.broadcast %610 : f32 to vector<8x32xf32>
    %612 = arith.mulf %67, %611 : vector<8x32xf32>
    %613 = arith.addf %609, %612 : vector<8x32xf32>
    %614 = vector.broadcast %590 : f32 to vector<8x32xf32>
    %615 = arith.addf %613, %614 : vector<8x32xf32>
    %cst_143 = arith.constant 0.000000e+00 : f32
    %616 = vector.broadcast %cst_143 : f32 to vector<8x32xf32>
    %617 = arith.maximumf %615, %616 : vector<8x32xf32>
    %c0_144 = arith.constant 0 : index
    %c256 = arith.constant 256 : index
    %618 = vector.load %arg11[%c0_144, %c256] : memref<8x1024xf32, #tpu.memory_space<vmem>>, vector<8x32xf32>
    tpu.vector_store %arg11[%c0_144, %c256], %617 {strides = array<i32>} : memref<8x1024xf32, #tpu.memory_space<vmem>>, vector<8x32xf32>,
    %c18 = arith.constant 18 : index
    %619 = memref.load %arg3[%c18] : memref<48xf32, #tpu.memory_space<smem>>
    %c19 = arith.constant 19 : index
    %620 = memref.load %arg3[%c19] : memref<48xf32, #tpu.memory_space<smem>>
    %c20 = arith.constant 20 : index
    %621 = memref.load %arg3[%c20] : memref<48xf32, #tpu.memory_space<smem>>
    %c21 = arith.constant 21 : index
    %622 = memref.load %arg3[%c21] : memref<48xf32, #tpu.memory_space<smem>>
    %c22 = arith.constant 22 : index
    %623 = memref.load %arg3[%c22] : memref<48xf32, #tpu.memory_space<smem>>
    %c23 = arith.constant 23 : index
    %624 = memref.load %arg3[%c23] : memref<48xf32, #tpu.memory_space<smem>>
    %625 = arith.mulf %619, %72 : f32
    %626 = arith.mulf %620, %77 : f32
    %627 = arith.addf %625, %626 : f32
    %628 = arith.mulf %621, %82 : f32
    %629 = arith.addf %627, %628 : f32
    %630 = arith.mulf %622, %87 : f32
    %631 = arith.addf %629, %630 : f32
    %632 = arith.mulf %623, %92 : f32
    %633 = arith.addf %631, %632 : f32
    %634 = arith.mulf %624, %97 : f32
    %635 = arith.addf %633, %634 : f32
    %636 = arith.mulf %619, %619 : f32
    %637 = arith.mulf %636, %103 : f32
    %638 = arith.mulf %619, %620 : f32
    %cst_145 = arith.constant 2.000000e+00 : f32
    %639 = arith.mulf %638, %cst_145 : f32
    %640 = arith.mulf %639, %109 : f32
    %641 = arith.addf %637, %640 : f32
    %642 = arith.mulf %619, %621 : f32
    %cst_146 = arith.constant 2.000000e+00 : f32
    %643 = arith.mulf %642, %cst_146 : f32
    %644 = arith.mulf %643, %115 : f32
    %645 = arith.addf %641, %644 : f32
    %646 = arith.mulf %619, %622 : f32
    %cst_147 = arith.constant 2.000000e+00 : f32
    %647 = arith.mulf %646, %cst_147 : f32
    %648 = arith.mulf %647, %121 : f32
    %649 = arith.addf %645, %648 : f32
    %650 = arith.mulf %619, %623 : f32
    %cst_148 = arith.constant 2.000000e+00 : f32
    %651 = arith.mulf %650, %cst_148 : f32
    %652 = arith.mulf %651, %127 : f32
    %653 = arith.addf %649, %652 : f32
    %654 = arith.mulf %619, %624 : f32
    %cst_149 = arith.constant 2.000000e+00 : f32
    %655 = arith.mulf %654, %cst_149 : f32
    %656 = arith.mulf %655, %133 : f32
    %657 = arith.addf %653, %656 : f32
    %658 = arith.mulf %620, %620 : f32
    %659 = arith.mulf %658, %139 : f32
    %660 = arith.addf %657, %659 : f32
    %661 = arith.mulf %620, %621 : f32
    %cst_150 = arith.constant 2.000000e+00 : f32
    %662 = arith.mulf %661, %cst_150 : f32
    %663 = arith.mulf %662, %145 : f32
    %664 = arith.addf %660, %663 : f32
    %665 = arith.mulf %620, %622 : f32
    %cst_151 = arith.constant 2.000000e+00 : f32
    %666 = arith.mulf %665, %cst_151 : f32
    %667 = arith.mulf %666, %151 : f32
    %668 = arith.addf %664, %667 : f32
    %669 = arith.mulf %620, %623 : f32
    %cst_152 = arith.constant 2.000000e+00 : f32
    %670 = arith.mulf %669, %cst_152 : f32
    %671 = arith.mulf %670, %157 : f32
    %672 = arith.addf %668, %671 : f32
    %673 = arith.mulf %620, %624 : f32
    %cst_153 = arith.constant 2.000000e+00 : f32
    %674 = arith.mulf %673, %cst_153 : f32
    %675 = arith.mulf %674, %163 : f32
    %676 = arith.addf %672, %675 : f32
    %677 = arith.mulf %621, %621 : f32
    %678 = arith.mulf %677, %169 : f32
    %679 = arith.addf %676, %678 : f32
    %680 = arith.mulf %621, %622 : f32
    %cst_154 = arith.constant 2.000000e+00 : f32
    %681 = arith.mulf %680, %cst_154 : f32
    %682 = arith.mulf %681, %175 : f32
    %683 = arith.addf %679, %682 : f32
    %684 = arith.mulf %621, %623 : f32
    %cst_155 = arith.constant 2.000000e+00 : f32
    %685 = arith.mulf %684, %cst_155 : f32
    %686 = arith.mulf %685, %181 : f32
    %687 = arith.addf %683, %686 : f32
    %688 = arith.mulf %621, %624 : f32
    %cst_156 = arith.constant 2.000000e+00 : f32
    %689 = arith.mulf %688, %cst_156 : f32
    %690 = arith.mulf %689, %187 : f32
    %691 = arith.addf %687, %690 : f32
    %692 = arith.mulf %622, %622 : f32
    %693 = arith.mulf %692, %193 : f32
    %694 = arith.addf %691, %693 : f32
    %695 = arith.mulf %622, %623 : f32
    %cst_157 = arith.constant 2.000000e+00 : f32
    %696 = arith.mulf %695, %cst_157 : f32
    %697 = arith.mulf %696, %199 : f32
    %698 = arith.addf %694, %697 : f32
    %699 = arith.mulf %622, %624 : f32
    %cst_158 = arith.constant 2.000000e+00 : f32
    %700 = arith.mulf %699, %cst_158 : f32
    %701 = arith.mulf %700, %205 : f32
    %702 = arith.addf %698, %701 : f32
    %703 = arith.mulf %623, %623 : f32
    %704 = arith.mulf %703, %211 : f32
    %705 = arith.addf %702, %704 : f32
    %706 = arith.mulf %623, %624 : f32
    %cst_159 = arith.constant 2.000000e+00 : f32
    %707 = arith.mulf %706, %cst_159 : f32
    %708 = arith.mulf %707, %217 : f32
    %709 = arith.addf %705, %708 : f32
    %710 = arith.mulf %624, %624 : f32
    %711 = arith.mulf %710, %223 : f32
    %712 = arith.addf %709, %711 : f32
    %713 = arith.mulf %635, %635 : f32
    %714 = arith.subf %712, %713 : f32
    %cst_160 = arith.constant 9.99999974E-6 : f32
    %715 = arith.addf %714, %cst_160 : f32
    %716 = math.rsqrt %715 : f32
    %c3_161 = arith.constant 3 : index
    %717 = memref.load %arg6[%c3_161] : memref<8xf32, #tpu.memory_space<smem>>
    %718 = arith.mulf %716, %717 : f32
    %c3_162 = arith.constant 3 : index
    %719 = memref.load %arg7[%c3_162] : memref<8xf32, #tpu.memory_space<smem>>
    %720 = arith.mulf %635, %718 : f32
    %721 = arith.subf %719, %720 : f32
    %722 = arith.mulf %619, %718 : f32
    %723 = vector.broadcast %722 : f32 to vector<8x32xf32>
    %724 = arith.mulf %52, %723 : vector<8x32xf32>
    %725 = arith.mulf %620, %718 : f32
    %726 = vector.broadcast %725 : f32 to vector<8x32xf32>
    %727 = arith.mulf %24, %726 : vector<8x32xf32>
    %728 = arith.addf %724, %727 : vector<8x32xf32>
    %729 = arith.mulf %621, %718 : f32
    %730 = vector.broadcast %729 : f32 to vector<8x32xf32>
    %731 = arith.mulf %57, %730 : vector<8x32xf32>
    %732 = arith.addf %728, %731 : vector<8x32xf32>
    %733 = arith.mulf %622, %718 : f32
    %734 = vector.broadcast %733 : f32 to vector<8x32xf32>
    %735 = arith.mulf %62, %734 : vector<8x32xf32>
    %736 = arith.addf %732, %735 : vector<8x32xf32>
    %737 = arith.mulf %623, %718 : f32
    %738 = vector.broadcast %737 : f32 to vector<8x32xf32>
    %739 = arith.mulf %46, %738 : vector<8x32xf32>
    %740 = arith.addf %736, %739 : vector<8x32xf32>
    %741 = arith.mulf %624, %718 : f32
    %742 = vector.broadcast %741 : f32 to vector<8x32xf32>
    %743 = arith.mulf %67, %742 : vector<8x32xf32>
    %744 = arith.addf %740, %743 : vector<8x32xf32>
    %745 = vector.broadcast %721 : f32 to vector<8x32xf32>
    %746 = arith.addf %744, %745 : vector<8x32xf32>
    %cst_163 = arith.constant 0.000000e+00 : f32
    %747 = vector.broadcast %cst_163 : f32 to vector<8x32xf32>
    %748 = arith.maximumf %746, %747 : vector<8x32xf32>
    %c0_164 = arith.constant 0 : index
    %c384 = arith.constant 384 : index
    %749 = vector.load %arg11[%c0_164, %c384] : memref<8x1024xf32, #tpu.memory_space<vmem>>, vector<8x32xf32>
    tpu.vector_store %arg11[%c0_164, %c384], %748 {strides = array<i32>} : memref<8x1024xf32, #tpu.memory_space<vmem>>, vector<8x32xf32>,
    %c24 = arith.constant 24 : index
    %750 = memref.load %arg3[%c24] : memref<48xf32, #tpu.memory_space<smem>>
    %c25 = arith.constant 25 : index
    %751 = memref.load %arg3[%c25] : memref<48xf32, #tpu.memory_space<smem>>
    %c26 = arith.constant 26 : index
    %752 = memref.load %arg3[%c26] : memref<48xf32, #tpu.memory_space<smem>>
    %c27 = arith.constant 27 : index
    %753 = memref.load %arg3[%c27] : memref<48xf32, #tpu.memory_space<smem>>
    %c28 = arith.constant 28 : index
    %754 = memref.load %arg3[%c28] : memref<48xf32, #tpu.memory_space<smem>>
    %c29 = arith.constant 29 : index
    %755 = memref.load %arg3[%c29] : memref<48xf32, #tpu.memory_space<smem>>
    %756 = arith.mulf %750, %72 : f32
    %757 = arith.mulf %751, %77 : f32
    %758 = arith.addf %756, %757 : f32
    %759 = arith.mulf %752, %82 : f32
    %760 = arith.addf %758, %759 : f32
    %761 = arith.mulf %753, %87 : f32
    %762 = arith.addf %760, %761 : f32
    %763 = arith.mulf %754, %92 : f32
    %764 = arith.addf %762, %763 : f32
    %765 = arith.mulf %755, %97 : f32
    %766 = arith.addf %764, %765 : f32
    %767 = arith.mulf %750, %750 : f32
    %768 = arith.mulf %767, %103 : f32
    %769 = arith.mulf %750, %751 : f32
    %cst_165 = arith.constant 2.000000e+00 : f32
    %770 = arith.mulf %769, %cst_165 : f32
    %771 = arith.mulf %770, %109 : f32
    %772 = arith.addf %768, %771 : f32
    %773 = arith.mulf %750, %752 : f32
    %cst_166 = arith.constant 2.000000e+00 : f32
    %774 = arith.mulf %773, %cst_166 : f32
    %775 = arith.mulf %774, %115 : f32
    %776 = arith.addf %772, %775 : f32
    %777 = arith.mulf %750, %753 : f32
    %cst_167 = arith.constant 2.000000e+00 : f32
    %778 = arith.mulf %777, %cst_167 : f32
    %779 = arith.mulf %778, %121 : f32
    %780 = arith.addf %776, %779 : f32
    %781 = arith.mulf %750, %754 : f32
    %cst_168 = arith.constant 2.000000e+00 : f32
    %782 = arith.mulf %781, %cst_168 : f32
    %783 = arith.mulf %782, %127 : f32
    %784 = arith.addf %780, %783 : f32
    %785 = arith.mulf %750, %755 : f32
    %cst_169 = arith.constant 2.000000e+00 : f32
    %786 = arith.mulf %785, %cst_169 : f32
    %787 = arith.mulf %786, %133 : f32
    %788 = arith.addf %784, %787 : f32
    %789 = arith.mulf %751, %751 : f32
    %790 = arith.mulf %789, %139 : f32
    %791 = arith.addf %788, %790 : f32
    %792 = arith.mulf %751, %752 : f32
    %cst_170 = arith.constant 2.000000e+00 : f32
    %793 = arith.mulf %792, %cst_170 : f32
    %794 = arith.mulf %793, %145 : f32
    %795 = arith.addf %791, %794 : f32
    %796 = arith.mulf %751, %753 : f32
    %cst_171 = arith.constant 2.000000e+00 : f32
    %797 = arith.mulf %796, %cst_171 : f32
    %798 = arith.mulf %797, %151 : f32
    %799 = arith.addf %795, %798 : f32
    %800 = arith.mulf %751, %754 : f32
    %cst_172 = arith.constant 2.000000e+00 : f32
    %801 = arith.mulf %800, %cst_172 : f32
    %802 = arith.mulf %801, %157 : f32
    %803 = arith.addf %799, %802 : f32
    %804 = arith.mulf %751, %755 : f32
    %cst_173 = arith.constant 2.000000e+00 : f32
    %805 = arith.mulf %804, %cst_173 : f32
    %806 = arith.mulf %805, %163 : f32
    %807 = arith.addf %803, %806 : f32
    %808 = arith.mulf %752, %752 : f32
    %809 = arith.mulf %808, %169 : f32
    %810 = arith.addf %807, %809 : f32
    %811 = arith.mulf %752, %753 : f32
    %cst_174 = arith.constant 2.000000e+00 : f32
    %812 = arith.mulf %811, %cst_174 : f32
    %813 = arith.mulf %812, %175 : f32
    %814 = arith.addf %810, %813 : f32
    %815 = arith.mulf %752, %754 : f32
    %cst_175 = arith.constant 2.000000e+00 : f32
    %816 = arith.mulf %815, %cst_175 : f32
    %817 = arith.mulf %816, %181 : f32
    %818 = arith.addf %814, %817 : f32
    %819 = arith.mulf %752, %755 : f32
    %cst_176 = arith.constant 2.000000e+00 : f32
    %820 = arith.mulf %819, %cst_176 : f32
    %821 = arith.mulf %820, %187 : f32
    %822 = arith.addf %818, %821 : f32
    %823 = arith.mulf %753, %753 : f32
    %824 = arith.mulf %823, %193 : f32
    %825 = arith.addf %822, %824 : f32
    %826 = arith.mulf %753, %754 : f32
    %cst_177 = arith.constant 2.000000e+00 : f32
    %827 = arith.mulf %826, %cst_177 : f32
    %828 = arith.mulf %827, %199 : f32
    %829 = arith.addf %825, %828 : f32
    %830 = arith.mulf %753, %755 : f32
    %cst_178 = arith.constant 2.000000e+00 : f32
    %831 = arith.mulf %830, %cst_178 : f32
    %832 = arith.mulf %831, %205 : f32
    %833 = arith.addf %829, %832 : f32
    %834 = arith.mulf %754, %754 : f32
    %835 = arith.mulf %834, %211 : f32
    %836 = arith.addf %833, %835 : f32
    %837 = arith.mulf %754, %755 : f32
    %cst_179 = arith.constant 2.000000e+00 : f32
    %838 = arith.mulf %837, %cst_179 : f32
    %839 = arith.mulf %838, %217 : f32
    %840 = arith.addf %836, %839 : f32
    %841 = arith.mulf %755, %755 : f32
    %842 = arith.mulf %841, %223 : f32
    %843 = arith.addf %840, %842 : f32
    %844 = arith.mulf %766, %766 : f32
    %845 = arith.subf %843, %844 : f32
    %cst_180 = arith.constant 9.99999974E-6 : f32
    %846 = arith.addf %845, %cst_180 : f32
    %847 = math.rsqrt %846 : f32
    %c4_181 = arith.constant 4 : index
    %848 = memref.load %arg6[%c4_181] : memref<8xf32, #tpu.memory_space<smem>>
    %849 = arith.mulf %847, %848 : f32
    %c4_182 = arith.constant 4 : index
    %850 = memref.load %arg7[%c4_182] : memref<8xf32, #tpu.memory_space<smem>>
    %851 = arith.mulf %766, %849 : f32
    %852 = arith.subf %850, %851 : f32
    %853 = arith.mulf %750, %849 : f32
    %854 = vector.broadcast %853 : f32 to vector<8x32xf32>
    %855 = arith.mulf %52, %854 : vector<8x32xf32>
    %856 = arith.mulf %751, %849 : f32
    %857 = vector.broadcast %856 : f32 to vector<8x32xf32>
    %858 = arith.mulf %24, %857 : vector<8x32xf32>
    %859 = arith.addf %855, %858 : vector<8x32xf32>
    %860 = arith.mulf %752, %849 : f32
    %861 = vector.broadcast %860 : f32 to vector<8x32xf32>
    %862 = arith.mulf %57, %861 : vector<8x32xf32>
    %863 = arith.addf %859, %862 : vector<8x32xf32>
    %864 = arith.mulf %753, %849 : f32
    %865 = vector.broadcast %864 : f32 to vector<8x32xf32>
    %866 = arith.mulf %62, %865 : vector<8x32xf32>
    %867 = arith.addf %863, %866 : vector<8x32xf32>
    %868 = arith.mulf %754, %849 : f32
    %869 = vector.broadcast %868 : f32 to vector<8x32xf32>
    %870 = arith.mulf %46, %869 : vector<8x32xf32>
    %871 = arith.addf %867, %870 : vector<8x32xf32>
    %872 = arith.mulf %755, %849 : f32
    %873 = vector.broadcast %872 : f32 to vector<8x32xf32>
    %874 = arith.mulf %67, %873 : vector<8x32xf32>
    %875 = arith.addf %871, %874 : vector<8x32xf32>
    %876 = vector.broadcast %852 : f32 to vector<8x32xf32>
    %877 = arith.addf %875, %876 : vector<8x32xf32>
    %cst_183 = arith.constant 0.000000e+00 : f32
    %878 = vector.broadcast %cst_183 : f32 to vector<8x32xf32>
    %879 = arith.maximumf %877, %878 : vector<8x32xf32>
    %c0_184 = arith.constant 0 : index
    %c512 = arith.constant 512 : index
    %880 = vector.load %arg11[%c0_184, %c512] : memref<8x1024xf32, #tpu.memory_space<vmem>>, vector<8x32xf32>
    tpu.vector_store %arg11[%c0_184, %c512], %879 {strides = array<i32>} : memref<8x1024xf32, #tpu.memory_space<vmem>>, vector<8x32xf32>,
    %c30 = arith.constant 30 : index
    %881 = memref.load %arg3[%c30] : memref<48xf32, #tpu.memory_space<smem>>
    %c31 = arith.constant 31 : index
    %882 = memref.load %arg3[%c31] : memref<48xf32, #tpu.memory_space<smem>>
    %c32 = arith.constant 32 : index
    %883 = memref.load %arg3[%c32] : memref<48xf32, #tpu.memory_space<smem>>
    %c33 = arith.constant 33 : index
    %884 = memref.load %arg3[%c33] : memref<48xf32, #tpu.memory_space<smem>>
    %c34 = arith.constant 34 : index
    %885 = memref.load %arg3[%c34] : memref<48xf32, #tpu.memory_space<smem>>
    %c35 = arith.constant 35 : index
    %886 = memref.load %arg3[%c35] : memref<48xf32, #tpu.memory_space<smem>>
    %887 = arith.mulf %881, %72 : f32
    %888 = arith.mulf %882, %77 : f32
    %889 = arith.addf %887, %888 : f32
    %890 = arith.mulf %883, %82 : f32
    %891 = arith.addf %889, %890 : f32
    %892 = arith.mulf %884, %87 : f32
    %893 = arith.addf %891, %892 : f32
    %894 = arith.mulf %885, %92 : f32
    %895 = arith.addf %893, %894 : f32
    %896 = arith.mulf %886, %97 : f32
    %897 = arith.addf %895, %896 : f32
    %898 = arith.mulf %881, %881 : f32
    %899 = arith.mulf %898, %103 : f32
    %900 = arith.mulf %881, %882 : f32
    %cst_185 = arith.constant 2.000000e+00 : f32
    %901 = arith.mulf %900, %cst_185 : f32
    %902 = arith.mulf %901, %109 : f32
    %903 = arith.addf %899, %902 : f32
    %904 = arith.mulf %881, %883 : f32
    %cst_186 = arith.constant 2.000000e+00 : f32
    %905 = arith.mulf %904, %cst_186 : f32
    %906 = arith.mulf %905, %115 : f32
    %907 = arith.addf %903, %906 : f32
    %908 = arith.mulf %881, %884 : f32
    %cst_187 = arith.constant 2.000000e+00 : f32
    %909 = arith.mulf %908, %cst_187 : f32
    %910 = arith.mulf %909, %121 : f32
    %911 = arith.addf %907, %910 : f32
    %912 = arith.mulf %881, %885 : f32
    %cst_188 = arith.constant 2.000000e+00 : f32
    %913 = arith.mulf %912, %cst_188 : f32
    %914 = arith.mulf %913, %127 : f32
    %915 = arith.addf %911, %914 : f32
    %916 = arith.mulf %881, %886 : f32
    %cst_189 = arith.constant 2.000000e+00 : f32
    %917 = arith.mulf %916, %cst_189 : f32
    %918 = arith.mulf %917, %133 : f32
    %919 = arith.addf %915, %918 : f32
    %920 = arith.mulf %882, %882 : f32
    %921 = arith.mulf %920, %139 : f32
    %922 = arith.addf %919, %921 : f32
    %923 = arith.mulf %882, %883 : f32
    %cst_190 = arith.constant 2.000000e+00 : f32
    %924 = arith.mulf %923, %cst_190 : f32
    %925 = arith.mulf %924, %145 : f32
    %926 = arith.addf %922, %925 : f32
    %927 = arith.mulf %882, %884 : f32
    %cst_191 = arith.constant 2.000000e+00 : f32
    %928 = arith.mulf %927, %cst_191 : f32
    %929 = arith.mulf %928, %151 : f32
    %930 = arith.addf %926, %929 : f32
    %931 = arith.mulf %882, %885 : f32
    %cst_192 = arith.constant 2.000000e+00 : f32
    %932 = arith.mulf %931, %cst_192 : f32
    %933 = arith.mulf %932, %157 : f32
    %934 = arith.addf %930, %933 : f32
    %935 = arith.mulf %882, %886 : f32
    %cst_193 = arith.constant 2.000000e+00 : f32
    %936 = arith.mulf %935, %cst_193 : f32
    %937 = arith.mulf %936, %163 : f32
    %938 = arith.addf %934, %937 : f32
    %939 = arith.mulf %883, %883 : f32
    %940 = arith.mulf %939, %169 : f32
    %941 = arith.addf %938, %940 : f32
    %942 = arith.mulf %883, %884 : f32
    %cst_194 = arith.constant 2.000000e+00 : f32
    %943 = arith.mulf %942, %cst_194 : f32
    %944 = arith.mulf %943, %175 : f32
    %945 = arith.addf %941, %944 : f32
    %946 = arith.mulf %883, %885 : f32
    %cst_195 = arith.constant 2.000000e+00 : f32
    %947 = arith.mulf %946, %cst_195 : f32
    %948 = arith.mulf %947, %181 : f32
    %949 = arith.addf %945, %948 : f32
    %950 = arith.mulf %883, %886 : f32
    %cst_196 = arith.constant 2.000000e+00 : f32
    %951 = arith.mulf %950, %cst_196 : f32
    %952 = arith.mulf %951, %187 : f32
    %953 = arith.addf %949, %952 : f32
    %954 = arith.mulf %884, %884 : f32
    %955 = arith.mulf %954, %193 : f32
    %956 = arith.addf %953, %955 : f32
    %957 = arith.mulf %884, %885 : f32
    %cst_197 = arith.constant 2.000000e+00 : f32
    %958 = arith.mulf %957, %cst_197 : f32
    %959 = arith.mulf %958, %199 : f32
    %960 = arith.addf %956, %959 : f32
    %961 = arith.mulf %884, %886 : f32
    %cst_198 = arith.constant 2.000000e+00 : f32
    %962 = arith.mulf %961, %cst_198 : f32
    %963 = arith.mulf %962, %205 : f32
    %964 = arith.addf %960, %963 : f32
    %965 = arith.mulf %885, %885 : f32
    %966 = arith.mulf %965, %211 : f32
    %967 = arith.addf %964, %966 : f32
    %968 = arith.mulf %885, %886 : f32
    %cst_199 = arith.constant 2.000000e+00 : f32
    %969 = arith.mulf %968, %cst_199 : f32
    %970 = arith.mulf %969, %217 : f32
    %971 = arith.addf %967, %970 : f32
    %972 = arith.mulf %886, %886 : f32
    %973 = arith.mulf %972, %223 : f32
    %974 = arith.addf %971, %973 : f32
    %975 = arith.mulf %897, %897 : f32
    %976 = arith.subf %974, %975 : f32
    %cst_200 = arith.constant 9.99999974E-6 : f32
    %977 = arith.addf %976, %cst_200 : f32
    %978 = math.rsqrt %977 : f32
    %c5_201 = arith.constant 5 : index
    %979 = memref.load %arg6[%c5_201] : memref<8xf32, #tpu.memory_space<smem>>
    %980 = arith.mulf %978, %979 : f32
    %c5_202 = arith.constant 5 : index
    %981 = memref.load %arg7[%c5_202] : memref<8xf32, #tpu.memory_space<smem>>
    %982 = arith.mulf %897, %980 : f32
    %983 = arith.subf %981, %982 : f32
    %984 = arith.mulf %881, %980 : f32
    %985 = vector.broadcast %984 : f32 to vector<8x32xf32>
    %986 = arith.mulf %52, %985 : vector<8x32xf32>
    %987 = arith.mulf %882, %980 : f32
    %988 = vector.broadcast %987 : f32 to vector<8x32xf32>
    %989 = arith.mulf %24, %988 : vector<8x32xf32>
    %990 = arith.addf %986, %989 : vector<8x32xf32>
    %991 = arith.mulf %883, %980 : f32
    %992 = vector.broadcast %991 : f32 to vector<8x32xf32>
    %993 = arith.mulf %57, %992 : vector<8x32xf32>
    %994 = arith.addf %990, %993 : vector<8x32xf32>
    %995 = arith.mulf %884, %980 : f32
    %996 = vector.broadcast %995 : f32 to vector<8x32xf32>
    %997 = arith.mulf %62, %996 : vector<8x32xf32>
    %998 = arith.addf %994, %997 : vector<8x32xf32>
    %999 = arith.mulf %885, %980 : f32
    %1000 = vector.broadcast %999 : f32 to vector<8x32xf32>
    %1001 = arith.mulf %46, %1000 : vector<8x32xf32>
    %1002 = arith.addf %998, %1001 : vector<8x32xf32>
    %1003 = arith.mulf %886, %980 : f32
    %1004 = vector.broadcast %1003 : f32 to vector<8x32xf32>
    %1005 = arith.mulf %67, %1004 : vector<8x32xf32>
    %1006 = arith.addf %1002, %1005 : vector<8x32xf32>
    %1007 = vector.broadcast %983 : f32 to vector<8x32xf32>
    %1008 = arith.addf %1006, %1007 : vector<8x32xf32>
    %cst_203 = arith.constant 0.000000e+00 : f32
    %1009 = vector.broadcast %cst_203 : f32 to vector<8x32xf32>
    %1010 = arith.maximumf %1008, %1009 : vector<8x32xf32>
    %c0_204 = arith.constant 0 : index
    %c640 = arith.constant 640 : index
    %1011 = vector.load %arg11[%c0_204, %c640] : memref<8x1024xf32, #tpu.memory_space<vmem>>, vector<8x32xf32>
    tpu.vector_store %arg11[%c0_204, %c640], %1010 {strides = array<i32>} : memref<8x1024xf32, #tpu.memory_space<vmem>>, vector<8x32xf32>,
    %c36 = arith.constant 36 : index
    %1012 = memref.load %arg3[%c36] : memref<48xf32, #tpu.memory_space<smem>>
    %c37 = arith.constant 37 : index
    %1013 = memref.load %arg3[%c37] : memref<48xf32, #tpu.memory_space<smem>>
    %c38 = arith.constant 38 : index
    %1014 = memref.load %arg3[%c38] : memref<48xf32, #tpu.memory_space<smem>>
    %c39 = arith.constant 39 : index
    %1015 = memref.load %arg3[%c39] : memref<48xf32, #tpu.memory_space<smem>>
    %c40 = arith.constant 40 : index
    %1016 = memref.load %arg3[%c40] : memref<48xf32, #tpu.memory_space<smem>>
    %c41 = arith.constant 41 : index
    %1017 = memref.load %arg3[%c41] : memref<48xf32, #tpu.memory_space<smem>>
    %1018 = arith.mulf %1012, %72 : f32
    %1019 = arith.mulf %1013, %77 : f32
    %1020 = arith.addf %1018, %1019 : f32
    %1021 = arith.mulf %1014, %82 : f32
    %1022 = arith.addf %1020, %1021 : f32
    %1023 = arith.mulf %1015, %87 : f32
    %1024 = arith.addf %1022, %1023 : f32
    %1025 = arith.mulf %1016, %92 : f32
    %1026 = arith.addf %1024, %1025 : f32
    %1027 = arith.mulf %1017, %97 : f32
    %1028 = arith.addf %1026, %1027 : f32
    %1029 = arith.mulf %1012, %1012 : f32
    %1030 = arith.mulf %1029, %103 : f32
    %1031 = arith.mulf %1012, %1013 : f32
    %cst_205 = arith.constant 2.000000e+00 : f32
    %1032 = arith.mulf %1031, %cst_205 : f32
    %1033 = arith.mulf %1032, %109 : f32
    %1034 = arith.addf %1030, %1033 : f32
    %1035 = arith.mulf %1012, %1014 : f32
    %cst_206 = arith.constant 2.000000e+00 : f32
    %1036 = arith.mulf %1035, %cst_206 : f32
    %1037 = arith.mulf %1036, %115 : f32
    %1038 = arith.addf %1034, %1037 : f32
    %1039 = arith.mulf %1012, %1015 : f32
    %cst_207 = arith.constant 2.000000e+00 : f32
    %1040 = arith.mulf %1039, %cst_207 : f32
    %1041 = arith.mulf %1040, %121 : f32
    %1042 = arith.addf %1038, %1041 : f32
    %1043 = arith.mulf %1012, %1016 : f32
    %cst_208 = arith.constant 2.000000e+00 : f32
    %1044 = arith.mulf %1043, %cst_208 : f32
    %1045 = arith.mulf %1044, %127 : f32
    %1046 = arith.addf %1042, %1045 : f32
    %1047 = arith.mulf %1012, %1017 : f32
    %cst_209 = arith.constant 2.000000e+00 : f32
    %1048 = arith.mulf %1047, %cst_209 : f32
    %1049 = arith.mulf %1048, %133 : f32
    %1050 = arith.addf %1046, %1049 : f32
    %1051 = arith.mulf %1013, %1013 : f32
    %1052 = arith.mulf %1051, %139 : f32
    %1053 = arith.addf %1050, %1052 : f32
    %1054 = arith.mulf %1013, %1014 : f32
    %cst_210 = arith.constant 2.000000e+00 : f32
    %1055 = arith.mulf %1054, %cst_210 : f32
    %1056 = arith.mulf %1055, %145 : f32
    %1057 = arith.addf %1053, %1056 : f32
    %1058 = arith.mulf %1013, %1015 : f32
    %cst_211 = arith.constant 2.000000e+00 : f32
    %1059 = arith.mulf %1058, %cst_211 : f32
    %1060 = arith.mulf %1059, %151 : f32
    %1061 = arith.addf %1057, %1060 : f32
    %1062 = arith.mulf %1013, %1016 : f32
    %cst_212 = arith.constant 2.000000e+00 : f32
    %1063 = arith.mulf %1062, %cst_212 : f32
    %1064 = arith.mulf %1063, %157 : f32
    %1065 = arith.addf %1061, %1064 : f32
    %1066 = arith.mulf %1013, %1017 : f32
    %cst_213 = arith.constant 2.000000e+00 : f32
    %1067 = arith.mulf %1066, %cst_213 : f32
    %1068 = arith.mulf %1067, %163 : f32
    %1069 = arith.addf %1065, %1068 : f32
    %1070 = arith.mulf %1014, %1014 : f32
    %1071 = arith.mulf %1070, %169 : f32
    %1072 = arith.addf %1069, %1071 : f32
    %1073 = arith.mulf %1014, %1015 : f32
    %cst_214 = arith.constant 2.000000e+00 : f32
    %1074 = arith.mulf %1073, %cst_214 : f32
    %1075 = arith.mulf %1074, %175 : f32
    %1076 = arith.addf %1072, %1075 : f32
    %1077 = arith.mulf %1014, %1016 : f32
    %cst_215 = arith.constant 2.000000e+00 : f32
    %1078 = arith.mulf %1077, %cst_215 : f32
    %1079 = arith.mulf %1078, %181 : f32
    %1080 = arith.addf %1076, %1079 : f32
    %1081 = arith.mulf %1014, %1017 : f32
    %cst_216 = arith.constant 2.000000e+00 : f32
    %1082 = arith.mulf %1081, %cst_216 : f32
    %1083 = arith.mulf %1082, %187 : f32
    %1084 = arith.addf %1080, %1083 : f32
    %1085 = arith.mulf %1015, %1015 : f32
    %1086 = arith.mulf %1085, %193 : f32
    %1087 = arith.addf %1084, %1086 : f32
    %1088 = arith.mulf %1015, %1016 : f32
    %cst_217 = arith.constant 2.000000e+00 : f32
    %1089 = arith.mulf %1088, %cst_217 : f32
    %1090 = arith.mulf %1089, %199 : f32
    %1091 = arith.addf %1087, %1090 : f32
    %1092 = arith.mulf %1015, %1017 : f32
    %cst_218 = arith.constant 2.000000e+00 : f32
    %1093 = arith.mulf %1092, %cst_218 : f32
    %1094 = arith.mulf %1093, %205 : f32
    %1095 = arith.addf %1091, %1094 : f32
    %1096 = arith.mulf %1016, %1016 : f32
    %1097 = arith.mulf %1096, %211 : f32
    %1098 = arith.addf %1095, %1097 : f32
    %1099 = arith.mulf %1016, %1017 : f32
    %cst_219 = arith.constant 2.000000e+00 : f32
    %1100 = arith.mulf %1099, %cst_219 : f32
    %1101 = arith.mulf %1100, %217 : f32
    %1102 = arith.addf %1098, %1101 : f32
    %1103 = arith.mulf %1017, %1017 : f32
    %1104 = arith.mulf %1103, %223 : f32
    %1105 = arith.addf %1102, %1104 : f32
    %1106 = arith.mulf %1028, %1028 : f32
    %1107 = arith.subf %1105, %1106 : f32
    %cst_220 = arith.constant 9.99999974E-6 : f32
    %1108 = arith.addf %1107, %cst_220 : f32
    %1109 = math.rsqrt %1108 : f32
    %c6_221 = arith.constant 6 : index
    %1110 = memref.load %arg6[%c6_221] : memref<8xf32, #tpu.memory_space<smem>>
    %1111 = arith.mulf %1109, %1110 : f32
    %c6_222 = arith.constant 6 : index
    %1112 = memref.load %arg7[%c6_222] : memref<8xf32, #tpu.memory_space<smem>>
    %1113 = arith.mulf %1028, %1111 : f32
    %1114 = arith.subf %1112, %1113 : f32
    %1115 = arith.mulf %1012, %1111 : f32
    %1116 = vector.broadcast %1115 : f32 to vector<8x32xf32>
    %1117 = arith.mulf %52, %1116 : vector<8x32xf32>
    %1118 = arith.mulf %1013, %1111 : f32
    %1119 = vector.broadcast %1118 : f32 to vector<8x32xf32>
    %1120 = arith.mulf %24, %1119 : vector<8x32xf32>
    %1121 = arith.addf %1117, %1120 : vector<8x32xf32>
    %1122 = arith.mulf %1014, %1111 : f32
    %1123 = vector.broadcast %1122 : f32 to vector<8x32xf32>
    %1124 = arith.mulf %57, %1123 : vector<8x32xf32>
    %1125 = arith.addf %1121, %1124 : vector<8x32xf32>
    %1126 = arith.mulf %1015, %1111 : f32
    %1127 = vector.broadcast %1126 : f32 to vector<8x32xf32>
    %1128 = arith.mulf %62, %1127 : vector<8x32xf32>
    %1129 = arith.addf %1125, %1128 : vector<8x32xf32>
    %1130 = arith.mulf %1016, %1111 : f32
    %1131 = vector.broadcast %1130 : f32 to vector<8x32xf32>
    %1132 = arith.mulf %46, %1131 : vector<8x32xf32>
    %1133 = arith.addf %1129, %1132 : vector<8x32xf32>
    %1134 = arith.mulf %1017, %1111 : f32
    %1135 = vector.broadcast %1134 : f32 to vector<8x32xf32>
    %1136 = arith.mulf %67, %1135 : vector<8x32xf32>
    %1137 = arith.addf %1133, %1136 : vector<8x32xf32>
    %1138 = vector.broadcast %1114 : f32 to vector<8x32xf32>
    %1139 = arith.addf %1137, %1138 : vector<8x32xf32>
    %cst_223 = arith.constant 0.000000e+00 : f32
    %1140 = vector.broadcast %cst_223 : f32 to vector<8x32xf32>
    %1141 = arith.maximumf %1139, %1140 : vector<8x32xf32>
    %c0_224 = arith.constant 0 : index
    %c768 = arith.constant 768 : index
    %1142 = vector.load %arg11[%c0_224, %c768] : memref<8x1024xf32, #tpu.memory_space<vmem>>, vector<8x32xf32>
    tpu.vector_store %arg11[%c0_224, %c768], %1141 {strides = array<i32>} : memref<8x1024xf32, #tpu.memory_space<vmem>>, vector<8x32xf32>,
    %c42 = arith.constant 42 : index
    %1143 = memref.load %arg3[%c42] : memref<48xf32, #tpu.memory_space<smem>>
    %c43 = arith.constant 43 : index
    %1144 = memref.load %arg3[%c43] : memref<48xf32, #tpu.memory_space<smem>>
    %c44 = arith.constant 44 : index
    %1145 = memref.load %arg3[%c44] : memref<48xf32, #tpu.memory_space<smem>>
    %c45 = arith.constant 45 : index
    %1146 = memref.load %arg3[%c45] : memref<48xf32, #tpu.memory_space<smem>>
    %c46 = arith.constant 46 : index
    %1147 = memref.load %arg3[%c46] : memref<48xf32, #tpu.memory_space<smem>>
    %c47 = arith.constant 47 : index
    %1148 = memref.load %arg3[%c47] : memref<48xf32, #tpu.memory_space<smem>>
    %1149 = arith.mulf %1143, %72 : f32
    %1150 = arith.mulf %1144, %77 : f32
    %1151 = arith.addf %1149, %1150 : f32
    %1152 = arith.mulf %1145, %82 : f32
    %1153 = arith.addf %1151, %1152 : f32
    %1154 = arith.mulf %1146, %87 : f32
    %1155 = arith.addf %1153, %1154 : f32
    %1156 = arith.mulf %1147, %92 : f32
    %1157 = arith.addf %1155, %1156 : f32
    %1158 = arith.mulf %1148, %97 : f32
    %1159 = arith.addf %1157, %1158 : f32
    %1160 = arith.mulf %1143, %1143 : f32
    %1161 = arith.mulf %1160, %103 : f32
    %1162 = arith.mulf %1143, %1144 : f32
    %cst_225 = arith.constant 2.000000e+00 : f32
    %1163 = arith.mulf %1162, %cst_225 : f32
    %1164 = arith.mulf %1163, %109 : f32
    %1165 = arith.addf %1161, %1164 : f32
    %1166 = arith.mulf %1143, %1145 : f32
    %cst_226 = arith.constant 2.000000e+00 : f32
    %1167 = arith.mulf %1166, %cst_226 : f32
    %1168 = arith.mulf %1167, %115 : f32
    %1169 = arith.addf %1165, %1168 : f32
    %1170 = arith.mulf %1143, %1146 : f32
    %cst_227 = arith.constant 2.000000e+00 : f32
    %1171 = arith.mulf %1170, %cst_227 : f32
    %1172 = arith.mulf %1171, %121 : f32
    %1173 = arith.addf %1169, %1172 : f32
    %1174 = arith.mulf %1143, %1147 : f32
    %cst_228 = arith.constant 2.000000e+00 : f32
    %1175 = arith.mulf %1174, %cst_228 : f32
    %1176 = arith.mulf %1175, %127 : f32
    %1177 = arith.addf %1173, %1176 : f32
    %1178 = arith.mulf %1143, %1148 : f32
    %cst_229 = arith.constant 2.000000e+00 : f32
    %1179 = arith.mulf %1178, %cst_229 : f32
    %1180 = arith.mulf %1179, %133 : f32
    %1181 = arith.addf %1177, %1180 : f32
    %1182 = arith.mulf %1144, %1144 : f32
    %1183 = arith.mulf %1182, %139 : f32
    %1184 = arith.addf %1181, %1183 : f32
    %1185 = arith.mulf %1144, %1145 : f32
    %cst_230 = arith.constant 2.000000e+00 : f32
    %1186 = arith.mulf %1185, %cst_230 : f32
    %1187 = arith.mulf %1186, %145 : f32
    %1188 = arith.addf %1184, %1187 : f32
    %1189 = arith.mulf %1144, %1146 : f32
    %cst_231 = arith.constant 2.000000e+00 : f32
    %1190 = arith.mulf %1189, %cst_231 : f32
    %1191 = arith.mulf %1190, %151 : f32
    %1192 = arith.addf %1188, %1191 : f32
    %1193 = arith.mulf %1144, %1147 : f32
    %cst_232 = arith.constant 2.000000e+00 : f32
    %1194 = arith.mulf %1193, %cst_232 : f32
    %1195 = arith.mulf %1194, %157 : f32
    %1196 = arith.addf %1192, %1195 : f32
    %1197 = arith.mulf %1144, %1148 : f32
    %cst_233 = arith.constant 2.000000e+00 : f32
    %1198 = arith.mulf %1197, %cst_233 : f32
    %1199 = arith.mulf %1198, %163 : f32
    %1200 = arith.addf %1196, %1199 : f32
    %1201 = arith.mulf %1145, %1145 : f32
    %1202 = arith.mulf %1201, %169 : f32
    %1203 = arith.addf %1200, %1202 : f32
    %1204 = arith.mulf %1145, %1146 : f32
    %cst_234 = arith.constant 2.000000e+00 : f32
    %1205 = arith.mulf %1204, %cst_234 : f32
    %1206 = arith.mulf %1205, %175 : f32
    %1207 = arith.addf %1203, %1206 : f32
    %1208 = arith.mulf %1145, %1147 : f32
    %cst_235 = arith.constant 2.000000e+00 : f32
    %1209 = arith.mulf %1208, %cst_235 : f32
    %1210 = arith.mulf %1209, %181 : f32
    %1211 = arith.addf %1207, %1210 : f32
    %1212 = arith.mulf %1145, %1148 : f32
    %cst_236 = arith.constant 2.000000e+00 : f32
    %1213 = arith.mulf %1212, %cst_236 : f32
    %1214 = arith.mulf %1213, %187 : f32
    %1215 = arith.addf %1211, %1214 : f32
    %1216 = arith.mulf %1146, %1146 : f32
    %1217 = arith.mulf %1216, %193 : f32
    %1218 = arith.addf %1215, %1217 : f32
    %1219 = arith.mulf %1146, %1147 : f32
    %cst_237 = arith.constant 2.000000e+00 : f32
    %1220 = arith.mulf %1219, %cst_237 : f32
    %1221 = arith.mulf %1220, %199 : f32
    %1222 = arith.addf %1218, %1221 : f32
    %1223 = arith.mulf %1146, %1148 : f32
    %cst_238 = arith.constant 2.000000e+00 : f32
    %1224 = arith.mulf %1223, %cst_238 : f32
    %1225 = arith.mulf %1224, %205 : f32
    %1226 = arith.addf %1222, %1225 : f32
    %1227 = arith.mulf %1147, %1147 : f32
    %1228 = arith.mulf %1227, %211 : f32
    %1229 = arith.addf %1226, %1228 : f32
    %1230 = arith.mulf %1147, %1148 : f32
    %cst_239 = arith.constant 2.000000e+00 : f32
    %1231 = arith.mulf %1230, %cst_239 : f32
    %1232 = arith.mulf %1231, %217 : f32
    %1233 = arith.addf %1229, %1232 : f32
    %1234 = arith.mulf %1148, %1148 : f32
    %1235 = arith.mulf %1234, %223 : f32
    %1236 = arith.addf %1233, %1235 : f32
    %1237 = arith.mulf %1159, %1159 : f32
    %1238 = arith.subf %1236, %1237 : f32
    %cst_240 = arith.constant 9.99999974E-6 : f32
    %1239 = arith.addf %1238, %cst_240 : f32
    %1240 = math.rsqrt %1239 : f32
    %c7_241 = arith.constant 7 : index
    %1241 = memref.load %arg6[%c7_241] : memref<8xf32, #tpu.memory_space<smem>>
    %1242 = arith.mulf %1240, %1241 : f32
    %c7_242 = arith.constant 7 : index
    %1243 = memref.load %arg7[%c7_242] : memref<8xf32, #tpu.memory_space<smem>>
    %1244 = arith.mulf %1159, %1242 : f32
    %1245 = arith.subf %1243, %1244 : f32
    %1246 = arith.mulf %1143, %1242 : f32
    %1247 = vector.broadcast %1246 : f32 to vector<8x32xf32>
    %1248 = arith.mulf %52, %1247 : vector<8x32xf32>
    %1249 = arith.mulf %1144, %1242 : f32
    %1250 = vector.broadcast %1249 : f32 to vector<8x32xf32>
    %1251 = arith.mulf %24, %1250 : vector<8x32xf32>
    %1252 = arith.addf %1248, %1251 : vector<8x32xf32>
    %1253 = arith.mulf %1145, %1242 : f32
    %1254 = vector.broadcast %1253 : f32 to vector<8x32xf32>
    %1255 = arith.mulf %57, %1254 : vector<8x32xf32>
    %1256 = arith.addf %1252, %1255 : vector<8x32xf32>
    %1257 = arith.mulf %1146, %1242 : f32
    %1258 = vector.broadcast %1257 : f32 to vector<8x32xf32>
    %1259 = arith.mulf %62, %1258 : vector<8x32xf32>
    %1260 = arith.addf %1256, %1259 : vector<8x32xf32>
    %1261 = arith.mulf %1147, %1242 : f32
    %1262 = vector.broadcast %1261 : f32 to vector<8x32xf32>
    %1263 = arith.mulf %46, %1262 : vector<8x32xf32>
    %1264 = arith.addf %1260, %1263 : vector<8x32xf32>
    %1265 = arith.mulf %1148, %1242 : f32
    %1266 = vector.broadcast %1265 : f32 to vector<8x32xf32>
    %1267 = arith.mulf %67, %1266 : vector<8x32xf32>
    %1268 = arith.addf %1264, %1267 : vector<8x32xf32>
    %1269 = vector.broadcast %1245 : f32 to vector<8x32xf32>
    %1270 = arith.addf %1268, %1269 : vector<8x32xf32>
    %cst_243 = arith.constant 0.000000e+00 : f32
    %1271 = vector.broadcast %cst_243 : f32 to vector<8x32xf32>
    %1272 = arith.maximumf %1270, %1271 : vector<8x32xf32>
    %c0_244 = arith.constant 0 : index
    %c896 = arith.constant 896 : index
    %1273 = vector.load %arg11[%c0_244, %c896] : memref<8x1024xf32, #tpu.memory_space<vmem>>, vector<8x32xf32>
    tpu.vector_store %arg11[%c0_244, %c896], %1272 {strides = array<i32>} : memref<8x1024xf32, #tpu.memory_space<vmem>>, vector<8x32xf32>,
    %c0_245 = arith.constant 0 : index
    %c0_246 = arith.constant 0 : index
    %1274 = vector.load %arg11[%c0_245, %c0_246] : memref<8x1024xf32, #tpu.memory_space<vmem>>, vector<8x1024xf32>
    %c0_247 = arith.constant 0 : index
    %c0_248 = arith.constant 0 : index
    %1275 = vector.load %arg2[%c0_247, %c0_248] : memref<1024x32xf32, #tpu.memory_space<vmem>>, vector<1024x32xf32>
    %cst_249 = arith.constant dense<0.000000e+00> : vector<8x32xf32>
    %1276 = tpu.matmul %1274, %1275, %cst_249 {dimension_numbers = #tpu.dot_dimension_numbers<[1], [0], [0], [1], [0, 0, 1, 1], [], []>} : vector<8x1024xf32>, vector<1024x32xf32>, vector<8x32xf32> -> vector<8x32xf32>
    %cst_250 = arith.constant dense<0.000000e+00> : vector<32xf32>
    %1277 = vector.multi_reduction <add>, %1276, %cst_250 [0] : vector<8x32xf32> to vector<32xf32>
    %1278 = vector.shape_cast %1277 : vector<32xf32> to vector<1x32xf32>
    %cst_251 = arith.constant 8.000000e+00 : f32
    %1279 = vector.broadcast %cst_251 : f32 to vector<1x32xf32>
    %1280 = arith.divf %1278, %1279 : vector<1x32xf32>
    %1281 = vector.broadcast %1280 : vector<1x32xf32> to vector<8x32xf32>
    %1282 = arith.subf %1276, %1281 : vector<8x32xf32>
    %1283 = arith.mulf %1282, %1282 : vector<8x32xf32>
    %cst_252 = arith.constant dense<0.000000e+00> : vector<32xf32>
    %1284 = vector.multi_reduction <add>, %1283, %cst_252 [0] : vector<8x32xf32> to vector<32xf32>
    %1285 = vector.shape_cast %1284 : vector<32xf32> to vector<1x32xf32>
    %cst_253 = arith.constant 8.000000e+00 : f32
    %1286 = vector.broadcast %cst_253 : f32 to vector<1x32xf32>
    %1287 = arith.divf %1285, %1286 : vector<1x32xf32>
    %cst_254 = arith.constant 9.99999974E-6 : f32
    %1288 = vector.broadcast %cst_254 : f32 to vector<1x32xf32>
    %1289 = arith.addf %1287, %1288 : vector<1x32xf32>
    %1290 = math.rsqrt %1289 : vector<1x32xf32>
    %1291 = vector.broadcast %1290 : vector<1x32xf32> to vector<8x32xf32>
    %1292 = arith.mulf %1282, %1291 : vector<8x32xf32>
    %c0_255 = arith.constant 0 : index
    %c0_256 = arith.constant 0 : index
    %1293 = vector.load %arg8[%c0_255, %c0_256] : memref<1x32xf32, #tpu.memory_space<vmem>>, vector<1x32xf32>
    %1294 = vector.broadcast %1293 : vector<1x32xf32> to vector<8x32xf32>
    %1295 = arith.mulf %1292, %1294 : vector<8x32xf32>
    %c0_257 = arith.constant 0 : index
    %c0_258 = arith.constant 0 : index
    %1296 = vector.load %arg9[%c0_257, %c0_258] : memref<1x32xf32, #tpu.memory_space<vmem>>, vector<1x32xf32>
    %1297 = vector.broadcast %1296 : vector<1x32xf32> to vector<8x32xf32>
    %1298 = arith.addf %1295, %1297 : vector<8x32xf32>
    %cst_259 = arith.constant 0.000000e+00 : f32
    %1299 = vector.broadcast %cst_259 : f32 to vector<8x32xf32>
    %1300 = arith.maximumf %1298, %1299 : vector<8x32xf32>
    %c0_260 = arith.constant 0 : index
    %c0_261 = arith.constant 0 : index
    %1301 = vector.load %arg10[%c0_260, %c0_261] : memref<8x32xf32, #tpu.memory_space<vmem>>, vector<8x32xf32>
    tpu.vector_store %arg10[%c0_260, %c0_261], %1300 {strides = array<i32>} : memref<8x32xf32, #tpu.memory_space<vmem>>, vector<8x32xf32>,
    return
  }
}

</mosaic_0001>

<llo_original>
// kernel: tpu_custom_call.1
$region0: #{tpu_custom_call.1}
  #allocation0 [shape = 'u32[]', space=smem, size = 0x4, offset = 0x4, fixed_abs, tag = 'smem constant byte address 0x4 - core index']
  #allocation1 [shape = 'u32[72,128]{1,0:T(1,128)}', space=vmem, size = 0x9000, scoped, tag = 'internal scratch']
  #allocation2 [shape = 'f32[8,1024]{1,0:T(8,128)}', space=vmem, size = 0x8000, scoped, tag = 'scratch operand']
  %s0 = inlined_call_operand.vmem [shape: f32[8,32], index: 0, kind: input, shape index: {}]
  %s1 = inlined_call_operand.vmem [shape: f32[8,32], index: 1, kind: input, shape index: {}]
  %s2 = inlined_call_operand.vmem [shape: f32[1024,32], index: 2, kind: input, shape index: {}]
  %s3 = inlined_call_operand.vmem [shape: f32[48], index: 3, kind: input, shape index: {}]
  %s4 = inlined_call_operand.vmem [shape: f32[2], index: 4, kind: input, shape index: {}]
  %s5 = inlined_call_operand.vmem [shape: f32[2], index: 5, kind: input, shape index: {}]
  %s6 = inlined_call_operand.vmem [shape: f32[8], index: 6, kind: input, shape index: {}]
  %s7 = inlined_call_operand.vmem [shape: f32[8], index: 7, kind: input, shape index: {}]
  %s8 = inlined_call_operand.vmem [shape: f32[1,32], index: 8, kind: input, shape index: {}]
  %s9 = inlined_call_operand.vmem [shape: f32[1,32], index: 9, kind: input, shape index: {}]
  %s10 = inlined_call_operand.hbm [shape: f32[8,32], index: 10, kind: output, shape index: {}]
  %s11 = sld [smem:[#allocation0]]
  $region70: #{tpu_custom_call.1} parent=0
    _
  %s13 = ssub.s32 1, %s11
  %s14 = scalar_select 0, %s13, %s11
  $region1: #{tpu_custom_call.1} parent=0
    #allocation3 [shape = 'u8[512]{0}', space=smem, size = 0x200, scoped, tag = 'input window, operand 3, single buffered']
    #allocation4 [shape = 's32[1]{0}', space=sflag, size = 0x4, scoped, tag = 'scoped memory for tpu_custom_call.1']
    #allocation5 [shape = 's32[1]{0}', space=sflag, size = 0x4, scoped, tag = 'scoped memory for tpu_custom_call.1']
    #allocation6 [shape = 'u8[512]{0}', space=smem, size = 0x200, scoped, tag = 'input window, operand 4, single buffered']
    #allocation7 [shape = 's32[1]{0}', space=sflag, size = 0x4, scoped, tag = 'scoped memory for tpu_custom_call.1']
    #allocation8 [shape = 'u8[512]{0}', space=smem, size = 0x200, scoped, tag = 'input window, operand 5, single buffered']
    #allocation9 [shape = 'u8[512]{0}', space=smem, size = 0x200, scoped, tag = 'input window, operand 6, single buffered']
    #allocation10 [shape = 's32[1]{0}', space=sflag, size = 0x4, scoped, tag = 'scoped memory for tpu_custom_call.1']
    #allocation11 [shape = 'u8[512]{0}', space=smem, size = 0x200, scoped, tag = 'input window, operand 7, single buffered']
    #allocation12 [shape = 'u8[4096]{0}', space=vmem, size = 0x1000, scoped, tag = 'output window, operand 0, single buffered']
    %15 = vsyncpa [#allocation5], 0
    %16 = vsyncpa [#allocation7], 0
    %17 = vsyncpa [#allocation10], 0
    %18 = vsyncpa [#allocation4], 0
    // Predicated region
    $region2: #{tpu_custom_call.1} parent=1 // pred_check
      _
    $region3: #{tpu_custom_call.1} parent=1 // pred_check_branch
      %20 = sbr.rel (0) target = $region5
    $region4: #{tpu_custom_call.1} parent=1 // pred_region
      _
    $region5: #{tpu_custom_call.1} parent=1 // pred_fallthru
      _
    // Predicated region
    $region6: #{tpu_custom_call.1} parent=1 // pred_check
      _
    $region7: #{tpu_custom_call.1} parent=1 // pred_check_branch
      %22 = sbr.rel (0) target = $region9
    $region8: #{tpu_custom_call.1} parent=1 // pred_region
      _
    $region9: #{tpu_custom_call.1} parent=1 // pred_fallthru
      _
    // Predicated region
    $region10: #{tpu_custom_call.1} parent=1 // pred_check
      _
    $region11: #{tpu_custom_call.1} parent=1 // pred_check_branch
      %24 = sbr.rel (0) target = $region13
    $region12: #{tpu_custom_call.1} parent=1 // pred_region
      _
    $region13: #{tpu_custom_call.1} parent=1 // pred_fallthru
      _
    // Predicated region
    $region14: #{tpu_custom_call.1} parent=1 // pred_check
      _
    $region15: #{tpu_custom_call.1} parent=1 // pred_check_branch
      %26 = sbr.rel (0) target = $region17
    $region16: #{tpu_custom_call.1} parent=1 // pred_region
      %28 = vsyncadd [#allocation5], 0
      %s30 = sshll.u32 %s3, 4
      %s31 = int_to_ptr.vmem [resolvable:$true] %s30
      %33 = dma.vmem_to_smem %s31, 16, [#allocation3], [#allocation5]
    $region17: #{tpu_custom_call.1} parent=1 // pred_fallthru
      _
    // Predicated region
    $region18: #{tpu_custom_call.1} parent=1 // pred_check
      _
    $region19: #{tpu_custom_call.1} parent=1 // pred_check_branch
      %35 = sbr.rel (0) target = $region21
    $region20: #{tpu_custom_call.1} parent=1 // pred_region
      %37 = vsyncadd [#allocation7], 0
      %s39 = sshll.u32 %s4, 4
      %s40 = int_to_ptr.vmem [resolvable:$true] %s39
      %42 = dma.vmem_to_smem %s40, 16, [#allocation6], [#allocation7]
    $region21: #{tpu_custom_call.1} parent=1 // pred_fallthru
      _
    // Predicated region
    $region22: #{tpu_custom_call.1} parent=1 // pred_check
      _
    $region23: #{tpu_custom_call.1} parent=1 // pred_check_branch
      %44 = sbr.rel (0) target = $region25
    $region24: #{tpu_custom_call.1} parent=1 // pred_region
      %46 = vsyncadd [#allocation7], 0
      %s48 = sshll.u32 %s5, 4
      %s49 = int_to_ptr.vmem [resolvable:$true] %s48
      %51 = dma.vmem_to_smem %s49, 16, [#allocation8], [#allocation7]
    $region25: #{tpu_custom_call.1} parent=1 // pred_fallthru
      _
    // Predicated region
    $region26: #{tpu_custom_call.1} parent=1 // pred_check
      _
    $region27: #{tpu_custom_call.1} parent=1 // pred_check_branch
      %53 = sbr.rel (0) target = $region29
    $region28: #{tpu_custom_call.1} parent=1 // pred_region
      %55 = vsyncadd [#allocation10], 0
      %s57 = sshll.u32 %s6, 4
      %s58 = int_to_ptr.vmem [resolvable:$true] %s57
      %60 = dma.vmem_to_smem %s58, 16, [#allocation9], [#allocation10]
    $region29: #{tpu_custom_call.1} parent=1 // pred_fallthru
      _
    // Predicated region
    $region30: #{tpu_custom_call.1} parent=1 // pred_check
      _
    $region31: #{tpu_custom_call.1} parent=1 // pred_check_branch
      %62 = sbr.rel (0) target = $region33
    $region32: #{tpu_custom_call.1} parent=1 // pred_region
      %64 = vsyncadd [#allocation10], 0
      %s66 = sshll.u32 %s7, 4
      %s67 = int_to_ptr.vmem [resolvable:$true] %s66
      %69 = dma.vmem_to_smem %s67, 16, [#allocation11], [#allocation10]
    $region33: #{tpu_custom_call.1} parent=1 // pred_fallthru
      _
    // Predicated region
    $region34: #{tpu_custom_call.1} parent=1 // pred_check
      _
    $region35: #{tpu_custom_call.1} parent=1 // pred_check_branch
      %71 = sbr.rel (0) target = $region37
    $region36: #{tpu_custom_call.1} parent=1 // pred_region
      _
    $region37: #{tpu_custom_call.1} parent=1 // pred_fallthru
      _
    // Predicated region
    $region38: #{tpu_custom_call.1} parent=1 // pred_check
      _
    $region39: #{tpu_custom_call.1} parent=1 // pred_check_branch
      %73 = sbr.rel (0) target = $region41
    $region40: #{tpu_custom_call.1} parent=1 // pred_region
      _
    $region41: #{tpu_custom_call.1} parent=1 // pred_fallthru
      _
    // Predicated region
    $region42: #{tpu_custom_call.1} parent=1 // pred_check
      _
    $region43: #{tpu_custom_call.1} parent=1 // pred_check_branch
      %75 = sbr.rel (0) target = $region45
    $region44: #{tpu_custom_call.1} parent=1 // pred_region
      %77 = dma.done [#allocation5], 16
    $region45: #{tpu_custom_call.1} parent=1 // pred_fallthru
      _
    // Predicated region
    $region46: #{tpu_custom_call.1} parent=1 // pred_check
      _
    $region47: #{tpu_custom_call.1} parent=1 // pred_check_branch
      %79 = sbr.rel (0) target = $region49
    $region48: #{tpu_custom_call.1} parent=1 // pred_region
      %81 = dma.done [#allocation7], 16
    $region49: #{tpu_custom_call.1} parent=1 // pred_fallthru
      _
    // Predicated region
    $region50: #{tpu_custom_call.1} parent=1 // pred_check
      _
    $region51: #{tpu_custom_call.1} parent=1 // pred_check_branch
      %83 = sbr.rel (0) target = $region53
    $region52: #{tpu_custom_call.1} parent=1 // pred_region
      %85 = dma.done [#allocation7], 16
    $region53: #{tpu_custom_call.1} parent=1 // pred_fallthru
      _
    // Predicated region
    $region54: #{tpu_custom_call.1} parent=1 // pred_check
      _
    $region55: #{tpu_custom_call.1} parent=1 // pred_check_branch
      %87 = sbr.rel (0) target = $region57
    $region56: #{tpu_custom_call.1} parent=1 // pred_region
      %89 = dma.done [#allocation10], 16
    $region57: #{tpu_custom_call.1} parent=1 // pred_fallthru
      _
    // Predicated region
    $region58: #{tpu_custom_call.1} parent=1 // pred_check
      _
    $region59: #{tpu_custom_call.1} parent=1 // pred_check_branch
      %91 = sbr.rel (0) target = $region61
    $region60: #{tpu_custom_call.1} parent=1 // pred_region
      %93 = dma.done [#allocation10], 16
    $region61: #{tpu_custom_call.1} parent=1 // pred_fallthru
      _
    %94 = sfence
    %v95 = vld [vmem:[%s0] sm:$0xff]
    %v96 = vtanh.pop %v95
    %v97 = vld [vmem:[%s1] sm:$0xff]
    %s98 = sld [smem:[#allocation6]]
    %s99 = sld [smem:[#allocation8]]
    %vm100 = vcmask 261120
    %v101 = vsel %vm100, %v96, 0.0
    %102 = vadd.xlane.f32.xlu0 %v101
    %v103 = vpop.xlane.xlu0 %102
    %v104 = vrot.slane %v103, 4
    %v105 = vadd.f32 %v103, %v104
    %v106 = vrot.slane %v105, 2
    %v107 = vadd.f32 %v105, %v106
    %v108 = vrot.slane %v107, 1
    %v109 = vadd.f32 %v107, %v108
    %s110 = vtos %v109
    %v111 = vrcp.pop 256.0
    %v112 = vmul.f32 256.0, %v111
    %v113 = vsub.f32 1.0, %v112
    %v114 = vmul.f32 %v111, %v113
    %v115 = vadd.f32 %v111, %v114
    %vm116 = vweird.f32 %v111
    %v117 = vsel %vm116, %v111, %v115
    %s118 = vtos %v117
    %s119 = smul.f32 %s110, %s118
    %v120 = vstv %s119
    %v121 = vsub.f32 %v96, %v120
    %v122 = vmul.f32 %v121, %v121
    %v123 = vsel %vm100, %v122, 0.0
    %124 = vadd.xlane.f32.xlu0 %v123
    %v125 = vpop.xlane.xlu0 %124
    %v126 = vrot.slane %v125, 4
    %v127 = vadd.f32 %v125, %v126
    %v128 = vrot.slane %v127, 2
    %v129 = vadd.f32 %v127, %v128
    %v130 = vrot.slane %v129, 1
    %v131 = vadd.f32 %v129, %v130
    %s132 = vtos %v131
    %v133 = vrcp.pop 256.0
    %v134 = vmul.f32 256.0, %v133
    %v135 = vsub.f32 1.0, %v134
    %v136 = vmul.f32 %v133, %v135
    %v137 = vadd.f32 %v133, %v136
    %vm138 = vweird.f32 %v133
    %v139 = vsel %vm138, %v133, %v137
    %s140 = vtos %v139
    %s141 = smul.f32 %s132, %s140
    %s142 = sadd.f32 %s141, 1e-05
    %v143 = vstv %s142
    %v144 = vrsqrt.pop %v143
    %v145 = vmul.f32 %v144, %v143
    %v146 = vmul.f32 %v145, %v144
    %v147 = vmul.f32 0.5, %v146
    %v148 = vsub.f32 1.5, %v147
    %v149 = vmul.f32 %v144, %v148
    %vm150 = vweird.f32 %v143
    %vm151 = vweird.f32 %v144
    %vm152 = vmor %vm150, %vm151
    %v153 = vsel %vm152, %v144, %v149
    %s154 = vtos %v153
    %s155 = smul.f32 %s154, %s98
    %v156 = vstv %s155
    %v157 = vmul.f32 %v121, %v156
    %v158 = vstv %s99
    %v159 = vadd.f32 %v157, %v158
    %s160 = sld [smem:[#allocation6 + $0x1]]
    %s161 = sld [smem:[#allocation8 + $0x1]]
    %v162 = vsel %vm100, %v97, 0.0
    %163 = vadd.xlane.f32.xlu0 %v162
    %v164 = vpop.xlane.xlu0 %163
    %v165 = vrot.slane %v164, 4
    %v166 = vadd.f32 %v164, %v165
    %v167 = vrot.slane %v166, 2
    %v168 = vadd.f32 %v166, %v167
    %v169 = vrot.slane %v168, 1
    %v170 = vadd.f32 %v168, %v169
    %s171 = vtos %v170
    %v172 = vrcp.pop 256.0
    %v173 = vmul.f32 256.0, %v172
    %v174 = vsub.f32 1.0, %v173
    %v175 = vmul.f32 %v172, %v174
    %v176 = vadd.f32 %v172, %v175
    %vm177 = vweird.f32 %v172
    %v178 = vsel %vm177, %v172, %v176
    %s179 = vtos %v178
    %s180 = smul.f32 %s171, %s179
    %v181 = vstv %s180
    %v182 = vsub.f32 %v97, %v181
    %v183 = vmul.f32 %v182, %v182
    %v184 = vsel %vm100, %v183, 0.0
    %185 = vadd.xlane.f32.xlu0 %v184
    %v186 = vpop.xlane.xlu0 %185
    %v187 = vrot.slane %v186, 4
    %v188 = vadd.f32 %v186, %v187
    %v189 = vrot.slane %v188, 2
    %v190 = vadd.f32 %v188, %v189
    %v191 = vrot.slane %v190, 1
    %v192 = vadd.f32 %v190, %v191
    %s193 = vtos %v192
    %v194 = vrcp.pop 256.0
    %v195 = vmul.f32 256.0, %v194
    %v196 = vsub.f32 1.0, %v195
    %v197 = vmul.f32 %v194, %v196
    %v198 = vadd.f32 %v194, %v197
    %vm199 = vweird.f32 %v194
    %v200 = vsel %vm199, %v194, %v198
    %s201 = vtos %v200
    %s202 = smul.f32 %s193, %s201
    %s203 = sadd.f32 %s202, 1e-05
    %v204 = vstv %s203
    %v205 = vrsqrt.pop %v204
    %v206 = vmul.f32 %v205, %v204
    %v207 = vmul.f32 %v206, %v205
    %v208 = vmul.f32 0.5, %v207
    %v209 = vsub.f32 1.5, %v208
    %v210 = vmul.f32 %v205, %v209
    %vm211 = vweird.f32 %v204
    %vm212 = vweird.f32 %v205
    %vm213 = vmor %vm211, %vm212
    %v214 = vsel %vm213, %v205, %v210
    %s215 = vtos %v214
    %s216 = smul.f32 %s215, %s160
    %v217 = vstv %s216
    %v218 = vmul.f32 %v182, %v217
    %v219 = vstv %s161
    %v220 = vadd.f32 %v218, %v219
    %v221 = vlaneseq
    %v222 = vand.u32 %v221, 127
    %vm223 = vcmp.lt.s32.totalorder %v222, 1
    %vm224 = vcmask 1047808
    %225 = vrot.lane.b32.xlu0 %v159, 32
    %v226 = vpop.permute.xlu0 %225
    %v227 = vsel %vm224, %v226, %v159
    %228 = vrot.lane.b32.xlu0 %v227, 32
    %v229 = vpop.permute.xlu0 %228
    %v230 = vsel %vm224, %v229, %v159
    %232 = vrot.lane.b32.xlu0 %v230, 97
    %v233 = vpop.permute.xlu0 %232
    %v235 = vsel %vm223, 0.0, %v233
    %vm236 = vcmp.ge.s32.totalorder %v222, 31
    %237 = vrot.lane.b32.xlu0 %v230, 127
    %v238 = vpop.permute.xlu0 %237
    %v240 = vsel %vm236, 0.0, %v238
    %241 = vrot.lane.b32.xlu0 %v220, 32
    %v242 = vpop.permute.xlu0 %241
    %v243 = vsel %vm224, %v242, %v220
    %244 = vrot.lane.b32.xlu0 %v243, 32
    %v245 = vpop.permute.xlu0 %244
    %v246 = vsel %vm224, %v245, %v220
    %248 = vrot.lane.b32.xlu0 %v246, 97
    %v249 = vpop.permute.xlu0 %248
    %v251 = vsel %vm223, 0.0, %v249
    %252 = vrot.lane.b32.xlu0 %v246, 127
    %v253 = vpop.permute.xlu0 %252
    %v255 = vsel %vm236, 0.0, %v253
    %v256 = vsel %vm100, %v235, 0.0
    %257 = vadd.xlane.f32.xlu0 %v256
    %v258 = vpop.xlane.xlu0 %257
    %v259 = vrot.slane %v258, 4
    %v260 = vadd.f32 %v258, %v259
    %v261 = vrot.slane %v260, 2
    %v262 = vadd.f32 %v260, %v261
    %v263 = vrot.slane %v262, 1
    %v264 = vadd.f32 %v262, %v263
    %s265 = vtos %v264
    %v266 = vrcp.pop 256.0
    %v267 = vmul.f32 256.0, %v266
    %v268 = vsub.f32 1.0, %v267
    %v269 = vmul.f32 %v266, %v268
    %v270 = vadd.f32 %v266, %v269
    %vm271 = vweird.f32 %v266
    %v272 = vsel %vm271, %v266, %v270
    %s273 = vtos %v272
    %s274 = smul.f32 %s265, %s273
    %v275 = vsel %vm100, %v159, 0.0
    %276 = vadd.xlane.f32.xlu0 %v275
    %v277 = vpop.xlane.xlu0 %276
    %v278 = vrot.slane %v277, 4
    %v279 = vadd.f32 %v277, %v278
    %v280 = vrot.slane %v279, 2
    %v281 = vadd.f32 %v279, %v280
    %v282 = vrot.slane %v281, 1
    %v283 = vadd.f32 %v281, %v282
    %s284 = vtos %v283
    %v285 = vrcp.pop 256.0
    %v286 = vmul.f32 256.0, %v285
    %v287 = vsub.f32 1.0, %v286
    %v288 = vmul.f32 %v285, %v287
    %v289 = vadd.f32 %v285, %v288
    %vm290 = vweird.f32 %v285
    %v291 = vsel %vm290, %v285, %v289
    %s292 = vtos %v291
    %s293 = smul.f32 %s284, %s292
    %v294 = vsel %vm100, %v240, 0.0
    %295 = vadd.xlane.f32.xlu0 %v294
    %v296 = vpop.xlane.xlu0 %295
    %v297 = vrot.slane %v296, 4
    %v298 = vadd.f32 %v296, %v297
    %v299 = vrot.slane %v298, 2
    %v300 = vadd.f32 %v298, %v299
    %v301 = vrot.slane %v300, 1
    %v302 = vadd.f32 %v300, %v301
    %s303 = vtos %v302
    %v304 = vrcp.pop 256.0
    %v305 = vmul.f32 256.0, %v304
    %v306 = vsub.f32 1.0, %v305
    %v307 = vmul.f32 %v304, %v306
    %v308 = vadd.f32 %v304, %v307
    %vm309 = vweird.f32 %v304
    %v310 = vsel %vm309, %v304, %v308
    %s311 = vtos %v310
    %s312 = smul.f32 %s303, %s311
    %v313 = vsel %vm100, %v251, 0.0
    %314 = vadd.xlane.f32.xlu0 %v313
    %v315 = vpop.xlane.xlu0 %314
    %v316 = vrot.slane %v315, 4
    %v317 = vadd.f32 %v315, %v316
    %v318 = vrot.slane %v317, 2
    %v319 = vadd.f32 %v317, %v318
    %v320 = vrot.slane %v319, 1
    %v321 = vadd.f32 %v319, %v320
    %s322 = vtos %v321
    %v323 = vrcp.pop 256.0
    %v324 = vmul.f32 256.0, %v323
    %v325 = vsub.f32 1.0, %v324
    %v326 = vmul.f32 %v323, %v325
    %v327 = vadd.f32 %v323, %v326
    %vm328 = vweird.f32 %v323
    %v329 = vsel %vm328, %v323, %v327
    %s330 = vtos %v329
    %s331 = smul.f32 %s322, %s330
    %v332 = vsel %vm100, %v220, 0.0
    %333 = vadd.xlane.f32.xlu0 %v332
    %v334 = vpop.xlane.xlu0 %333
    %v335 = vrot.slane %v334, 4
    %v336 = vadd.f32 %v334, %v335
    %v337 = vrot.slane %v336, 2
    %v338 = vadd.f32 %v336, %v337
    %v339 = vrot.slane %v338, 1
    %v340 = vadd.f32 %v338, %v339
    %s341 = vtos %v340
    %v342 = vrcp.pop 256.0
    %v343 = vmul.f32 256.0, %v342
    %v344 = vsub.f32 1.0, %v343
    %v345 = vmul.f32 %v342, %v344
    %v346 = vadd.f32 %v342, %v345
    %vm347 = vweird.f32 %v342
    %v348 = vsel %vm347, %v342, %v346
    %s349 = vtos %v348
    %s350 = smul.f32 %s341, %s349
    %v351 = vsel %vm100, %v255, 0.0
    %352 = vadd.xlane.f32.xlu0 %v351
    %v353 = vpop.xlane.xlu0 %352
    %v354 = vrot.slane %v353, 4
    %v355 = vadd.f32 %v353, %v354
    %v356 = vrot.slane %v355, 2
    %v357 = vadd.f32 %v355, %v356
    %v358 = vrot.slane %v357, 1
    %v359 = vadd.f32 %v357, %v358
    %s360 = vtos %v359
    %v361 = vrcp.pop 256.0
    %v362 = vmul.f32 256.0, %v361
    %v363 = vsub.f32 1.0, %v362
    %v364 = vmul.f32 %v361, %v363
    %v365 = vadd.f32 %v361, %v364
    %vm366 = vweird.f32 %v361
    %v367 = vsel %vm366, %v361, %v365
    %s368 = vtos %v367
    %s369 = smul.f32 %s360, %s368
    %v370 = vmul.f32 %v235, %v235
    %v371 = vsel %vm100, %v370, 0.0
    %372 = vadd.xlane.f32.xlu0 %v371
    %v373 = vpop.xlane.xlu0 %372
    %v374 = vrot.slane %v373, 4
    %v375 = vadd.f32 %v373, %v374
    %v376 = vrot.slane %v375, 2
    %v377 = vadd.f32 %v375, %v376
    %v378 = vrot.slane %v377, 1
    %v379 = vadd.f32 %v377, %v378
    %s380 = vtos %v379
    %v381 = vrcp.pop 256.0
    %v382 = vmul.f32 256.0, %v381
    %v383 = vsub.f32 1.0, %v382
    %v384 = vmul.f32 %v381, %v383
    %v385 = vadd.f32 %v381, %v384
    %vm386 = vweird.f32 %v381
    %v387 = vsel %vm386, %v381, %v385
    %s388 = vtos %v387
    %s389 = smul.f32 %s380, %s388
    %v390 = vmul.f32 %v235, %v159
    %v391 = vsel %vm100, %v390, 0.0
    %392 = vadd.xlane.f32.xlu0 %v391
    %v393 = vpop.xlane.xlu0 %392
    %v394 = vrot.slane %v393, 4
    %v395 = vadd.f32 %v393, %v394
    %v396 = vrot.slane %v395, 2
    %v397 = vadd.f32 %v395, %v396
    %v398 = vrot.slane %v397, 1
    %v399 = vadd.f32 %v397, %v398
    %s400 = vtos %v399
    %v401 = vrcp.pop 256.0
    %v402 = vmul.f32 256.0, %v401
    %v403 = vsub.f32 1.0, %v402
    %v404 = vmul.f32 %v401, %v403
    %v405 = vadd.f32 %v401, %v404
    %vm406 = vweird.f32 %v401
    %v407 = vsel %vm406, %v401, %v405
    %s408 = vtos %v407
    %s409 = smul.f32 %s400, %s408
    %v410 = vmul.f32 %v235, %v240
    %v411 = vsel %vm100, %v410, 0.0
    %412 = vadd.xlane.f32.xlu0 %v411
    %v413 = vpop.xlane.xlu0 %412
    %v414 = vrot.slane %v413, 4
    %v415 = vadd.f32 %v413, %v414
    %v416 = vrot.slane %v415, 2
    %v417 = vadd.f32 %v415, %v416
    %v418 = vrot.slane %v417, 1
    %v419 = vadd.f32 %v417, %v418
    %s420 = vtos %v419
    %v421 = vrcp.pop 256.0
    %v422 = vmul.f32 256.0, %v421
    %v423 = vsub.f32 1.0, %v422
    %v424 = vmul.f32 %v421, %v423
    %v425 = vadd.f32 %v421, %v424
    %vm426 = vweird.f32 %v421
    %v427 = vsel %vm426, %v421, %v425
    %s428 = vtos %v427
    %s429 = smul.f32 %s420, %s428
    %v430 = vmul.f32 %v235, %v251
    %v431 = vsel %vm100, %v430, 0.0
    %432 = vadd.xlane.f32.xlu0 %v431
    %v433 = vpop.xlane.xlu0 %432
    %v434 = vrot.slane %v433, 4
    %v435 = vadd.f32 %v433, %v434
    %v436 = vrot.slane %v435, 2
    %v437 = vadd.f32 %v435, %v436
    %v438 = vrot.slane %v437, 1
    %v439 = vadd.f32 %v437, %v438
    %s440 = vtos %v439
    %v441 = vrcp.pop 256.0
    %v442 = vmul.f32 256.0, %v441
    %v443 = vsub.f32 1.0, %v442
    %v444 = vmul.f32 %v441, %v443
    %v445 = vadd.f32 %v441, %v444
    %vm446 = vweird.f32 %v441
    %v447 = vsel %vm446, %v441, %v445
    %s448 = vtos %v447
    %s449 = smul.f32 %s440, %s448
    %v450 = vmul.f32 %v235, %v220
    %v451 = vsel %vm100, %v450, 0.0
    %452 = vadd.xlane.f32.xlu0 %v451
    %v453 = vpop.xlane.xlu0 %452
    %v454 = vrot.slane %v453, 4
    %v455 = vadd.f32 %v453, %v454
    %v456 = vrot.slane %v455, 2
    %v457 = vadd.f32 %v455, %v456
    %v458 = vrot.slane %v457, 1
    %v459 = vadd.f32 %v457, %v458
    %s460 = vtos %v459
    %v461 = vrcp.pop 256.0
    %v462 = vmul.f32 256.0, %v461
    %v463 = vsub.f32 1.0, %v462
    %v464 = vmul.f32 %v461, %v463
    %v465 = vadd.f32 %v461, %v464
    %vm466 = vweird.f32 %v461
    %v467 = vsel %vm466, %v461, %v465
    %s468 = vtos %v467
    %s469 = smul.f32 %s460, %s468
    %v470 = vmul.f32 %v235, %v255
    %v471 = vsel %vm100, %v470, 0.0
    %472 = vadd.xlane.f32.xlu0 %v471
    %v473 = vpop.xlane.xlu0 %472
    %v474 = vrot.slane %v473, 4
    %v475 = vadd.f32 %v473, %v474
    %v476 = vrot.slane %v475, 2
    %v477 = vadd.f32 %v475, %v476
    %v478 = vrot.slane %v477, 1
    %v479 = vadd.f32 %v477, %v478
    %s480 = vtos %v479
    %v481 = vrcp.pop 256.0
    %v482 = vmul.f32 256.0, %v481
    %v483 = vsub.f32 1.0, %v482
    %v484 = vmul.f32 %v481, %v483
    %v485 = vadd.f32 %v481, %v484
    %vm486 = vweird.f32 %v481
    %v487 = vsel %vm486, %v481, %v485
    %s488 = vtos %v487
    %s489 = smul.f32 %s480, %s488
    %v490 = vmul.f32 %v159, %v159
    %v491 = vsel %vm100, %v490, 0.0
    %492 = vadd.xlane.f32.xlu0 %v491
    %v493 = vpop.xlane.xlu0 %492
    %v494 = vrot.slane %v493, 4
    %v495 = vadd.f32 %v493, %v494
    %v496 = vrot.slane %v495, 2
    %v497 = vadd.f32 %v495, %v496
    %v498 = vrot.slane %v497, 1
    %v499 = vadd.f32 %v497, %v498
    %s500 = vtos %v499
    %v501 = vrcp.pop 256.0
    %v502 = vmul.f32 256.0, %v501
    %v503 = vsub.f32 1.0, %v502
    %v504 = vmul.f32 %v501, %v503
    %v505 = vadd.f32 %v501, %v504
    %vm506 = vweird.f32 %v501
    %v507 = vsel %vm506, %v501, %v505
    %s508 = vtos %v507
    %s509 = smul.f32 %s500, %s508
    %v510 = vmul.f32 %v159, %v240
    %v511 = vsel %vm100, %v510, 0.0
    %512 = vadd.xlane.f32.xlu0 %v511
    %v513 = vpop.xlane.xlu0 %512
    %v514 = vrot.slane %v513, 4
    %v515 = vadd.f32 %v513, %v514
    %v516 = vrot.slane %v515, 2
    %v517 = vadd.f32 %v515, %v516
    %v518 = vrot.slane %v517, 1
    %v519 = vadd.f32 %v517, %v518
    %s520 = vtos %v519
    %v521 = vrcp.pop 256.0
    %v522 = vmul.f32 256.0, %v521
    %v523 = vsub.f32 1.0, %v522
    %v524 = vmul.f32 %v521, %v523
    %v525 = vadd.f32 %v521, %v524
    %vm526 = vweird.f32 %v521
    %v527 = vsel %vm526, %v521, %v525
    %s528 = vtos %v527
    %s529 = smul.f32 %s520, %s528
    %v530 = vmul.f32 %v159, %v251
    %v531 = vsel %vm100, %v530, 0.0
    %532 = vadd.xlane.f32.xlu0 %v531
    %v533 = vpop.xlane.xlu0 %532
    %v534 = vrot.slane %v533, 4
    %v535 = vadd.f32 %v533, %v534
    %v536 = vrot.slane %v535, 2
    %v537 = vadd.f32 %v535, %v536
    %v538 = vrot.slane %v537, 1
    %v539 = vadd.f32 %v537, %v538
    %s540 = vtos %v539
    %v541 = vrcp.pop 256.0
    %v542 = vmul.f32 256.0, %v541
    %v543 = vsub.f32 1.0, %v542
    %v544 = vmul.f32 %v541, %v543
    %v545 = vadd.f32 %v541, %v544
    %vm546 = vweird.f32 %v541
    %v547 = vsel %vm546, %v541, %v545
    %s548 = vtos %v547
    %s549 = smul.f32 %s540, %s548
    %v550 = vmul.f32 %v159, %v220
    %v551 = vsel %vm100, %v550, 0.0
    %552 = vadd.xlane.f32.xlu0 %v551
    %v553 = vpop.xlane.xlu0 %552
    %v554 = vrot.slane %v553, 4
    %v555 = vadd.f32 %v553, %v554
    %v556 = vrot.slane %v555, 2
    %v557 = vadd.f32 %v555, %v556
    %v558 = vrot.slane %v557, 1
    %v559 = vadd.f32 %v557, %v558
    %s560 = vtos %v559
    %v561 = vrcp.pop 256.0
    %v562 = vmul.f32 256.0, %v561
    %v563 = vsub.f32 1.0, %v562
    %v564 = vmul.f32 %v561, %v563
    %v565 = vadd.f32 %v561, %v564
    %vm566 = vweird.f32 %v561
    %v567 = vsel %vm566, %v561, %v565
    %s568 = vtos %v567
    %s569 = smul.f32 %s560, %s568
    %v570 = vmul.f32 %v159, %v255
    %v571 = vsel %vm100, %v570, 0.0
    %572 = vadd.xlane.f32.xlu0 %v571
    %v573 = vpop.xlane.xlu0 %572
    %v574 = vrot.slane %v573, 4
    %v575 = vadd.f32 %v573, %v574
    %v576 = vrot.slane %v575, 2
    %v577 = vadd.f32 %v575, %v576
    %v578 = vrot.slane %v577, 1
    %v579 = vadd.f32 %v577, %v578
    %s580 = vtos %v579
    %v581 = vrcp.pop 256.0
    %v582 = vmul.f32 256.0, %v581
    %v583 = vsub.f32 1.0, %v582
    %v584 = vmul.f32 %v581, %v583
    %v585 = vadd.f32 %v581, %v584
    %vm586 = vweird.f32 %v581
    %v587 = vsel %vm586, %v581, %v585
    %s588 = vtos %v587
    %s589 = smul.f32 %s580, %s588
    %v590 = vmul.f32 %v240, %v240
    %v591 = vsel %vm100, %v590, 0.0
    %592 = vadd.xlane.f32.xlu0 %v591
    %v593 = vpop.xlane.xlu0 %592
    %v594 = vrot.slane %v593, 4
    %v595 = vadd.f32 %v593, %v594
    %v596 = vrot.slane %v595, 2
    %v597 = vadd.f32 %v595, %v596
    %v598 = vrot.slane %v597, 1
    %v599 = vadd.f32 %v597, %v598
    %s600 = vtos %v599
    %v601 = vrcp.pop 256.0
    %v602 = vmul.f32 256.0, %v601
    %v603 = vsub.f32 1.0, %v602
    %v604 = vmul.f32 %v601, %v603
    %v605 = vadd.f32 %v601, %v604
    %vm606 = vweird.f32 %v601
    %v607 = vsel %vm606, %v601, %v605
    %s608 = vtos %v607
    %s609 = smul.f32 %s600, %s608
    %v610 = vmul.f32 %v240, %v251
    %v611 = vsel %vm100, %v610, 0.0
    %612 = vadd.xlane.f32.xlu0 %v611
    %v613 = vpop.xlane.xlu0 %612
    %v614 = vrot.slane %v613, 4
    %v615 = vadd.f32 %v613, %v614
    %v616 = vrot.slane %v615, 2
    %v617 = vadd.f32 %v615, %v616
    %v618 = vrot.slane %v617, 1
    %v619 = vadd.f32 %v617, %v618
    %s620 = vtos %v619
    %v621 = vrcp.pop 256.0
    %v622 = vmul.f32 256.0, %v621
    %v623 = vsub.f32 1.0, %v622
    %v624 = vmul.f32 %v621, %v623
    %v625 = vadd.f32 %v621, %v624
    %vm626 = vweird.f32 %v621
    %v627 = vsel %vm626, %v621, %v625
    %s628 = vtos %v627
    %s629 = smul.f32 %s620, %s628
    %v630 = vmul.f32 %v240, %v220
    %v631 = vsel %vm100, %v630, 0.0
    %632 = vadd.xlane.f32.xlu0 %v631
    %v633 = vpop.xlane.xlu0 %632
    %v634 = vrot.slane %v633, 4
    %v635 = vadd.f32 %v633, %v634
    %v636 = vrot.slane %v635, 2
    %v637 = vadd.f32 %v635, %v636
    %v638 = vrot.slane %v637, 1
    %v639 = vadd.f32 %v637, %v638
    %s640 = vtos %v639
    %v641 = vrcp.pop 256.0
    %v642 = vmul.f32 256.0, %v641
    %v643 = vsub.f32 1.0, %v642
    %v644 = vmul.f32 %v641, %v643
    %v645 = vadd.f32 %v641, %v644
    %vm646 = vweird.f32 %v641
    %v647 = vsel %vm646, %v641, %v645
    %s648 = vtos %v647
    %s649 = smul.f32 %s640, %s648
    %v650 = vmul.f32 %v240, %v255
    %v651 = vsel %vm100, %v650, 0.0
    %652 = vadd.xlane.f32.xlu0 %v651
    %v653 = vpop.xlane.xlu0 %652
    %v654 = vrot.slane %v653, 4
    %v655 = vadd.f32 %v653, %v654
    %v656 = vrot.slane %v655, 2
    %v657 = vadd.f32 %v655, %v656
    %v658 = vrot.slane %v657, 1
    %v659 = vadd.f32 %v657, %v658
    %s660 = vtos %v659
    %v661 = vrcp.pop 256.0
    %v662 = vmul.f32 256.0, %v661
    %v663 = vsub.f32 1.0, %v662
    %v664 = vmul.f32 %v661, %v663
    %v665 = vadd.f32 %v661, %v664
    %vm666 = vweird.f32 %v661
    %v667 = vsel %vm666, %v661, %v665
    %s668 = vtos %v667
    %s669 = smul.f32 %s660, %s668
    %v670 = vmul.f32 %v251, %v251
    %v671 = vsel %vm100, %v670, 0.0
    %672 = vadd.xlane.f32.xlu0 %v671
    %v673 = vpop.xlane.xlu0 %672
    %v674 = vrot.slane %v673, 4
    %v675 = vadd.f32 %v673, %v674
    %v676 = vrot.slane %v675, 2
    %v677 = vadd.f32 %v675, %v676
    %v678 = vrot.slane %v677, 1
    %v679 = vadd.f32 %v677, %v678
    %s680 = vtos %v679
    %v681 = vrcp.pop 256.0
    %v682 = vmul.f32 256.0, %v681
    %v683 = vsub.f32 1.0, %v682
    %v684 = vmul.f32 %v681, %v683
    %v685 = vadd.f32 %v681, %v684
    %vm686 = vweird.f32 %v681
    %v687 = vsel %vm686, %v681, %v685
    %s688 = vtos %v687
    %s689 = smul.f32 %s680, %s688
    %v690 = vmul.f32 %v251, %v220
    %v691 = vsel %vm100, %v690, 0.0
    %692 = vadd.xlane.f32.xlu0 %v691
    %v693 = vpop.xlane.xlu0 %692
    %v694 = vrot.slane %v693, 4
    %v695 = vadd.f32 %v693, %v694
    %v696 = vrot.slane %v695, 2
    %v697 = vadd.f32 %v695, %v696
    %v698 = vrot.slane %v697, 1
    %v699 = vadd.f32 %v697, %v698
    %s700 = vtos %v699
    %v701 = vrcp.pop 256.0
    %v702 = vmul.f32 256.0, %v701
    %v703 = vsub.f32 1.0, %v702
    %v704 = vmul.f32 %v701, %v703
    %v705 = vadd.f32 %v701, %v704
    %vm706 = vweird.f32 %v701
    %v707 = vsel %vm706, %v701, %v705
    %s708 = vtos %v707
    %s709 = smul.f32 %s700, %s708
    %v710 = vmul.f32 %v251, %v255
    %v711 = vsel %vm100, %v710, 0.0
    %712 = vadd.xlane.f32.xlu0 %v711
    %v713 = vpop.xlane.xlu0 %712
    %v714 = vrot.slane %v713, 4
    %v715 = vadd.f32 %v713, %v714
    %v716 = vrot.slane %v715, 2
    %v717 = vadd.f32 %v715, %v716
    %v718 = vrot.slane %v717, 1
    %v719 = vadd.f32 %v717, %v718
    %s720 = vtos %v719
    %v721 = vrcp.pop 256.0
    %v722 = vmul.f32 256.0, %v721
    %v723 = vsub.f32 1.0, %v722
    %v724 = vmul.f32 %v721, %v723
    %v725 = vadd.f32 %v721, %v724
    %vm726 = vweird.f32 %v721
    %v727 = vsel %vm726, %v721, %v725
    %s728 = vtos %v727
    %s729 = smul.f32 %s720, %s728
    %v730 = vmul.f32 %v220, %v220
    %v731 = vsel %vm100, %v730, 0.0
    %732 = vadd.xlane.f32.xlu0 %v731
    %v733 = vpop.xlane.xlu0 %732
    %v734 = vrot.slane %v733, 4
    %v735 = vadd.f32 %v733, %v734
    %v736 = vrot.slane %v735, 2
    %v737 = vadd.f32 %v735, %v736
    %v738 = vrot.slane %v737, 1
    %v739 = vadd.f32 %v737, %v738
    %s740 = vtos %v739
    %v741 = vrcp.pop 256.0
    %v742 = vmul.f32 256.0, %v741
    %v743 = vsub.f32 1.0, %v742
    %v744 = vmul.f32 %v741, %v743
    %v745 = vadd.f32 %v741, %v744
    %vm746 = vweird.f32 %v741
    %v747 = vsel %vm746, %v741, %v745
    %s748 = vtos %v747
    %s749 = smul.f32 %s740, %s748
    %v750 = vmul.f32 %v220, %v255
    %v751 = vsel %vm100, %v750, 0.0
    %752 = vadd.xlane.f32.xlu0 %v751
    %v753 = vpop.xlane.xlu0 %752
    %v754 = vrot.slane %v753, 4
    %v755 = vadd.f32 %v753, %v754
    %v756 = vrot.slane %v755, 2
    %v757 = vadd.f32 %v755, %v756
    %v758 = vrot.slane %v757, 1
    %v759 = vadd.f32 %v757, %v758
    %s760 = vtos %v759
    %v761 = vrcp.pop 256.0
    %v762 = vmul.f32 256.0, %v761
    %v763 = vsub.f32 1.0, %v762
    %v764 = vmul.f32 %v761, %v763
    %v765 = vadd.f32 %v761, %v764
    %vm766 = vweird.f32 %v761
    %v767 = vsel %vm766, %v761, %v765
    %s768 = vtos %v767
    %s769 = smul.f32 %s760, %s768
    %v770 = vmul.f32 %v255, %v255
    %v771 = vsel %vm100, %v770, 0.0
    %772 = vadd.xlane.f32.xlu0 %v771
    %v773 = vpop.xlane.xlu0 %772
    %v774 = vrot.slane %v773, 4
    %v775 = vadd.f32 %v773, %v774
    %v776 = vrot.slane %v775, 2
    %v777 = vadd.f32 %v775, %v776
    %v778 = vrot.slane %v777, 1
    %v779 = vadd.f32 %v777, %v778
    %s780 = vtos %v779
    %v781 = vrcp.pop 256.0
    %v782 = vmul.f32 256.0, %v781
    %v783 = vsub.f32 1.0, %v782
    %v784 = vmul.f32 %v781, %v783
    %v785 = vadd.f32 %v781, %v784
    %vm786 = vweird.f32 %v781
    %v787 = vsel %vm786, %v781, %v785
    %s788 = vtos %v787
    %s789 = smul.f32 %s780, %s788
    %790 = vst [vmem:[#allocation2] sm:$0xff] 0.0
    %791 = vst [vmem:[#allocation2 + $0x8] sm:$0xff] 0.0
    %792 = vst [vmem:[#allocation2 + $0x10] sm:$0xff] 0.0
    %793 = vst [vmem:[#allocation2 + $0x18] sm:$0xff] 0.0
    %794 = vst [vmem:[#allocation2 + $0x20] sm:$0xff] 0.0
    %795 = vst [vmem:[#allocation2 + $0x28] sm:$0xff] 0.0
    %796 = vst [vmem:[#allocation2 + $0x30] sm:$0xff] 0.0
    %797 = vst [vmem:[#allocation2 + $0x38] sm:$0xff] 0.0
    %s798 = sld [smem:[#allocation3]]
    %s799 = sld [smem:[#allocation3 + $0x1]]
    %s800 = sld [smem:[#allocation3 + $0x2]]
    %s801 = sld [smem:[#allocation3 + $0x3]]
    %s802 = sld [smem:[#allocation3 + $0x4]]
    %s803 = sld [smem:[#allocation3 + $0x5]]
    %s804 = smul.f32 %s798, %s274
    %s805 = smul.f32 %s799, %s293
    %s806 = sadd.f32 %s804, %s805
    %s807 = smul.f32 %s800, %s312
    %s808 = sadd.f32 %s806, %s807
    %s809 = smul.f32 %s801, %s331
    %s810 = sadd.f32 %s808, %s809
    %s811 = smul.f32 %s802, %s350
    %s812 = sadd.f32 %s810, %s811
    %s813 = smul.f32 %s803, %s369
    %s814 = sadd.f32 %s812, %s813
    %s815 = smul.f32 %s798, %s798
    %s816 = smul.f32 %s815, %s389
    %s817 = smul.f32 %s798, %s799
    %s818 = smul.f32 %s817, 2.0
    %s819 = smul.f32 %s818, %s409
    %s820 = sadd.f32 %s816, %s819
    %s821 = smul.f32 %s798, %s800
    %s822 = smul.f32 %s821, 2.0
    %s823 = smul.f32 %s822, %s429
    %s824 = sadd.f32 %s820, %s823
    %s825 = smul.f32 %s798, %s801
    %s826 = smul.f32 %s825, 2.0
    %s827 = smul.f32 %s826, %s449
    %s828 = sadd.f32 %s824, %s827
    %s829 = smul.f32 %s798, %s802
    %s830 = smul.f32 %s829, 2.0
    %s831 = smul.f32 %s830, %s469
    %s832 = sadd.f32 %s828, %s831
    %s833 = smul.f32 %s798, %s803
    %s834 = smul.f32 %s833, 2.0
    %s835 = smul.f32 %s834, %s489
    %s836 = sadd.f32 %s832, %s835
    %s837 = smul.f32 %s799, %s799
    %s838 = smul.f32 %s837, %s509
    %s839 = sadd.f32 %s836, %s838
    %s840 = smul.f32 %s799, %s800
    %s841 = smul.f32 %s840, 2.0
    %s842 = smul.f32 %s841, %s529
    %s843 = sadd.f32 %s839, %s842
    %s844 = smul.f32 %s799, %s801
    %s845 = smul.f32 %s844, 2.0
    %s846 = smul.f32 %s845, %s549
    %s847 = sadd.f32 %s843, %s846
    %s848 = smul.f32 %s799, %s802
    %s849 = smul.f32 %s848, 2.0
    %s850 = smul.f32 %s849, %s569
    %s851 = sadd.f32 %s847, %s850
    %s852 = smul.f32 %s799, %s803
    %s853 = smul.f32 %s852, 2.0
    %s854 = smul.f32 %s853, %s589
    %s855 = sadd.f32 %s851, %s854
    %s856 = smul.f32 %s800, %s800
    %s857 = smul.f32 %s856, %s609
    %s858 = sadd.f32 %s855, %s857
    %s859 = smul.f32 %s800, %s801
    %s860 = smul.f32 %s859, 2.0
    %s861 = smul.f32 %s860, %s629
    %s862 = sadd.f32 %s858, %s861
    %s863 = smul.f32 %s800, %s802
    %s864 = smul.f32 %s863, 2.0
    %s865 = smul.f32 %s864, %s649
    %s866 = sadd.f32 %s862, %s865
    %s867 = smul.f32 %s800, %s803
    %s868 = smul.f32 %s867, 2.0
    %s869 = smul.f32 %s868, %s669
    %s870 = sadd.f32 %s866, %s869
    %s871 = smul.f32 %s801, %s801
    %s872 = smul.f32 %s871, %s689
    %s873 = sadd.f32 %s870, %s872
    %s874 = smul.f32 %s801, %s802
    %s875 = smul.f32 %s874, 2.0
    %s876 = smul.f32 %s875, %s709
    %s877 = sadd.f32 %s873, %s876
    %s878 = smul.f32 %s801, %s803
    %s879 = smul.f32 %s878, 2.0
    %s880 = smul.f32 %s879, %s729
    %s881 = sadd.f32 %s877, %s880
    %s882 = smul.f32 %s802, %s802
    %s883 = smul.f32 %s882, %s749
    %s884 = sadd.f32 %s881, %s883
    %s885 = smul.f32 %s802, %s803
    %s886 = smul.f32 %s885, 2.0
    %s887 = smul.f32 %s886, %s769
    %s888 = sadd.f32 %s884, %s887
    %s889 = smul.f32 %s803, %s803
    %s890 = smul.f32 %s889, %s789
    %s891 = sadd.f32 %s888, %s890
    %s892 = smul.f32 %s814, %s814
    %s893 = ssub.f32 %s891, %s892
    %s894 = sadd.f32 %s893, 1e-05
    %v895 = vstv %s894
    %v896 = vrsqrt.pop %v895
    %v897 = vmul.f32 %v896, %v895
    %v898 = vmul.f32 %v897, %v896
    %v899 = vmul.f32 0.5, %v898
    %v900 = vsub.f32 1.5, %v899
    %v901 = vmul.f32 %v896, %v900
    %vm902 = vweird.f32 %v895
    %vm903 = vweird.f32 %v896
    %vm904 = vmor %vm902, %vm903
    %v905 = vsel %vm904, %v896, %v901
    %s906 = vtos %v905
    %s907 = sld [smem:[#allocation9]]
    %s908 = smul.f32 %s906, %s907
    %s909 = sld [smem:[#allocation11]]
    %s910 = smul.f32 %s814, %s908
    %s911 = ssub.f32 %s909, %s910
    %s912 = smul.f32 %s798, %s908
    %v913 = vstv %s912
    %v914 = vmul.f32 %v235, %v913
    %s915 = smul.f32 %s799, %s908
    %v916 = vstv %s915
    %v917 = vmul.f32 %v159, %v916
    %v918 = vadd.f32 %v914, %v917
    %s919 = smul.f32 %s800, %s908
    %v920 = vstv %s919
    %v921 = vmul.f32 %v240, %v920
    %v922 = vadd.f32 %v918, %v921
    %s923 = smul.f32 %s801, %s908
    %v924 = vstv %s923
    %v925 = vmul.f32 %v251, %v924
    %v926 = vadd.f32 %v922, %v925
    %s927 = smul.f32 %s802, %s908
    %v928 = vstv %s927
    %v929 = vmul.f32 %v220, %v928
    %v930 = vadd.f32 %v926, %v929
    %s931 = smul.f32 %s803, %s908
    %v932 = vstv %s931
    %v933 = vmul.f32 %v255, %v932
    %v934 = vadd.f32 %v930, %v933
    %v935 = vstv %s911
    %v936 = vadd.f32 %v934, %v935
    %v937 = vmax.f32 %v936, 0.0
    %938 = vst.msk [vmem:[#allocation2] sm:$0xff] %vm100, %v937
    %s939 = sld [smem:[#allocation3 + $0x6]]
    %s940 = sld [smem:[#allocation3 + $0x7]]
    %s941 = sld [smem:[#allocation3 + $0x8]]
    %s942 = sld [smem:[#allocation3 + $0x9]]
    %s943 = sld [smem:[#allocation3 + $0xa]]
    %s944 = sld [smem:[#allocation3 + $0xb]]
    %s945 = smul.f32 %s939, %s274
    %s946 = smul.f32 %s940, %s293
    %s947 = sadd.f32 %s945, %s946
    %s948 = smul.f32 %s941, %s312
    %s949 = sadd.f32 %s947, %s948
    %s950 = smul.f32 %s942, %s331
    %s951 = sadd.f32 %s949, %s950
    %s952 = smul.f32 %s943, %s350
    %s953 = sadd.f32 %s951, %s952
    %s954 = smul.f32 %s944, %s369
    %s955 = sadd.f32 %s953, %s954
    %s956 = smul.f32 %s939, %s939
    %s957 = smul.f32 %s956, %s389
    %s958 = smul.f32 %s939, %s940
    %s959 = smul.f32 %s958, 2.0
    %s960 = smul.f32 %s959, %s409
    %s961 = sadd.f32 %s957, %s960
    %s962 = smul.f32 %s939, %s941
    %s963 = smul.f32 %s962, 2.0
    %s964 = smul.f32 %s963, %s429
    %s965 = sadd.f32 %s961, %s964
    %s966 = smul.f32 %s939, %s942
    %s967 = smul.f32 %s966, 2.0
    %s968 = smul.f32 %s967, %s449
    %s969 = sadd.f32 %s965, %s968
    %s970 = smul.f32 %s939, %s943
    %s971 = smul.f32 %s970, 2.0
    %s972 = smul.f32 %s971, %s469
    %s973 = sadd.f32 %s969, %s972
    %s974 = smul.f32 %s939, %s944
    %s975 = smul.f32 %s974, 2.0
    %s976 = smul.f32 %s975, %s489
    %s977 = sadd.f32 %s973, %s976
    %s978 = smul.f32 %s940, %s940
    %s979 = smul.f32 %s978, %s509
    %s980 = sadd.f32 %s977, %s979
    %s981 = smul.f32 %s940, %s941
    %s982 = smul.f32 %s981, 2.0
    %s983 = smul.f32 %s982, %s529
    %s984 = sadd.f32 %s980, %s983
    %s985 = smul.f32 %s940, %s942
    %s986 = smul.f32 %s985, 2.0
    %s987 = smul.f32 %s986, %s549
    %s988 = sadd.f32 %s984, %s987
    %s989 = smul.f32 %s940, %s943
    %s990 = smul.f32 %s989, 2.0
    %s991 = smul.f32 %s990, %s569
    %s992 = sadd.f32 %s988, %s991
    %s993 = smul.f32 %s940, %s944
    %s994 = smul.f32 %s993, 2.0
    %s995 = smul.f32 %s994, %s589
    %s996 = sadd.f32 %s992, %s995
    %s997 = smul.f32 %s941, %s941
    %s998 = smul.f32 %s997, %s609
    %s999 = sadd.f32 %s996, %s998
    %s1000 = smul.f32 %s941, %s942
    %s1001 = smul.f32 %s1000, 2.0
    %s1002 = smul.f32 %s1001, %s629
    %s1003 = sadd.f32 %s999, %s1002
    %s1004 = smul.f32 %s941, %s943
    %s1005 = smul.f32 %s1004, 2.0
    %s1006 = smul.f32 %s1005, %s649
    %s1007 = sadd.f32 %s1003, %s1006
    %s1008 = smul.f32 %s941, %s944
    %s1009 = smul.f32 %s1008, 2.0
    %s1010 = smul.f32 %s1009, %s669
    %s1011 = sadd.f32 %s1007, %s1010
    %s1012 = smul.f32 %s942, %s942
    %s1013 = smul.f32 %s1012, %s689
    %s1014 = sadd.f32 %s1011, %s1013
    %s1015 = smul.f32 %s942, %s943
    %s1016 = smul.f32 %s1015, 2.0
    %s1017 = smul.f32 %s1016, %s709
    %s1018 = sadd.f32 %s1014, %s1017
    %s1019 = smul.f32 %s942, %s944
    %s1020 = smul.f32 %s1019, 2.0
    %s1021 = smul.f32 %s1020, %s729
    %s1022 = sadd.f32 %s1018, %s1021
    %s1023 = smul.f32 %s943, %s943
    %s1024 = smul.f32 %s1023, %s749
    %s1025 = sadd.f32 %s1022, %s1024
    %s1026 = smul.f32 %s943, %s944
    %s1027 = smul.f32 %s1026, 2.0
    %s1028 = smul.f32 %s1027, %s769
    %s1029 = sadd.f32 %s1025, %s1028
    %s1030 = smul.f32 %s944, %s944
    %s1031 = smul.f32 %s1030, %s789
    %s1032 = sadd.f32 %s1029, %s1031
    %s1033 = smul.f32 %s955, %s955
    %s1034 = ssub.f32 %s1032, %s1033
    %s1035 = sadd.f32 %s1034, 1e-05
    %v1036 = vstv %s1035
    %v1037 = vrsqrt.pop %v1036
    %v1038 = vmul.f32 %v1037, %v1036
    %v1039 = vmul.f32 %v1038, %v1037
    %v1040 = vmul.f32 0.5, %v1039
    %v1041 = vsub.f32 1.5, %v1040
    %v1042 = vmul.f32 %v1037, %v1041
    %vm1043 = vweird.f32 %v1036
    %vm1044 = vweird.f32 %v1037
    %vm1045 = vmor %vm1043, %vm1044
    %v1046 = vsel %vm1045, %v1037, %v1042
    %s1047 = vtos %v1046
    %s1048 = sld [smem:[#allocation9 + $0x1]]
    %s1049 = smul.f32 %s1047, %s1048
    %s1050 = sld [smem:[#allocation11 + $0x1]]
    %s1051 = smul.f32 %s955, %s1049
    %s1052 = ssub.f32 %s1050, %s1051
    %s1053 = smul.f32 %s939, %s1049
    %v1054 = vstv %s1053
    %v1055 = vmul.f32 %v235, %v1054
    %s1056 = smul.f32 %s940, %s1049
    %v1057 = vstv %s1056
    %v1058 = vmul.f32 %v159, %v1057
    %v1059 = vadd.f32 %v1055, %v1058
    %s1060 = smul.f32 %s941, %s1049
    %v1061 = vstv %s1060
    %v1062 = vmul.f32 %v240, %v1061
    %v1063 = vadd.f32 %v1059, %v1062
    %s1064 = smul.f32 %s942, %s1049
    %v1065 = vstv %s1064
    %v1066 = vmul.f32 %v251, %v1065
    %v1067 = vadd.f32 %v1063, %v1066
    %s1068 = smul.f32 %s943, %s1049
    %v1069 = vstv %s1068
    %v1070 = vmul.f32 %v220, %v1069
    %v1071 = vadd.f32 %v1067, %v1070
    %s1072 = smul.f32 %s944, %s1049
    %v1073 = vstv %s1072
    %v1074 = vmul.f32 %v255, %v1073
    %v1075 = vadd.f32 %v1071, %v1074
    %v1076 = vstv %s1052
    %v1077 = vadd.f32 %v1075, %v1076
    %v1078 = vmax.f32 %v1077, 0.0
    %1079 = vst.msk [vmem:[#allocation2 + $0x8] sm:$0xff] %vm100, %v1078
    %s1080 = sld [smem:[#allocation3 + $0xc]]
    %s1081 = sld [smem:[#allocation3 + $0xd]]
    %s1082 = sld [smem:[#allocation3 + $0xe]]
    %s1083 = sld [smem:[#allocation3 + $0xf]]
    %s1084 = sld [smem:[#allocation3 + $0x10]]
    %s1085 = sld [smem:[#allocation3 + $0x11]]
    %s1086 = smul.f32 %s1080, %s274
    %s1087 = smul.f32 %s1081, %s293
    %s1088 = sadd.f32 %s1086, %s1087
    %s1089 = smul.f32 %s1082, %s312
    %s1090 = sadd.f32 %s1088, %s1089
    %s1091 = smul.f32 %s1083, %s331
    %s1092 = sadd.f32 %s1090, %s1091
    %s1093 = smul.f32 %s1084, %s350
    %s1094 = sadd.f32 %s1092, %s1093
    %s1095 = smul.f32 %s1085, %s369
    %s1096 = sadd.f32 %s1094, %s1095
    %s1097 = smul.f32 %s1080, %s1080
    %s1098 = smul.f32 %s1097, %s389
    %s1099 = smul.f32 %s1080, %s1081
    %s1100 = smul.f32 %s1099, 2.0
    %s1101 = smul.f32 %s1100, %s409
    %s1102 = sadd.f32 %s1098, %s1101
    %s1103 = smul.f32 %s1080, %s1082
    %s1104 = smul.f32 %s1103, 2.0
    %s1105 = smul.f32 %s1104, %s429
    %s1106 = sadd.f32 %s1102, %s1105
    %s1107 = smul.f32 %s1080, %s1083
    %s1108 = smul.f32 %s1107, 2.0
    %s1109 = smul.f32 %s1108, %s449
    %s1110 = sadd.f32 %s1106, %s1109
    %s1111 = smul.f32 %s1080, %s1084
    %s1112 = smul.f32 %s1111, 2.0
    %s1113 = smul.f32 %s1112, %s469
    %s1114 = sadd.f32 %s1110, %s1113
    %s1115 = smul.f32 %s1080, %s1085
    %s1116 = smul.f32 %s1115, 2.0
    %s1117 = smul.f32 %s1116, %s489
    %s1118 = sadd.f32 %s1114, %s1117
    %s1119 = smul.f32 %s1081, %s1081
    %s1120 = smul.f32 %s1119, %s509
    %s1121 = sadd.f32 %s1118, %s1120
    %s1122 = smul.f32 %s1081, %s1082
    %s1123 = smul.f32 %s1122, 2.0
    %s1124 = smul.f32 %s1123, %s529
    %s1125 = sadd.f32 %s1121, %s1124
    %s1126 = smul.f32 %s1081, %s1083
    %s1127 = smul.f32 %s1126, 2.0
    %s1128 = smul.f32 %s1127, %s549
    %s1129 = sadd.f32 %s1125, %s1128
    %s1130 = smul.f32 %s1081, %s1084
    %s1131 = smul.f32 %s1130, 2.0
    %s1132 = smul.f32 %s1131, %s569
    %s1133 = sadd.f32 %s1129, %s1132
    %s1134 = smul.f32 %s1081, %s1085
    %s1135 = smul.f32 %s1134, 2.0
    %s1136 = smul.f32 %s1135, %s589
    %s1137 = sadd.f32 %s1133, %s1136
    %s1138 = smul.f32 %s1082, %s1082
    %s1139 = smul.f32 %s1138, %s609
    %s1140 = sadd.f32 %s1137, %s1139
    %s1141 = smul.f32 %s1082, %s1083
    %s1142 = smul.f32 %s1141, 2.0
    %s1143 = smul.f32 %s1142, %s629
    %s1144 = sadd.f32 %s1140, %s1143
    %s1145 = smul.f32 %s1082, %s1084
    %s1146 = smul.f32 %s1145, 2.0
    %s1147 = smul.f32 %s1146, %s649
    %s1148 = sadd.f32 %s1144, %s1147
    %s1149 = smul.f32 %s1082, %s1085
    %s1150 = smul.f32 %s1149, 2.0
    %s1151 = smul.f32 %s1150, %s669
    %s1152 = sadd.f32 %s1148, %s1151
    %s1153 = smul.f32 %s1083, %s1083
    %s1154 = smul.f32 %s1153, %s689
    %s1155 = sadd.f32 %s1152, %s1154
    %s1156 = smul.f32 %s1083, %s1084
    %s1157 = smul.f32 %s1156, 2.0
    %s1158 = smul.f32 %s1157, %s709
    %s1159 = sadd.f32 %s1155, %s1158
    %s1160 = smul.f32 %s1083, %s1085
    %s1161 = smul.f32 %s1160, 2.0
    %s1162 = smul.f32 %s1161, %s729
    %s1163 = sadd.f32 %s1159, %s1162
    %s1164 = smul.f32 %s1084, %s1084
    %s1165 = smul.f32 %s1164, %s749
    %s1166 = sadd.f32 %s1163, %s1165
    %s1167 = smul.f32 %s1084, %s1085
    %s1168 = smul.f32 %s1167, 2.0
    %s1169 = smul.f32 %s1168, %s769
    %s1170 = sadd.f32 %s1166, %s1169
    %s1171 = smul.f32 %s1085, %s1085
    %s1172 = smul.f32 %s1171, %s789
    %s1173 = sadd.f32 %s1170, %s1172
    %s1174 = smul.f32 %s1096, %s1096
    %s1175 = ssub.f32 %s1173, %s1174
    %s1176 = sadd.f32 %s1175, 1e-05
    %v1177 = vstv %s1176
    %v1178 = vrsqrt.pop %v1177
    %v1179 = vmul.f32 %v1178, %v1177
    %v1180 = vmul.f32 %v1179, %v1178
    %v1181 = vmul.f32 0.5, %v1180
    %v1182 = vsub.f32 1.5, %v1181
    %v1183 = vmul.f32 %v1178, %v1182
    %vm1184 = vweird.f32 %v1177
    %vm1185 = vweird.f32 %v1178
    %vm1186 = vmor %vm1184, %vm1185
    %v1187 = vsel %vm1186, %v1178, %v1183
    %s1188 = vtos %v1187
    %s1189 = sld [smem:[#allocation9 + $0x2]]
    %s1190 = smul.f32 %s1188, %s1189
    %s1191 = sld [smem:[#allocation11 + $0x2]]
    %s1192 = smul.f32 %s1096, %s1190
    %s1193 = ssub.f32 %s1191, %s1192
    %s1194 = smul.f32 %s1080, %s1190
    %v1195 = vstv %s1194
    %v1196 = vmul.f32 %v235, %v1195
    %s1197 = smul.f32 %s1081, %s1190
    %v1198 = vstv %s1197
    %v1199 = vmul.f32 %v159, %v1198
    %v1200 = vadd.f32 %v1196, %v1199
    %s1201 = smul.f32 %s1082, %s1190
    %v1202 = vstv %s1201
    %v1203 = vmul.f32 %v240, %v1202
    %v1204 = vadd.f32 %v1200, %v1203
    %s1205 = smul.f32 %s1083, %s1190
    %v1206 = vstv %s1205
    %v1207 = vmul.f32 %v251, %v1206
    %v1208 = vadd.f32 %v1204, %v1207
    %s1209 = smul.f32 %s1084, %s1190
    %v1210 = vstv %s1209
    %v1211 = vmul.f32 %v220, %v1210
    %v1212 = vadd.f32 %v1208, %v1211
    %s1213 = smul.f32 %s1085, %s1190
    %v1214 = vstv %s1213
    %v1215 = vmul.f32 %v255, %v1214
    %v1216 = vadd.f32 %v1212, %v1215
    %v1217 = vstv %s1193
    %v1218 = vadd.f32 %v1216, %v1217
    %v1219 = vmax.f32 %v1218, 0.0
    %1220 = vst.msk [vmem:[#allocation2 + $0x10] sm:$0xff] %vm100, %v1219
    %s1221 = sld [smem:[#allocation3 + $0x12]]
    %s1222 = sld [smem:[#allocation3 + $0x13]]
    %s1223 = sld [smem:[#allocation3 + $0x14]]
    %s1224 = sld [smem:[#allocation3 + $0x15]]
    %s1225 = sld [smem:[#allocation3 + $0x16]]
    %s1226 = sld [smem:[#allocation3 + $0x17]]
    %s1227 = smul.f32 %s1221, %s274
    %s1228 = smul.f32 %s1222, %s293
    %s1229 = sadd.f32 %s1227, %s1228
    %s1230 = smul.f32 %s1223, %s312
    %s1231 = sadd.f32 %s1229, %s1230
    %s1232 = smul.f32 %s1224, %s331
    %s1233 = sadd.f32 %s1231, %s1232
    %s1234 = smul.f32 %s1225, %s350
    %s1235 = sadd.f32 %s1233, %s1234
    %s1236 = smul.f32 %s1226, %s369
    %s1237 = sadd.f32 %s1235, %s1236
    %s1238 = smul.f32 %s1221, %s1221
    %s1239 = smul.f32 %s1238, %s389
    %s1240 = smul.f32 %s1221, %s1222
    %s1241 = smul.f32 %s1240, 2.0
    %s1242 = smul.f32 %s1241, %s409
    %s1243 = sadd.f32 %s1239, %s1242
    %s1244 = smul.f32 %s1221, %s1223
    %s1245 = smul.f32 %s1244, 2.0
    %s1246 = smul.f32 %s1245, %s429
    %s1247 = sadd.f32 %s1243, %s1246
    %s1248 = smul.f32 %s1221, %s1224
    %s1249 = smul.f32 %s1248, 2.0
    %s1250 = smul.f32 %s1249, %s449
    %s1251 = sadd.f32 %s1247, %s1250
    %s1252 = smul.f32 %s1221, %s1225
    %s1253 = smul.f32 %s1252, 2.0
    %s1254 = smul.f32 %s1253, %s469
    %s1255 = sadd.f32 %s1251, %s1254
    %s1256 = smul.f32 %s1221, %s1226
    %s1257 = smul.f32 %s1256, 2.0
    %s1258 = smul.f32 %s1257, %s489
    %s1259 = sadd.f32 %s1255, %s1258
    %s1260 = smul.f32 %s1222, %s1222
    %s1261 = smul.f32 %s1260, %s509
    %s1262 = sadd.f32 %s1259, %s1261
    %s1263 = smul.f32 %s1222, %s1223
    %s1264 = smul.f32 %s1263, 2.0
    %s1265 = smul.f32 %s1264, %s529
    %s1266 = sadd.f32 %s1262, %s1265
    %s1267 = smul.f32 %s1222, %s1224
    %s1268 = smul.f32 %s1267, 2.0
    %s1269 = smul.f32 %s1268, %s549
    %s1270 = sadd.f32 %s1266, %s1269
    %s1271 = smul.f32 %s1222, %s1225
    %s1272 = smul.f32 %s1271, 2.0
    %s1273 = smul.f32 %s1272, %s569
    %s1274 = sadd.f32 %s1270, %s1273
    %s1275 = smul.f32 %s1222, %s1226
    %s1276 = smul.f32 %s1275, 2.0
    %s1277 = smul.f32 %s1276, %s589
    %s1278 = sadd.f32 %s1274, %s1277
    %s1279 = smul.f32 %s1223, %s1223
    %s1280 = smul.f32 %s1279, %s609
    %s1281 = sadd.f32 %s1278, %s1280
    %s1282 = smul.f32 %s1223, %s1224
    %s1283 = smul.f32 %s1282, 2.0
    %s1284 = smul.f32 %s1283, %s629
    %s1285 = sadd.f32 %s1281, %s1284
    %s1286 = smul.f32 %s1223, %s1225
    %s1287 = smul.f32 %s1286, 2.0
    %s1288 = smul.f32 %s1287, %s649
    %s1289 = sadd.f32 %s1285, %s1288
    %s1290 = smul.f32 %s1223, %s1226
    %s1291 = smul.f32 %s1290, 2.0
    %s1292 = smul.f32 %s1291, %s669
    %s1293 = sadd.f32 %s1289, %s1292
    %s1294 = smul.f32 %s1224, %s1224
    %s1295 = smul.f32 %s1294, %s689
    %s1296 = sadd.f32 %s1293, %s1295
    %s1297 = smul.f32 %s1224, %s1225
    %s1298 = smul.f32 %s1297, 2.0
    %s1299 = smul.f32 %s1298, %s709
    %s1300 = sadd.f32 %s1296, %s1299
    %s1301 = smul.f32 %s1224, %s1226
    %s1302 = smul.f32 %s1301, 2.0
    %s1303 = smul.f32 %s1302, %s729
    %s1304 = sadd.f32 %s1300, %s1303
    %s1305 = smul.f32 %s1225, %s1225
    %s1306 = smul.f32 %s1305, %s749
    %s1307 = sadd.f32 %s1304, %s1306
    %s1308 = smul.f32 %s1225, %s1226
    %s1309 = smul.f32 %s1308, 2.0
    %s1310 = smul.f32 %s1309, %s769
    %s1311 = sadd.f32 %s1307, %s1310
    %s1312 = smul.f32 %s1226, %s1226
    %s1313 = smul.f32 %s1312, %s789
    %s1314 = sadd.f32 %s1311, %s1313
    %s1315 = smul.f32 %s1237, %s1237
    %s1316 = ssub.f32 %s1314, %s1315
    %s1317 = sadd.f32 %s1316, 1e-05
    %v1318 = vstv %s1317
    %v1319 = vrsqrt.pop %v1318
    %v1320 = vmul.f32 %v1319, %v1318
    %v1321 = vmul.f32 %v1320, %v1319
    %v1322 = vmul.f32 0.5, %v1321
    %v1323 = vsub.f32 1.5, %v1322
    %v1324 = vmul.f32 %v1319, %v1323
    %vm1325 = vweird.f32 %v1318
    %vm1326 = vweird.f32 %v1319
    %vm1327 = vmor %vm1325, %vm1326
    %v1328 = vsel %vm1327, %v1319, %v1324
    %s1329 = vtos %v1328
    %s1330 = sld [smem:[#allocation9 + $0x3]]
    %s1331 = smul.f32 %s1329, %s1330
    %s1332 = sld [smem:[#allocation11 + $0x3]]
    %s1333 = smul.f32 %s1237, %s1331
    %s1334 = ssub.f32 %s1332, %s1333
    %s1335 = smul.f32 %s1221, %s1331
    %v1336 = vstv %s1335
    %v1337 = vmul.f32 %v235, %v1336
    %s1338 = smul.f32 %s1222, %s1331
    %v1339 = vstv %s1338
    %v1340 = vmul.f32 %v159, %v1339
    %v1341 = vadd.f32 %v1337, %v1340
    %s1342 = smul.f32 %s1223, %s1331
    %v1343 = vstv %s1342
    %v1344 = vmul.f32 %v240, %v1343
    %v1345 = vadd.f32 %v1341, %v1344
    %s1346 = smul.f32 %s1224, %s1331
    %v1347 = vstv %s1346
    %v1348 = vmul.f32 %v251, %v1347
    %v1349 = vadd.f32 %v1345, %v1348
    %s1350 = smul.f32 %s1225, %s1331
    %v1351 = vstv %s1350
    %v1352 = vmul.f32 %v220, %v1351
    %v1353 = vadd.f32 %v1349, %v1352
    %s1354 = smul.f32 %s1226, %s1331
    %v1355 = vstv %s1354
    %v1356 = vmul.f32 %v255, %v1355
    %v1357 = vadd.f32 %v1353, %v1356
    %v1358 = vstv %s1334
    %v1359 = vadd.f32 %v1357, %v1358
    %v1360 = vmax.f32 %v1359, 0.0
    %1361 = vst.msk [vmem:[#allocation2 + $0x18] sm:$0xff] %vm100, %v1360
    %s1362 = sld [smem:[#allocation3 + $0x18]]
    %s1363 = sld [smem:[#allocation3 + $0x19]]
    %s1364 = sld [smem:[#allocation3 + $0x1a]]
    %s1365 = sld [smem:[#allocation3 + $0x1b]]
    %s1366 = sld [smem:[#allocation3 + $0x1c]]
    %s1367 = sld [smem:[#allocation3 + $0x1d]]
    %s1368 = smul.f32 %s1362, %s274
    %s1369 = smul.f32 %s1363, %s293
    %s1370 = sadd.f32 %s1368, %s1369
    %s1371 = smul.f32 %s1364, %s312
    %s1372 = sadd.f32 %s1370, %s1371
    %s1373 = smul.f32 %s1365, %s331
    %s1374 = sadd.f32 %s1372, %s1373
    %s1375 = smul.f32 %s1366, %s350
    %s1376 = sadd.f32 %s1374, %s1375
    %s1377 = smul.f32 %s1367, %s369
    %s1378 = sadd.f32 %s1376, %s1377
    %s1379 = smul.f32 %s1362, %s1362
    %s1380 = smul.f32 %s1379, %s389
    %s1381 = smul.f32 %s1362, %s1363
    %s1382 = smul.f32 %s1381, 2.0
    %s1383 = smul.f32 %s1382, %s409
    %s1384 = sadd.f32 %s1380, %s1383
    %s1385 = smul.f32 %s1362, %s1364
    %s1386 = smul.f32 %s1385, 2.0
    %s1387 = smul.f32 %s1386, %s429
    %s1388 = sadd.f32 %s1384, %s1387
    %s1389 = smul.f32 %s1362, %s1365
    %s1390 = smul.f32 %s1389, 2.0
    %s1391 = smul.f32 %s1390, %s449
    %s1392 = sadd.f32 %s1388, %s1391
    %s1393 = smul.f32 %s1362, %s1366
    %s1394 = smul.f32 %s1393, 2.0
    %s1395 = smul.f32 %s1394, %s469
    %s1396 = sadd.f32 %s1392, %s1395
    %s1397 = smul.f32 %s1362, %s1367
    %s1398 = smul.f32 %s1397, 2.0
    %s1399 = smul.f32 %s1398, %s489
    %s1400 = sadd.f32 %s1396, %s1399
    %s1401 = smul.f32 %s1363, %s1363
    %s1402 = smul.f32 %s1401, %s509
    %s1403 = sadd.f32 %s1400, %s1402
    %s1404 = smul.f32 %s1363, %s1364
    %s1405 = smul.f32 %s1404, 2.0
    %s1406 = smul.f32 %s1405, %s529
    %s1407 = sadd.f32 %s1403, %s1406
    %s1408 = smul.f32 %s1363, %s1365
    %s1409 = smul.f32 %s1408, 2.0
    %s1410 = smul.f32 %s1409, %s549
    %s1411 = sadd.f32 %s1407, %s1410
    %s1412 = smul.f32 %s1363, %s1366
    %s1413 = smul.f32 %s1412, 2.0
    %s1414 = smul.f32 %s1413, %s569
    %s1415 = sadd.f32 %s1411, %s1414
    %s1416 = smul.f32 %s1363, %s1367
    %s1417 = smul.f32 %s1416, 2.0
    %s1418 = smul.f32 %s1417, %s589
    %s1419 = sadd.f32 %s1415, %s1418
    %s1420 = smul.f32 %s1364, %s1364
    %s1421 = smul.f32 %s1420, %s609
    %s1422 = sadd.f32 %s1419, %s1421
    %s1423 = smul.f32 %s1364, %s1365
    %s1424 = smul.f32 %s1423, 2.0
    %s1425 = smul.f32 %s1424, %s629
    %s1426 = sadd.f32 %s1422, %s1425
    %s1427 = smul.f32 %s1364, %s1366
    %s1428 = smul.f32 %s1427, 2.0
    %s1429 = smul.f32 %s1428, %s649
    %s1430 = sadd.f32 %s1426, %s1429
    %s1431 = smul.f32 %s1364, %s1367
    %s1432 = smul.f32 %s1431, 2.0
    %s1433 = smul.f32 %s1432, %s669
    %s1434 = sadd.f32 %s1430, %s1433
    %s1435 = smul.f32 %s1365, %s1365
    %s1436 = smul.f32 %s1435, %s689
    %s1437 = sadd.f32 %s1434, %s1436
    %s1438 = smul.f32 %s1365, %s1366
    %s1439 = smul.f32 %s1438, 2.0
    %s1440 = smul.f32 %s1439, %s709
    %s1441 = sadd.f32 %s1437, %s1440
    %s1442 = smul.f32 %s1365, %s1367
    %s1443 = smul.f32 %s1442, 2.0
    %s1444 = smul.f32 %s1443, %s729
    %s1445 = sadd.f32 %s1441, %s1444
    %s1446 = smul.f32 %s1366, %s1366
    %s1447 = smul.f32 %s1446, %s749
    %s1448 = sadd.f32 %s1445, %s1447
    %s1449 = smul.f32 %s1366, %s1367
    %s1450 = smul.f32 %s1449, 2.0
    %s1451 = smul.f32 %s1450, %s769
    %s1452 = sadd.f32 %s1448, %s1451
    %s1453 = smul.f32 %s1367, %s1367
    %s1454 = smul.f32 %s1453, %s789
    %s1455 = sadd.f32 %s1452, %s1454
    %s1456 = smul.f32 %s1378, %s1378
    %s1457 = ssub.f32 %s1455, %s1456
    %s1458 = sadd.f32 %s1457, 1e-05
    %v1459 = vstv %s1458
    %v1460 = vrsqrt.pop %v1459
    %v1461 = vmul.f32 %v1460, %v1459
    %v1462 = vmul.f32 %v1461, %v1460
    %v1463 = vmul.f32 0.5, %v1462
    %v1464 = vsub.f32 1.5, %v1463
    %v1465 = vmul.f32 %v1460, %v1464
    %vm1466 = vweird.f32 %v1459
    %vm1467 = vweird.f32 %v1460
    %vm1468 = vmor %vm1466, %vm1467
    %v1469 = vsel %vm1468, %v1460, %v1465
    %s1470 = vtos %v1469
    %s1471 = sld [smem:[#allocation9 + $0x4]]
    %s1472 = smul.f32 %s1470, %s1471
    %s1473 = sld [smem:[#allocation11 + $0x4]]
    %s1474 = smul.f32 %s1378, %s1472
    %s1475 = ssub.f32 %s1473, %s1474
    %s1476 = smul.f32 %s1362, %s1472
    %v1477 = vstv %s1476
    %v1478 = vmul.f32 %v235, %v1477
    %s1479 = smul.f32 %s1363, %s1472
    %v1480 = vstv %s1479
    %v1481 = vmul.f32 %v159, %v1480
    %v1482 = vadd.f32 %v1478, %v1481
    %s1483 = smul.f32 %s1364, %s1472
    %v1484 = vstv %s1483
    %v1485 = vmul.f32 %v240, %v1484
    %v1486 = vadd.f32 %v1482, %v1485
    %s1487 = smul.f32 %s1365, %s1472
    %v1488 = vstv %s1487
    %v1489 = vmul.f32 %v251, %v1488
    %v1490 = vadd.f32 %v1486, %v1489
    %s1491 = smul.f32 %s1366, %s1472
    %v1492 = vstv %s1491
    %v1493 = vmul.f32 %v220, %v1492
    %v1494 = vadd.f32 %v1490, %v1493
    %s1495 = smul.f32 %s1367, %s1472
    %v1496 = vstv %s1495
    %v1497 = vmul.f32 %v255, %v1496
    %v1498 = vadd.f32 %v1494, %v1497
    %v1499 = vstv %s1475
    %v1500 = vadd.f32 %v1498, %v1499
    %v1501 = vmax.f32 %v1500, 0.0
    %1502 = vst.msk [vmem:[#allocation2 + $0x20] sm:$0xff] %vm100, %v1501
    %s1503 = sld [smem:[#allocation3 + $0x1e]]
    %s1504 = sld [smem:[#allocation3 + $0x1f]]
    %s1505 = sld [smem:[#allocation3 + $0x20]]
    %s1506 = sld [smem:[#allocation3 + $0x21]]
    %s1507 = sld [smem:[#allocation3 + $0x22]]
    %s1508 = sld [smem:[#allocation3 + $0x23]]
    %s1509 = smul.f32 %s1503, %s274
    %s1510 = smul.f32 %s1504, %s293
    %s1511 = sadd.f32 %s1509, %s1510
    %s1512 = smul.f32 %s1505, %s312
    %s1513 = sadd.f32 %s1511, %s1512
    %s1514 = smul.f32 %s1506, %s331
    %s1515 = sadd.f32 %s1513, %s1514
    %s1516 = smul.f32 %s1507, %s350
    %s1517 = sadd.f32 %s1515, %s1516
    %s1518 = smul.f32 %s1508, %s369
    %s1519 = sadd.f32 %s1517, %s1518
    %s1520 = smul.f32 %s1503, %s1503
    %s1521 = smul.f32 %s1520, %s389
    %s1522 = smul.f32 %s1503, %s1504
    %s1523 = smul.f32 %s1522, 2.0
    %s1524 = smul.f32 %s1523, %s409
    %s1525 = sadd.f32 %s1521, %s1524
    %s1526 = smul.f32 %s1503, %s1505
    %s1527 = smul.f32 %s1526, 2.0
    %s1528 = smul.f32 %s1527, %s429
    %s1529 = sadd.f32 %s1525, %s1528
    %s1530 = smul.f32 %s1503, %s1506
    %s1531 = smul.f32 %s1530, 2.0
    %s1532 = smul.f32 %s1531, %s449
    %s1533 = sadd.f32 %s1529, %s1532
    %s1534 = smul.f32 %s1503, %s1507
    %s1535 = smul.f32 %s1534, 2.0
    %s1536 = smul.f32 %s1535, %s469
    %s1537 = sadd.f32 %s1533, %s1536
    %s1538 = smul.f32 %s1503, %s1508
    %s1539 = smul.f32 %s1538, 2.0
    %s1540 = smul.f32 %s1539, %s489
    %s1541 = sadd.f32 %s1537, %s1540
    %s1542 = smul.f32 %s1504, %s1504
    %s1543 = smul.f32 %s1542, %s509
    %s1544 = sadd.f32 %s1541, %s1543
    %s1545 = smul.f32 %s1504, %s1505
    %s1546 = smul.f32 %s1545, 2.0
    %s1547 = smul.f32 %s1546, %s529
    %s1548 = sadd.f32 %s1544, %s1547
    %s1549 = smul.f32 %s1504, %s1506
    %s1550 = smul.f32 %s1549, 2.0
    %s1551 = smul.f32 %s1550, %s549
    %s1552 = sadd.f32 %s1548, %s1551
    %s1553 = smul.f32 %s1504, %s1507
    %s1554 = smul.f32 %s1553, 2.0
    %s1555 = smul.f32 %s1554, %s569
    %s1556 = sadd.f32 %s1552, %s1555
    %s1557 = smul.f32 %s1504, %s1508
    %s1558 = smul.f32 %s1557, 2.0
    %s1559 = smul.f32 %s1558, %s589
    %s1560 = sadd.f32 %s1556, %s1559
    %s1561 = smul.f32 %s1505, %s1505
    %s1562 = smul.f32 %s1561, %s609
    %s1563 = sadd.f32 %s1560, %s1562
    %s1564 = smul.f32 %s1505, %s1506
    %s1565 = smul.f32 %s1564, 2.0
    %s1566 = smul.f32 %s1565, %s629
    %s1567 = sadd.f32 %s1563, %s1566
    %s1568 = smul.f32 %s1505, %s1507
    %s1569 = smul.f32 %s1568, 2.0
    %s1570 = smul.f32 %s1569, %s649
    %s1571 = sadd.f32 %s1567, %s1570
    %s1572 = smul.f32 %s1505, %s1508
    %s1573 = smul.f32 %s1572, 2.0
    %s1574 = smul.f32 %s1573, %s669
    %s1575 = sadd.f32 %s1571, %s1574
    %s1576 = smul.f32 %s1506, %s1506
    %s1577 = smul.f32 %s1576, %s689
    %s1578 = sadd.f32 %s1575, %s1577
    %s1579 = smul.f32 %s1506, %s1507
    %s1580 = smul.f32 %s1579, 2.0
    %s1581 = smul.f32 %s1580, %s709
    %s1582 = sadd.f32 %s1578, %s1581
    %s1583 = smul.f32 %s1506, %s1508
    %s1584 = smul.f32 %s1583, 2.0
    %s1585 = smul.f32 %s1584, %s729
    %s1586 = sadd.f32 %s1582, %s1585
    %s1587 = smul.f32 %s1507, %s1507
    %s1588 = smul.f32 %s1587, %s749
    %s1589 = sadd.f32 %s1586, %s1588
    %s1590 = smul.f32 %s1507, %s1508
    %s1591 = smul.f32 %s1590, 2.0
    %s1592 = smul.f32 %s1591, %s769
    %s1593 = sadd.f32 %s1589, %s1592
    %s1594 = smul.f32 %s1508, %s1508
    %s1595 = smul.f32 %s1594, %s789
    %s1596 = sadd.f32 %s1593, %s1595
    %s1597 = smul.f32 %s1519, %s1519
    %s1598 = ssub.f32 %s1596, %s1597
    %s1599 = sadd.f32 %s1598, 1e-05
    %v1600 = vstv %s1599
    %v1601 = vrsqrt.pop %v1600
    %v1602 = vmul.f32 %v1601, %v1600
    %v1603 = vmul.f32 %v1602, %v1601
    %v1604 = vmul.f32 0.5, %v1603
    %v1605 = vsub.f32 1.5, %v1604
    %v1606 = vmul.f32 %v1601, %v1605
    %vm1607 = vweird.f32 %v1600
    %vm1608 = vweird.f32 %v1601
    %vm1609 = vmor %vm1607, %vm1608
    %v1610 = vsel %vm1609, %v1601, %v1606
    %s1611 = vtos %v1610
    %s1612 = sld [smem:[#allocation9 + $0x5]]
    %s1613 = smul.f32 %s1611, %s1612
    %s1614 = sld [smem:[#allocation11 + $0x5]]
    %s1615 = smul.f32 %s1519, %s1613
    %s1616 = ssub.f32 %s1614, %s1615
    %s1617 = smul.f32 %s1503, %s1613
    %v1618 = vstv %s1617
    %v1619 = vmul.f32 %v235, %v1618
    %s1620 = smul.f32 %s1504, %s1613
    %v1621 = vstv %s1620
    %v1622 = vmul.f32 %v159, %v1621
    %v1623 = vadd.f32 %v1619, %v1622
    %s1624 = smul.f32 %s1505, %s1613
    %v1625 = vstv %s1624
    %v1626 = vmul.f32 %v240, %v1625
    %v1627 = vadd.f32 %v1623, %v1626
    %s1628 = smul.f32 %s1506, %s1613
    %v1629 = vstv %s1628
    %v1630 = vmul.f32 %v251, %v1629
    %v1631 = vadd.f32 %v1627, %v1630
    %s1632 = smul.f32 %s1507, %s1613
    %v1633 = vstv %s1632
    %v1634 = vmul.f32 %v220, %v1633
    %v1635 = vadd.f32 %v1631, %v1634
    %s1636 = smul.f32 %s1508, %s1613
    %v1637 = vstv %s1636
    %v1638 = vmul.f32 %v255, %v1637
    %v1639 = vadd.f32 %v1635, %v1638
    %v1640 = vstv %s1616
    %v1641 = vadd.f32 %v1639, %v1640
    %v1642 = vmax.f32 %v1641, 0.0
    %1643 = vst.msk [vmem:[#allocation2 + $0x28] sm:$0xff] %vm100, %v1642
    %s1644 = sld [smem:[#allocation3 + $0x24]]
    %s1645 = sld [smem:[#allocation3 + $0x25]]
    %s1646 = sld [smem:[#allocation3 + $0x26]]
    %s1647 = sld [smem:[#allocation3 + $0x27]]
    %s1648 = sld [smem:[#allocation3 + $0x28]]
    %s1649 = sld [smem:[#allocation3 + $0x29]]
    %s1650 = smul.f32 %s1644, %s274
    %s1651 = smul.f32 %s1645, %s293
    %s1652 = sadd.f32 %s1650, %s1651
    %s1653 = smul.f32 %s1646, %s312
    %s1654 = sadd.f32 %s1652, %s1653
    %s1655 = smul.f32 %s1647, %s331
    %s1656 = sadd.f32 %s1654, %s1655
    %s1657 = smul.f32 %s1648, %s350
    %s1658 = sadd.f32 %s1656, %s1657
    %s1659 = smul.f32 %s1649, %s369
    %s1660 = sadd.f32 %s1658, %s1659
    %s1661 = smul.f32 %s1644, %s1644
    %s1662 = smul.f32 %s1661, %s389
    %s1663 = smul.f32 %s1644, %s1645
    %s1664 = smul.f32 %s1663, 2.0
    %s1665 = smul.f32 %s1664, %s409
    %s1666 = sadd.f32 %s1662, %s1665
    %s1667 = smul.f32 %s1644, %s1646
    %s1668 = smul.f32 %s1667, 2.0
    %s1669 = smul.f32 %s1668, %s429
    %s1670 = sadd.f32 %s1666, %s1669
    %s1671 = smul.f32 %s1644, %s1647
    %s1672 = smul.f32 %s1671, 2.0
    %s1673 = smul.f32 %s1672, %s449
    %s1674 = sadd.f32 %s1670, %s1673
    %s1675 = smul.f32 %s1644, %s1648
    %s1676 = smul.f32 %s1675, 2.0
    %s1677 = smul.f32 %s1676, %s469
    %s1678 = sadd.f32 %s1674, %s1677
    %s1679 = smul.f32 %s1644, %s1649
    %s1680 = smul.f32 %s1679, 2.0
    %s1681 = smul.f32 %s1680, %s489
    %s1682 = sadd.f32 %s1678, %s1681
    %s1683 = smul.f32 %s1645, %s1645
    %s1684 = smul.f32 %s1683, %s509
    %s1685 = sadd.f32 %s1682, %s1684
    %s1686 = smul.f32 %s1645, %s1646
    %s1687 = smul.f32 %s1686, 2.0
    %s1688 = smul.f32 %s1687, %s529
    %s1689 = sadd.f32 %s1685, %s1688
    %s1690 = smul.f32 %s1645, %s1647
    %s1691 = smul.f32 %s1690, 2.0
    %s1692 = smul.f32 %s1691, %s549
    %s1693 = sadd.f32 %s1689, %s1692
    %s1694 = smul.f32 %s1645, %s1648
    %s1695 = smul.f32 %s1694, 2.0
    %s1696 = smul.f32 %s1695, %s569
    %s1697 = sadd.f32 %s1693, %s1696
    %s1698 = smul.f32 %s1645, %s1649
    %s1699 = smul.f32 %s1698, 2.0
    %s1700 = smul.f32 %s1699, %s589
    %s1701 = sadd.f32 %s1697, %s1700
    %s1702 = smul.f32 %s1646, %s1646
    %s1703 = smul.f32 %s1702, %s609
    %s1704 = sadd.f32 %s1701, %s1703
    %s1705 = smul.f32 %s1646, %s1647
    %s1706 = smul.f32 %s1705, 2.0
    %s1707 = smul.f32 %s1706, %s629
    %s1708 = sadd.f32 %s1704, %s1707
    %s1709 = smul.f32 %s1646, %s1648
    %s1710 = smul.f32 %s1709, 2.0
    %s1711 = smul.f32 %s1710, %s649
    %s1712 = sadd.f32 %s1708, %s1711
    %s1713 = smul.f32 %s1646, %s1649
    %s1714 = smul.f32 %s1713, 2.0
    %s1715 = smul.f32 %s1714, %s669
    %s1716 = sadd.f32 %s1712, %s1715
    %s1717 = smul.f32 %s1647, %s1647
    %s1718 = smul.f32 %s1717, %s689
    %s1719 = sadd.f32 %s1716, %s1718
    %s1720 = smul.f32 %s1647, %s1648
    %s1721 = smul.f32 %s1720, 2.0
    %s1722 = smul.f32 %s1721, %s709
    %s1723 = sadd.f32 %s1719, %s1722
    %s1724 = smul.f32 %s1647, %s1649
    %s1725 = smul.f32 %s1724, 2.0
    %s1726 = smul.f32 %s1725, %s729
    %s1727 = sadd.f32 %s1723, %s1726
    %s1728 = smul.f32 %s1648, %s1648
    %s1729 = smul.f32 %s1728, %s749
    %s1730 = sadd.f32 %s1727, %s1729
    %s1731 = smul.f32 %s1648, %s1649
    %s1732 = smul.f32 %s1731, 2.0
    %s1733 = smul.f32 %s1732, %s769
    %s1734 = sadd.f32 %s1730, %s1733
    %s1735 = smul.f32 %s1649, %s1649
    %s1736 = smul.f32 %s1735, %s789
    %s1737 = sadd.f32 %s1734, %s1736
    %s1738 = smul.f32 %s1660, %s1660
    %s1739 = ssub.f32 %s1737, %s1738
    %s1740 = sadd.f32 %s1739, 1e-05
    %v1741 = vstv %s1740
    %v1742 = vrsqrt.pop %v1741
    %v1743 = vmul.f32 %v1742, %v1741
    %v1744 = vmul.f32 %v1743, %v1742
    %v1745 = vmul.f32 0.5, %v1744
    %v1746 = vsub.f32 1.5, %v1745
    %v1747 = vmul.f32 %v1742, %v1746
    %vm1748 = vweird.f32 %v1741
    %vm1749 = vweird.f32 %v1742
    %vm1750 = vmor %vm1748, %vm1749
    %v1751 = vsel %vm1750, %v1742, %v1747
    %s1752 = vtos %v1751
    %s1753 = sld [smem:[#allocation9 + $0x6]]
    %s1754 = smul.f32 %s1752, %s1753
    %s1755 = sld [smem:[#allocation11 + $0x6]]
    %s1756 = smul.f32 %s1660, %s1754
    %s1757 = ssub.f32 %s1755, %s1756
    %s1758 = smul.f32 %s1644, %s1754
    %v1759 = vstv %s1758
    %v1760 = vmul.f32 %v235, %v1759
    %s1761 = smul.f32 %s1645, %s1754
    %v1762 = vstv %s1761
    %v1763 = vmul.f32 %v159, %v1762
    %v1764 = vadd.f32 %v1760, %v1763
    %s1765 = smul.f32 %s1646, %s1754
    %v1766 = vstv %s1765
    %v1767 = vmul.f32 %v240, %v1766
    %v1768 = vadd.f32 %v1764, %v1767
    %s1769 = smul.f32 %s1647, %s1754
    %v1770 = vstv %s1769
    %v1771 = vmul.f32 %v251, %v1770
    %v1772 = vadd.f32 %v1768, %v1771
    %s1773 = smul.f32 %s1648, %s1754
    %v1774 = vstv %s1773
    %v1775 = vmul.f32 %v220, %v1774
    %v1776 = vadd.f32 %v1772, %v1775
    %s1777 = smul.f32 %s1649, %s1754
    %v1778 = vstv %s1777
    %v1779 = vmul.f32 %v255, %v1778
    %v1780 = vadd.f32 %v1776, %v1779
    %v1781 = vstv %s1757
    %v1782 = vadd.f32 %v1780, %v1781
    %v1783 = vmax.f32 %v1782, 0.0
    %1784 = vst.msk [vmem:[#allocation2 + $0x30] sm:$0xff] %vm100, %v1783
    %s1785 = sld [smem:[#allocation3 + $0x2a]]
    %s1786 = sld [smem:[#allocation3 + $0x2b]]
    %s1787 = sld [smem:[#allocation3 + $0x2c]]
    %s1788 = sld [smem:[#allocation3 + $0x2d]]
    %s1789 = sld [smem:[#allocation3 + $0x2e]]
    %s1790 = sld [smem:[#allocation3 + $0x2f]]
    %s1791 = smul.f32 %s1785, %s274
    %s1792 = smul.f32 %s1786, %s293
    %s1793 = sadd.f32 %s1791, %s1792
    %s1794 = smul.f32 %s1787, %s312
    %s1795 = sadd.f32 %s1793, %s1794
    %s1796 = smul.f32 %s1788, %s331
    %s1797 = sadd.f32 %s1795, %s1796
    %s1798 = smul.f32 %s1789, %s350
    %s1799 = sadd.f32 %s1797, %s1798
    %s1800 = smul.f32 %s1790, %s369
    %s1801 = sadd.f32 %s1799, %s1800
    %s1802 = smul.f32 %s1785, %s1785
    %s1803 = smul.f32 %s1802, %s389
    %s1804 = smul.f32 %s1785, %s1786
    %s1805 = smul.f32 %s1804, 2.0
    %s1806 = smul.f32 %s1805, %s409
    %s1807 = sadd.f32 %s1803, %s1806
    %s1808 = smul.f32 %s1785, %s1787
    %s1809 = smul.f32 %s1808, 2.0
    %s1810 = smul.f32 %s1809, %s429
    %s1811 = sadd.f32 %s1807, %s1810
    %s1812 = smul.f32 %s1785, %s1788
    %s1813 = smul.f32 %s1812, 2.0
    %s1814 = smul.f32 %s1813, %s449
    %s1815 = sadd.f32 %s1811, %s1814
    %s1816 = smul.f32 %s1785, %s1789
    %s1817 = smul.f32 %s1816, 2.0
    %s1818 = smul.f32 %s1817, %s469
    %s1819 = sadd.f32 %s1815, %s1818
    %s1820 = smul.f32 %s1785, %s1790
    %s1821 = smul.f32 %s1820, 2.0
    %s1822 = smul.f32 %s1821, %s489
    %s1823 = sadd.f32 %s1819, %s1822
    %s1824 = smul.f32 %s1786, %s1786
    %s1825 = smul.f32 %s1824, %s509
    %s1826 = sadd.f32 %s1823, %s1825
    %s1827 = smul.f32 %s1786, %s1787
    %s1828 = smul.f32 %s1827, 2.0
    %s1829 = smul.f32 %s1828, %s529
    %s1830 = sadd.f32 %s1826, %s1829
    %s1831 = smul.f32 %s1786, %s1788
    %s1832 = smul.f32 %s1831, 2.0
    %s1833 = smul.f32 %s1832, %s549
    %s1834 = sadd.f32 %s1830, %s1833
    %s1835 = smul.f32 %s1786, %s1789
    %s1836 = smul.f32 %s1835, 2.0
    %s1837 = smul.f32 %s1836, %s569
    %s1838 = sadd.f32 %s1834, %s1837
    %s1839 = smul.f32 %s1786, %s1790
    %s1840 = smul.f32 %s1839, 2.0
    %s1841 = smul.f32 %s1840, %s589
    %s1842 = sadd.f32 %s1838, %s1841
    %s1843 = smul.f32 %s1787, %s1787
    %s1844 = smul.f32 %s1843, %s609
    %s1845 = sadd.f32 %s1842, %s1844
    %s1846 = smul.f32 %s1787, %s1788
    %s1847 = smul.f32 %s1846, 2.0
    %s1848 = smul.f32 %s1847, %s629
    %s1849 = sadd.f32 %s1845, %s1848
    %s1850 = smul.f32 %s1787, %s1789
    %s1851 = smul.f32 %s1850, 2.0
    %s1852 = smul.f32 %s1851, %s649
    %s1853 = sadd.f32 %s1849, %s1852
    %s1854 = smul.f32 %s1787, %s1790
    %s1855 = smul.f32 %s1854, 2.0
    %s1856 = smul.f32 %s1855, %s669
    %s1857 = sadd.f32 %s1853, %s1856
    %s1858 = smul.f32 %s1788, %s1788
    %s1859 = smul.f32 %s1858, %s689
    %s1860 = sadd.f32 %s1857, %s1859
    %s1861 = smul.f32 %s1788, %s1789
    %s1862 = smul.f32 %s1861, 2.0
    %s1863 = smul.f32 %s1862, %s709
    %s1864 = sadd.f32 %s1860, %s1863
    %s1865 = smul.f32 %s1788, %s1790
    %s1866 = smul.f32 %s1865, 2.0
    %s1867 = smul.f32 %s1866, %s729
    %s1868 = sadd.f32 %s1864, %s1867
    %s1869 = smul.f32 %s1789, %s1789
    %s1870 = smul.f32 %s1869, %s749
    %s1871 = sadd.f32 %s1868, %s1870
    %s1872 = smul.f32 %s1789, %s1790
    %s1873 = smul.f32 %s1872, 2.0
    %s1874 = smul.f32 %s1873, %s769
    %s1875 = sadd.f32 %s1871, %s1874
    %s1876 = smul.f32 %s1790, %s1790
    %s1877 = smul.f32 %s1876, %s789
    %s1878 = sadd.f32 %s1875, %s1877
    %s1879 = smul.f32 %s1801, %s1801
    %s1880 = ssub.f32 %s1878, %s1879
    %s1881 = sadd.f32 %s1880, 1e-05
    %v1882 = vstv %s1881
    %v1883 = vrsqrt.pop %v1882
    %v1884 = vmul.f32 %v1883, %v1882
    %v1885 = vmul.f32 %v1884, %v1883
    %v1886 = vmul.f32 0.5, %v1885
    %v1887 = vsub.f32 1.5, %v1886
    %v1888 = vmul.f32 %v1883, %v1887
    %vm1889 = vweird.f32 %v1882
    %vm1890 = vweird.f32 %v1883
    %vm1891 = vmor %vm1889, %vm1890
    %v1892 = vsel %vm1891, %v1883, %v1888
    %s1893 = vtos %v1892
    %s1894 = sld [smem:[#allocation9 + $0x7]]
    %s1895 = smul.f32 %s1893, %s1894
    %s1896 = sld [smem:[#allocation11 + $0x7]]
    %s1897 = smul.f32 %s1801, %s1895
    %s1898 = ssub.f32 %s1896, %s1897
    %s1899 = smul.f32 %s1785, %s1895
    %v1900 = vstv %s1899
    %v1901 = vmul.f32 %v235, %v1900
    %s1902 = smul.f32 %s1786, %s1895
    %v1903 = vstv %s1902
    %v1904 = vmul.f32 %v159, %v1903
    %v1905 = vadd.f32 %v1901, %v1904
    %s1906 = smul.f32 %s1787, %s1895
    %v1907 = vstv %s1906
    %v1908 = vmul.f32 %v240, %v1907
    %v1909 = vadd.f32 %v1905, %v1908
    %s1910 = smul.f32 %s1788, %s1895
    %v1911 = vstv %s1910
    %v1912 = vmul.f32 %v251, %v1911
    %v1913 = vadd.f32 %v1909, %v1912
    %s1914 = smul.f32 %s1789, %s1895
    %v1915 = vstv %s1914
    %v1916 = vmul.f32 %v220, %v1915
    %v1917 = vadd.f32 %v1913, %v1916
    %s1918 = smul.f32 %s1790, %s1895
    %v1919 = vstv %s1918
    %v1920 = vmul.f32 %v255, %v1919
    %v1921 = vadd.f32 %v1917, %v1920
    %v1922 = vstv %s1898
    %v1923 = vadd.f32 %v1921, %v1922
    %v1924 = vmax.f32 %v1923, 0.0
    %1925 = vst.msk [vmem:[#allocation2 + $0x38] sm:$0xff] %vm100, %v1924
    %v1926 = vld [vmem:[#allocation2] sm:$0xff]
    %v1927 = vld [vmem:[#allocation2 + $0x8] sm:$0xff]
    %v1928 = vld [vmem:[#allocation2 + $0x10] sm:$0xff]
    %v1929 = vld [vmem:[#allocation2 + $0x18] sm:$0xff]
    %v1930 = vld [vmem:[#allocation2 + $0x20] sm:$0xff]
    %v1931 = vld [vmem:[#allocation2 + $0x28] sm:$0xff]
    %v1932 = vld [vmem:[#allocation2 + $0x30] sm:$0xff]
    %v1933 = vld [vmem:[#allocation2 + $0x38] sm:$0xff]
    %v1934 = vld [vmem:[%s2] sm:$0xff]
    %v1935 = vld [vmem:[%s2 + $0x8] sm:$0xff]
    %v1936 = vld [vmem:[%s2 + $0x10] sm:$0xff]
    %v1937 = vld [vmem:[%s2 + $0x18] sm:$0xff]
    %v1938 = vld [vmem:[%s2 + $0x20] sm:$0xff]
    %v1939 = vld [vmem:[%s2 + $0x28] sm:$0xff]
    %v1940 = vld [vmem:[%s2 + $0x30] sm:$0xff]
    %v1941 = vld [vmem:[%s2 + $0x38] sm:$0xff]
    %v1942 = vld [vmem:[%s2 + $0x40] sm:$0xff]
    %v1943 = vld [vmem:[%s2 + $0x48] sm:$0xff]
    %v1944 = vld [vmem:[%s2 + $0x50] sm:$0xff]
    %v1945 = vld [vmem:[%s2 + $0x58] sm:$0xff]
    %v1946 = vld [vmem:[%s2 + $0x60] sm:$0xff]
    %v1947 = vld [vmem:[%s2 + $0x68] sm:$0xff]
    %v1948 = vld [vmem:[%s2 + $0x70] sm:$0xff]
    %v1949 = vld [vmem:[%s2 + $0x78] sm:$0xff]
    %v1950 = vld [vmem:[%s2 + $0x80] sm:$0xff]
    %v1951 = vld [vmem:[%s2 + $0x88] sm:$0xff]
    %v1952 = vld [vmem:[%s2 + $0x90] sm:$0xff]
    %v1953 = vld [vmem:[%s2 + $0x98] sm:$0xff]
    %v1954 = vld [vmem:[%s2 + $0xa0] sm:$0xff]
    %v1955 = vld [vmem:[%s2 + $0xa8] sm:$0xff]
    %v1956 = vld [vmem:[%s2 + $0xb0] sm:$0xff]
    %v1957 = vld [vmem:[%s2 + $0xb8] sm:$0xff]
    %v1958 = vld [vmem:[%s2 + $0xc0] sm:$0xff]
    %v1959 = vld [vmem:[%s2 + $0xc8] sm:$0xff]
    %v1960 = vld [vmem:[%s2 + $0xd0] sm:$0xff]
    %v1961 = vld [vmem:[%s2 + $0xd8] sm:$0xff]
    %v1962 = vld [vmem:[%s2 + $0xe0] sm:$0xff]
    %v1963 = vld [vmem:[%s2 + $0xe8] sm:$0xff]
    %v1964 = vld [vmem:[%s2 + $0xf0] sm:$0xff]
    %v1965 = vld [vmem:[%s2 + $0xf8] sm:$0xff]
    %v1966 = vld [vmem:[%s2 + $0x100] sm:$0xff]
    %v1967 = vld [vmem:[%s2 + $0x108] sm:$0xff]
    %v1968 = vld [vmem:[%s2 + $0x110] sm:$0xff]
    %v1969 = vld [vmem:[%s2 + $0x118] sm:$0xff]
    %v1970 = vld [vmem:[%s2 + $0x120] sm:$0xff]
    %v1971 = vld [vmem:[%s2 + $0x128] sm:$0xff]
    %v1972 = vld [vmem:[%s2 + $0x130] sm:$0xff]
    %v1973 = vld [vmem:[%s2 + $0x138] sm:$0xff]
    %v1974 = vld [vmem:[%s2 + $0x140] sm:$0xff]
    %v1975 = vld [vmem:[%s2 + $0x148] sm:$0xff]
    %v1976 = vld [vmem:[%s2 + $0x150] sm:$0xff]
    %v1977 = vld [vmem:[%s2 + $0x158] sm:$0xff]
    %v1978 = vld [vmem:[%s2 + $0x160] sm:$0xff]
    %v1979 = vld [vmem:[%s2 + $0x168] sm:$0xff]
    %v1980 = vld [vmem:[%s2 + $0x170] sm:$0xff]
    %v1981 = vld [vmem:[%s2 + $0x178] sm:$0xff]
    %v1982 = vld [vmem:[%s2 + $0x180] sm:$0xff]
    %v1983 = vld [vmem:[%s2 + $0x188] sm:$0xff]
    %v1984 = vld [vmem:[%s2 + $0x190] sm:$0xff]
    %v1985 = vld [vmem:[%s2 + $0x198] sm:$0xff]
    %v1986 = vld [vmem:[%s2 + $0x1a0] sm:$0xff]
    %v1987 = vld [vmem:[%s2 + $0x1a8] sm:$0xff]
    %v1988 = vld [vmem:[%s2 + $0x1b0] sm:$0xff]
    %v1989 = vld [vmem:[%s2 + $0x1b8] sm:$0xff]
    %v1990 = vld [vmem:[%s2 + $0x1c0] sm:$0xff]
    %v1991 = vld [vmem:[%s2 + $0x1c8] sm:$0xff]
    %v1992 = vld [vmem:[%s2 + $0x1d0] sm:$0xff]
    %v1993 = vld [vmem:[%s2 + $0x1d8] sm:$0xff]
    %v1994 = vld [vmem:[%s2 + $0x1e0] sm:$0xff]
    %v1995 = vld [vmem:[%s2 + $0x1e8] sm:$0xff]
    %v1996 = vld [vmem:[%s2 + $0x1f0] sm:$0xff]
    %v1997 = vld [vmem:[%s2 + $0x1f8] sm:$0xff]
    %v1998 = vld [vmem:[%s2 + $0x200] sm:$0xff]
    %v1999 = vld [vmem:[%s2 + $0x208] sm:$0xff]
    %v2000 = vld [vmem:[%s2 + $0x210] sm:$0xff]
    %v2001 = vld [vmem:[%s2 + $0x218] sm:$0xff]
    %v2002 = vld [vmem:[%s2 + $0x220] sm:$0xff]
    %v2003 = vld [vmem:[%s2 + $0x228] sm:$0xff]
    %v2004 = vld [vmem:[%s2 + $0x230] sm:$0xff]
    %v2005 = vld [vmem:[%s2 + $0x238] sm:$0xff]
    %v2006 = vld [vmem:[%s2 + $0x240] sm:$0xff]
    %v2007 = vld [vmem:[%s2 + $0x248] sm:$0xff]
    %v2008 = vld [vmem:[%s2 + $0x250] sm:$0xff]
    %v2009 = vld [vmem:[%s2 + $0x258] sm:$0xff]
    %v2010 = vld [vmem:[%s2 + $0x260] sm:$0xff]
    %v2011 = vld [vmem:[%s2 + $0x268] sm:$0xff]
    %v2012 = vld [vmem:[%s2 + $0x270] sm:$0xff]
    %v2013 = vld [vmem:[%s2 + $0x278] sm:$0xff]
    %v2014 = vld [vmem:[%s2 + $0x280] sm:$0xff]
    %v2015 = vld [vmem:[%s2 + $0x288] sm:$0xff]
    %v2016 = vld [vmem:[%s2 + $0x290] sm:$0xff]
    %v2017 = vld [vmem:[%s2 + $0x298] sm:$0xff]
    %v2018 = vld [vmem:[%s2 + $0x2a0] sm:$0xff]
    %v2019 = vld [vmem:[%s2 + $0x2a8] sm:$0xff]
    %v2020 = vld [vmem:[%s2 + $0x2b0] sm:$0xff]
    %v2021 = vld [vmem:[%s2 + $0x2b8] sm:$0xff]
    %v2022 = vld [vmem:[%s2 + $0x2c0] sm:$0xff]
    %v2023 = vld [vmem:[%s2 + $0x2c8] sm:$0xff]
    %v2024 = vld [vmem:[%s2 + $0x2d0] sm:$0xff]
    %v2025 = vld [vmem:[%s2 + $0x2d8] sm:$0xff]
    %v2026 = vld [vmem:[%s2 + $0x2e0] sm:$0xff]
    %v2027 = vld [vmem:[%s2 + $0x2e8] sm:$0xff]
    %v2028 = vld [vmem:[%s2 + $0x2f0] sm:$0xff]
    %v2029 = vld [vmem:[%s2 + $0x2f8] sm:$0xff]
    %v2030 = vld [vmem:[%s2 + $0x300] sm:$0xff]
    %v2031 = vld [vmem:[%s2 + $0x308] sm:$0xff]
    %v2032 = vld [vmem:[%s2 + $0x310] sm:$0xff]
    %v2033 = vld [vmem:[%s2 + $0x318] sm:$0xff]
    %v2034 = vld [vmem:[%s2 + $0x320] sm:$0xff]
    %v2035 = vld [vmem:[%s2 + $0x328] sm:$0xff]
    %v2036 = vld [vmem:[%s2 + $0x330] sm:$0xff]
    %v2037 = vld [vmem:[%s2 + $0x338] sm:$0xff]
    %v2038 = vld [vmem:[%s2 + $0x340] sm:$0xff]
    %v2039 = vld [vmem:[%s2 + $0x348] sm:$0xff]
    %v2040 = vld [vmem:[%s2 + $0x350] sm:$0xff]
    %v2041 = vld [vmem:[%s2 + $0x358] sm:$0xff]
    %v2042 = vld [vmem:[%s2 + $0x360] sm:$0xff]
    %v2043 = vld [vmem:[%s2 + $0x368] sm:$0xff]
    %v2044 = vld [vmem:[%s2 + $0x370] sm:$0xff]
    %v2045 = vld [vmem:[%s2 + $0x378] sm:$0xff]
    %v2046 = vld [vmem:[%s2 + $0x380] sm:$0xff]
    %v2047 = vld [vmem:[%s2 + $0x388] sm:$0xff]
    %v2048 = vld [vmem:[%s2 + $0x390] sm:$0xff]
    %v2049 = vld [vmem:[%s2 + $0x398] sm:$0xff]
    %v2050 = vld [vmem:[%s2 + $0x3a0] sm:$0xff]
    %v2051 = vld [vmem:[%s2 + $0x3a8] sm:$0xff]
    %v2052 = vld [vmem:[%s2 + $0x3b0] sm:$0xff]
    %v2053 = vld [vmem:[%s2 + $0x3b8] sm:$0xff]
    %v2054 = vld [vmem:[%s2 + $0x3c0] sm:$0xff]
    %v2055 = vld [vmem:[%s2 + $0x3c8] sm:$0xff]
    %v2056 = vld [vmem:[%s2 + $0x3d0] sm:$0xff]
    %v2057 = vld [vmem:[%s2 + $0x3d8] sm:$0xff]
    %v2058 = vld [vmem:[%s2 + $0x3e0] sm:$0xff]
    %v2059 = vld [vmem:[%s2 + $0x3e8] sm:$0xff]
    %v2060 = vld [vmem:[%s2 + $0x3f0] sm:$0xff]
    %v2061 = vld [vmem:[%s2 + $0x3f8] sm:$0xff]
    %2062 = vmatpush.msra.mxu0 %v1949
    %2063 = vmatpush.msra.mxu0 %v1948
    %2064 = vmatpush.msra.mxu0 %v1947
    %2065 = vmatpush.msra.mxu0 %v1946
    %2066 = vmatpush.msra.mxu0 %v1945
    %2067 = vmatpush.msra.mxu0 %v1944
    %2068 = vmatpush.msra.mxu0 %v1943
    %2069 = vmatpush.msra.mxu0 %v1942
    %2070 = vmatpush.msra.mxu0 %v1941
    %2071 = vmatpush.msra.mxu0 %v1940
    %2072 = vmatpush.msra.mxu0 %v1939
    %2073 = vmatpush.msra.mxu0 %v1938
    %2074 = vmatpush.msra.mxu0 %v1937
    %2075 = vmatpush.msra.mxu0 %v1936
    %2076 = vmatpush.msra.mxu0 %v1935
    %2077 = vmatpush.msra.mxu0 %v1934
    %2078 = vmatmul.f32.gmra.mxu0 %v1926
    %v2079 = vpop.f32.mrf.mxu0
    %v2080 = vadd.f32 0.0, %v2079
    %2081 = vdwg.mxu0
    %2082 = vmatpush.msra.mxu0 %v1965
    %2083 = vmatpush.msra.mxu0 %v1964
    %2084 = vmatpush.msra.mxu0 %v1963
    %2085 = vmatpush.msra.mxu0 %v1962
    %2086 = vmatpush.msra.mxu0 %v1961
    %2087 = vmatpush.msra.mxu0 %v1960
    %2088 = vmatpush.msra.mxu0 %v1959
    %2089 = vmatpush.msra.mxu0 %v1958
    %2090 = vmatpush.msra.mxu0 %v1957
    %2091 = vmatpush.msra.mxu0 %v1956
    %2092 = vmatpush.msra.mxu0 %v1955
    %2093 = vmatpush.msra.mxu0 %v1954
    %2094 = vmatpush.msra.mxu0 %v1953
    %2095 = vmatpush.msra.mxu0 %v1952
    %2096 = vmatpush.msra.mxu0 %v1951
    %2097 = vmatpush.msra.mxu0 %v1950
    %2098 = vmatmul.f32.gmra.mxu0 %v1927
    %v2099 = vpop.f32.mrf.mxu0
    %v2100 = vadd.f32 %v2080, %v2099
    %2101 = vdwg.mxu0
    %2102 = vmatpush.msra.mxu0 %v1981
    %2103 = vmatpush.msra.mxu0 %v1980
    %2104 = vmatpush.msra.mxu0 %v1979
    %2105 = vmatpush.msra.mxu0 %v1978
    %2106 = vmatpush.msra.mxu0 %v1977
    %2107 = vmatpush.msra.mxu0 %v1976
    %2108 = vmatpush.msra.mxu0 %v1975
    %2109 = vmatpush.msra.mxu0 %v1974
    %2110 = vmatpush.msra.mxu0 %v1973
    %2111 = vmatpush.msra.mxu0 %v1972
    %2112 = vmatpush.msra.mxu0 %v1971
    %2113 = vmatpush.msra.mxu0 %v1970
    %2114 = vmatpush.msra.mxu0 %v1969
    %2115 = vmatpush.msra.mxu0 %v1968
    %2116 = vmatpush.msra.mxu0 %v1967
    %2117 = vmatpush.msra.mxu0 %v1966
    %2118 = vmatmul.f32.gmra.mxu0 %v1928
    %v2119 = vpop.f32.mrf.mxu0
    %v2120 = vadd.f32 %v2100, %v2119
    %2121 = vdwg.mxu0
    %2122 = vmatpush.msra.mxu0 %v1997
    %2123 = vmatpush.msra.mxu0 %v1996
    %2124 = vmatpush.msra.mxu0 %v1995
    %2125 = vmatpush.msra.mxu0 %v1994
    %2126 = vmatpush.msra.mxu0 %v1993
    %2127 = vmatpush.msra.mxu0 %v1992
    %2128 = vmatpush.msra.mxu0 %v1991
    %2129 = vmatpush.msra.mxu0 %v1990
    %2130 = vmatpush.msra.mxu0 %v1989
    %2131 = vmatpush.msra.mxu0 %v1988
    %2132 = vmatpush.msra.mxu0 %v1987
    %2133 = vmatpush.msra.mxu0 %v1986
    %2134 = vmatpush.msra.mxu0 %v1985
    %2135 = vmatpush.msra.mxu0 %v1984
    %2136 = vmatpush.msra.mxu0 %v1983
    %2137 = vmatpush.msra.mxu0 %v1982
    %2138 = vmatmul.f32.gmra.mxu0 %v1929
    %v2139 = vpop.f32.mrf.mxu0
    %v2140 = vadd.f32 %v2120, %v2139
    %2141 = vdwg.mxu0
    %2142 = vmatpush.msra.mxu0 %v2013
    %2143 = vmatpush.msra.mxu0 %v2012
    %2144 = vmatpush.msra.mxu0 %v2011
    %2145 = vmatpush.msra.mxu0 %v2010
    %2146 = vmatpush.msra.mxu0 %v2009
    %2147 = vmatpush.msra.mxu0 %v2008
    %2148 = vmatpush.msra.mxu0 %v2007
    %2149 = vmatpush.msra.mxu0 %v2006
    %2150 = vmatpush.msra.mxu0 %v2005
    %2151 = vmatpush.msra.mxu0 %v2004
    %2152 = vmatpush.msra.mxu0 %v2003
    %2153 = vmatpush.msra.mxu0 %v2002
    %2154 = vmatpush.msra.mxu0 %v2001
    %2155 = vmatpush.msra.mxu0 %v2000
    %2156 = vmatpush.msra.mxu0 %v1999
    %2157 = vmatpush.msra.mxu0 %v1998
    %2158 = vmatmul.f32.gmra.mxu0 %v1930
    %v2159 = vpop.f32.mrf.mxu0
    %v2160 = vadd.f32 %v2140, %v2159
    %2161 = vdwg.mxu0
    %2162 = vmatpush.msra.mxu0 %v2029
    %2163 = vmatpush.msra.mxu0 %v2028
    %2164 = vmatpush.msra.mxu0 %v2027
    %2165 = vmatpush.msra.mxu0 %v2026
    %2166 = vmatpush.msra.mxu0 %v2025
    %2167 = vmatpush.msra.mxu0 %v2024
    %2168 = vmatpush.msra.mxu0 %v2023
    %2169 = vmatpush.msra.mxu0 %v2022
    %2170 = vmatpush.msra.mxu0 %v2021
    %2171 = vmatpush.msra.mxu0 %v2020
    %2172 = vmatpush.msra.mxu0 %v2019
    %2173 = vmatpush.msra.mxu0 %v2018
    %2174 = vmatpush.msra.mxu0 %v2017
    %2175 = vmatpush.msra.mxu0 %v2016
    %2176 = vmatpush.msra.mxu0 %v2015
    %2177 = vmatpush.msra.mxu0 %v2014
    %2178 = vmatmul.f32.gmra.mxu0 %v1931
    %v2179 = vpop.f32.mrf.mxu0
    %v2180 = vadd.f32 %v2160, %v2179
    %2181 = vdwg.mxu0
    %2182 = vmatpush.msra.mxu0 %v2045
    %2183 = vmatpush.msra.mxu0 %v2044
    %2184 = vmatpush.msra.mxu0 %v2043
    %2185 = vmatpush.msra.mxu0 %v2042
    %2186 = vmatpush.msra.mxu0 %v2041
    %2187 = vmatpush.msra.mxu0 %v2040
    %2188 = vmatpush.msra.mxu0 %v2039
    %2189 = vmatpush.msra.mxu0 %v2038
    %2190 = vmatpush.msra.mxu0 %v2037
    %2191 = vmatpush.msra.mxu0 %v2036
    %2192 = vmatpush.msra.mxu0 %v2035
    %2193 = vmatpush.msra.mxu0 %v2034
    %2194 = vmatpush.msra.mxu0 %v2033
    %2195 = vmatpush.msra.mxu0 %v2032
    %2196 = vmatpush.msra.mxu0 %v2031
    %2197 = vmatpush.msra.mxu0 %v2030
    %2198 = vmatmul.f32.gmra.mxu0 %v1932
    %v2199 = vpop.f32.mrf.mxu0
    %v2200 = vadd.f32 %v2180, %v2199
    %2201 = vdwg.mxu0
    %2202 = vmatpush.msra.mxu0 %v2061
    %2203 = vmatpush.msra.mxu0 %v2060
    %2204 = vmatpush.msra.mxu0 %v2059
    %2205 = vmatpush.msra.mxu0 %v2058
    %2206 = vmatpush.msra.mxu0 %v2057
    %2207 = vmatpush.msra.mxu0 %v2056
    %2208 = vmatpush.msra.mxu0 %v2055
    %2209 = vmatpush.msra.mxu0 %v2054
    %2210 = vmatpush.msra.mxu0 %v2053
    %2211 = vmatpush.msra.mxu0 %v2052
    %2212 = vmatpush.msra.mxu0 %v2051
    %2213 = vmatpush.msra.mxu0 %v2050
    %2214 = vmatpush.msra.mxu0 %v2049
    %2215 = vmatpush.msra.mxu0 %v2048
    %2216 = vmatpush.msra.mxu0 %v2047
    %2217 = vmatpush.msra.mxu0 %v2046
    %2218 = vmatmul.f32.gmra.mxu0 %v1933
    %v2219 = vpop.f32.mrf.mxu0
    %v2220 = vadd.f32 %v2200, %v2219
    %2221 = vdwg.mxu0
    %v2222 = vsel %vm100, %v2220, 0.0
    %v2223 = vrot.slane %v2222, 4
    %v2224 = vadd.f32 %v2222, %v2223
    %v2225 = vrot.slane %v2224, 2
    %v2226 = vadd.f32 %v2224, %v2225
    %v2227 = vrot.slane %v2226, 1
    %v2228 = vadd.f32 %v2226, %v2227
    %v2229 = vrcp.pop 8.0
    %v2230 = vmul.f32 8.0, %v2229
    %v2231 = vsub.f32 1.0, %v2230
    %v2232 = vmul.f32 %v2229, %v2231
    %v2233 = vadd.f32 %v2229, %v2232
    %vm2234 = vweird.f32 %v2229
    %v2235 = vsel %vm2234, %v2229, %v2233
    %v2236 = vmul.f32 %v2228, %v2235
    %v2237 = vsub.f32 %v2220, %v2236
    %v2238 = vmul.f32 %v2237, %v2237
    %v2239 = vsel %vm100, %v2238, 0.0
    %v2240 = vrot.slane %v2239, 4
    %v2241 = vadd.f32 %v2239, %v2240
    %v2242 = vrot.slane %v2241, 2
    %v2243 = vadd.f32 %v2241, %v2242
    %v2244 = vrot.slane %v2243, 1
    %v2245 = vadd.f32 %v2243, %v2244
    %v2246 = vmul.f32 %v2245, %v2235
    %v2247 = vadd.f32 %v2246, 1e-05
    %v2248 = vrsqrt.pop %v2247
    %v2249 = vmul.f32 %v2248, %v2247
    %v2250 = vmul.f32 %v2249, %v2248
    %v2251 = vmul.f32 0.5, %v2250
    %v2252 = vsub.f32 1.5, %v2251
    %v2253 = vmul.f32 %v2248, %v2252
    %vm2254 = vweird.f32 %v2247
    %vm2255 = vweird.f32 %v2248
    %vm2256 = vmor %vm2254, %vm2255
    %v2257 = vsel %vm2256, %v2248, %v2253
    %v2258 = vmul.f32 %v2237, %v2257
    %v2259 = vld [vmem:[%s8] sm:$0x1]
    %v2261 = vperm.slane %v2259, 0
    %v2263 = vmul.f32 %v2258, %v2261
    %v2264 = vld [vmem:[%s9] sm:$0x1]
    %v2266 = vperm.slane %v2264, 0
    %v2268 = vadd.f32 %v2263, %v2266
    %v2269 = vmax.f32 %v2268, 0.0
    %2270 = vst.msk [vmem:[#allocation12] sm:$0xff] %vm100, %v2269
    // Predicated region
    $region62: #{tpu_custom_call.1} parent=1 // pred_check
      _
    $region63: #{tpu_custom_call.1} parent=1 // pred_check_branch
      %2272 = sbr.rel (0) target = $region65
    $region64: #{tpu_custom_call.1} parent=1 // pred_region
      %2274 = vsyncadd [#allocation4], 0
      %s2276 = sshll.u32 [#allocation12], 4
      %s2277 = int_to_ptr.vmem [resolvable:$true] %s2276
      %s2278 = sshll.u32 %s10, 4
      %s2279 = int_to_ptr.hbm [resolvable:$true] %s2278
      %2281 = dma.vmem_to_hbm [thread:$0]  %s2277, 128, %s2279, [#allocation4]
    $region65: #{tpu_custom_call.1} parent=1 // pred_fallthru
      _
    // Predicated region
    $region66: #{tpu_custom_call.1} parent=1 // pred_check
      _
    $region67: #{tpu_custom_call.1} parent=1 // pred_check_branch
      %2283 = sbr.rel (0) target = $region69
    $region68: #{tpu_custom_call.1} parent=1 // pred_region
      %2285 = dma.done [#allocation4], 128
    $region69: #{tpu_custom_call.1} parent=1 // pred_fallthru
      _
    %2286 = vsyncpa [#allocation4], 1
    %2287 = vsyncpa [#allocation5], 1
    %2288 = vsyncpa [#allocation7], 1
    %2289 = vsyncpa [#allocation10], 1

</llo_original>
